<compile_context>
chip_gen: v6e
topology: v6e:2x2x1
jax: 0.10.0
libtpu: 0.0.40
codegen_flags: <defaults>
</compile_context>

<pallas_src>
import functools

import jax
import jax.numpy as jnp
from jax.experimental import pallas as pl
from jax.experimental.pallas import tpu as pltpu


def _round_up(n, m):
    return (n + m - 1) // m * m


@functools.lru_cache(maxsize=1)
def _vmem_is_big():
    # 128 MiB parts (v5e/v6e) can take larger row tiles than v7x (64 MiB).
    try:
        cap = getattr(pltpu.get_tpu_info(), "vmem_capacity_bytes", 0)
        return bool(cap and cap >= 100 * 1024 * 1024)
    except Exception:
        return False


# ----------------------------------------------------------------------------
# Pallas kernels
# ----------------------------------------------------------------------------
def _pw_conv_bias_kernel(x_ref, w_ref, b_ref, o_ref):
    # x: (TRW, K), w: (K, CW), b: (1, CW) -> o: (TRW, CW)
    o_ref[...] = (
        jnp.dot(x_ref[...], w_ref[...], preferred_element_type=jnp.float32)
        + b_ref[...]
    ).astype(o_ref.dtype)


def _pw_conv_kernel(x_ref, w_ref, o_ref):
    # bias-free variant
    o_ref[...] = jnp.dot(
        x_ref[...], w_ref[...], preferred_element_type=jnp.float32
    ).astype(o_ref.dtype)


def _skip_add_stats_kernel(h_ref, w_ref, xf_ref, y_ref, s1_ref, s2_ref):
    # Fused: y = h @ w_skip (1x1x1 conv, no bias) + x_fno, plus per-tile BN
    # partial sums.  x_skip is never written to / re-read from HBM.
    y = (
        jnp.dot(h_ref[...], w_ref[...], preferred_element_type=jnp.float32)
        + xf_ref[...]
    )
    y_ref[...] = y.astype(y_ref.dtype)
    s1 = jnp.sum(y, axis=0, keepdims=True)          # (1, CW) per-lane sums
    s2 = jnp.sum(y * y, axis=0, keepdims=True)
    # Per-tile partials, broadcast over the 8 sublanes of the (8, CW) output
    # block (glue divides by 8).  Keeps the row-tile grid axis fully parallel
    # (v7x: shardable across both TensorCores) -- no serial accumulator.
    s1_ref[...] = jnp.broadcast_to(s1, s1_ref.shape)
    s2_ref[...] = jnp.broadcast_to(s2, s2_ref.shape)


def _spectral_mul_kernel(xr_ref, xi_ref, wr_ref, wi_ref, or_ref, oi_ref):
    # Complex per-mode channel mixing: out[b,o,m] = sum_i x[b,i,m] * w[o,i,m].
    # Only wr / wi are streamed from HBM (2 weight streams); the complex
    # product is formed in-kernel -- the extra VPU multiplies are free under
    # the memory roofline.  Cout is tiled (grid axis) so the unrolled loop
    # keeps at most 2*TCO live (B, TM) partials in vregs.
    xr = xr_ref[...]                       # (B, Cin, TM)
    xi = xi_ref[...]
    tco = wr_ref.shape[0]
    outs_r = []
    outs_i = []
    for o in range(tco):                   # small group; unrolled at trace time
        wr = wr_ref[o][None]               # (1, Cin, TM)
        wi = wi_ref[o][None]
        outs_r.append(jnp.sum(xr * wr - xi * wi, axis=1))   # (B, TM)
        outs_i.append(jnp.sum(xr * wi + xi * wr, axis=1))
    or_ref[...] = jnp.stack(outs_r, axis=1)            # (B, TCO, TM)
    oi_ref[...] = jnp.stack(outs_i, axis=1)


def _erf(x):
    # Abramowitz-Stegun 7.1.26, max abs error ~1.5e-7.  The divide is moved to
    # the EUP (approx reciprocal) -- frees VALU slots; slight extra approx error.
    # TODO(synk): replace with native erf if/when Mosaic exposes a lowering.
    a1, a2, a3, a4, a5 = (0.254829592, -0.284496736, 1.421413741,
                          -1.453152027, 1.061405429)
    p = 0.3275911
    s = jnp.where(x >= 0.0, 1.0, -1.0)
    z = jnp.abs(x)
    t = pl.reciprocal(1.0 + p * z, approx=True)
    poly = t * (a1 + t * (a2 + t * (a3 + t * (a4 + t * a5))))
    return s * (1.0 - poly * jnp.exp(-z * z))


def _gelu_exact(x):
    return 0.5 * x * (1.0 + _erf(x * 0.7071067811865476))


def _bn_apply_kernel(y_ref, scale_ref, shift_ref, o_ref):
    # y is read ONCE; affine-folded BatchNorm + exact GELU; output aliases y.
    z = y_ref[...] * scale_ref[...] + shift_ref[...]
    o_ref[...] = _gelu_exact(z).astype(o_ref.dtype)


# ----------------------------------------------------------------------------
# Pallas wrappers
# ----------------------------------------------------------------------------
def pointwise_conv(x2d, w, b=None, *, row_tile=None):
    """1x1x1 conv as a lane-dense MXU matmul.

    x2d: (R, Cin), w: (Cin, Cout), b: (Cout,) or None.
    G input rows are packed per wide row and multiplied by a block-diagonal
    (G*Cin, G*Cout_p) weight.  G is capped so K = G*Cin <= 512 -- a Cout=1
    conv_out would otherwise build a (128*Cin, 128) weight that is >99% zeros
    (wasted DMA/VMEM/MXU contraction).
    """
    R, cin = x2d.shape
    cout = w.shape[1]
    cout_p = 1 << max(0, (cout - 1).bit_length())   # next pow2 (divides 128)
    assert cout_p <= 128, "Cout > 128 not supported"
    if cout_p != cout:
        w = jnp.pad(w, ((0, 0), (0, cout_p - cout)))
        if b is not None:
            b = jnp.pad(b, ((0, cout_p - cout),))
    G = 128 // cout_p
    if G * cin > 512:
        G = max(1, 512 // cin)
    K = G * cin
    CW = G * cout_p

    x2d = x2d.astype(jnp.float32)
    Rg = _round_up(R, G)
    if Rg != R:
        x2d = jnp.pad(x2d, ((0, Rg - R), (0, 0)))
    Rw = Rg // G
    xw = x2d.reshape(Rw, K)

    # block-diagonal weight: W_big[g*Cin + i, g*Cout_p + o] = w[i, o]
    w_big = jnp.kron(jnp.eye(G, dtype=jnp.float32), w.astype(jnp.float32))

    # per-chip row-tile budget: bigger x blocks on 128 MiB parts (v5e/v6e),
    # conservative 2 MiB on 64 MiB v7x / unknown.
    big = _vmem_is_big()
    if row_tile is None:
        row_tile = 2048 if big else 1024
    budget = (6 if big else 2) * 1024 * 1024
    trw_cap = max(8, (budget // (K * 4)) // 8 * 8)
    TRW = min(row_tile, trw_cap)
    if Rw <= TRW:
        TRW = _round_up(Rw, 8)
    Rw_pad = _round_up(Rw, TRW)
    if Rw_pad != Rw:
        xw = jnp.pad(xw, ((0, Rw_pad - Rw), (0, 0)))

    in_specs = [
        pl.BlockSpec((TRW, K), lambda i: (i, 0)),
        pl.BlockSpec((K, CW), lambda i: (0, 0)),
    ]
    args = [xw, w_big]
    if b is not None:
        b_big = jnp.tile(b.astype(jnp.float32), G).reshape(1, CW)
        in_specs.append(pl.BlockSpec((1, CW), lambda i: (0, 0)))
        args.append(b_big)
        kernel = _pw_conv_bias_kernel
    else:
        kernel = _pw_conv_kernel

    out = pl.pallas_call(
        kernel,
        out_shape=jax.ShapeDtypeStruct((Rw_pad, CW), jnp.float32),
        grid=(Rw_pad // TRW,),
        in_specs=in_specs,
        out_specs=pl.BlockSpec((TRW, CW), lambda i: (i, 0)),
        compiler_params=pltpu.CompilerParams(
            dimension_semantics=("parallel",),
            vmem_limit_bytes=(64 * 1024 * 1024) if big else None),
    )(*args)

    out = out.reshape(Rw_pad * G, cout_p)
    if Rw_pad * G != R or cout_p != cout:
        out = out[:R, :cout]
    return out


def spectral_mul(xr, xi, wr, wi, *, cout_tile=8):
    """xr/xi: (B, Cin, M); wr/wi: (Cout, Cin, M) -> (out_r, out_i) (B, Cout, M).

    Only 2 weight streams; M padded to a multiple of 128 (lane-dense, bounded
    VMEM on v7x); Cout tiled on a second parallel grid axis.
    """
    B, cin, M = xr.shape
    cout = wr.shape[0]

    Mp = _round_up(M, 128)
    if Mp != M:
        pad = ((0, 0), (0, 0), (0, Mp - M))
        xr = jnp.pad(xr, pad)
        xi = jnp.pad(xi, pad)
        wr = jnp.pad(wr, pad)
        wi = jnp.pad(wi, pad)
    TM = 128
    for cand in (512, 256):
        if Mp % cand == 0:
            TM = cand
            break

    # Cout group: multiple of 8 so output blocks satisfy the (8,128) rule;
    # fall back to the full Cout if it is not a multiple of 8.
    tco = cout_tile if cout % cout_tile == 0 else cout

    x_spec = pl.BlockSpec((B, cin, TM), lambda c, t: (0, 0, t))
    w_spec = pl.BlockSpec((tco, cin, TM), lambda c, t: (c, 0, t))
    o_spec = pl.BlockSpec((B, tco, TM), lambda c, t: (0, c, t))
    out_r, out_i = pl.pallas_call(
        _spectral_mul_kernel,
        out_shape=[jax.ShapeDtypeStruct((B, cout, Mp), jnp.float32)] * 2,
        grid=(cout // tco, Mp // TM),
        in_specs=[x_spec, x_spec, w_spec, w_spec],
        out_specs=[o_spec, o_spec],
        compiler_params=pltpu.CompilerParams(
            dimension_semantics=("parallel", "parallel")),
    )(xr, xi, wr, wi)
    if Mp != M:
        out_r = out_r[..., :M]
        out_i = out_i[..., :M]
    return out_r, out_i


def skip_add_bn_gelu(h2d, xfno2d, w, gamma, beta, *, eps=1e-5, row_tile=2048):
    """Per-block tail: y = h @ w_skip + x_fno, then BatchNorm3d (batch stats)
    + exact GELU, all lane-dense on a (R/G, 128) wide-row view.

    Pass 1 (fused kernel): computes y AND per-tile BN partial sums (parallel
    grid, v7x-shardable).  Pass 2 reads only y and aliases its buffer.
    """
    R, cin = h2d.shape
    cout = w.shape[1]
    cout_p = 1 << max(0, (cout - 1).bit_length())
    assert cout_p <= 128, "width > 128 not supported"
    if cout_p != cout:
        w = jnp.pad(w, ((0, 0), (0, cout_p - cout)))
        xfno2d = jnp.pad(xfno2d, ((0, 0), (0, cout_p - cout)))
    G = 128 // cout_p
    K = G * cin
    CW = G * cout_p            # == 128

    h2d = h2d.astype(jnp.float32)
    xfno2d = xfno2d.astype(jnp.float32)
    Rg = _round_up(R, G)
    if Rg != R:                # zero rows: 0 @ w + 0 = 0 -> no stats impact
        h2d = jnp.pad(h2d, ((0, Rg - R), (0, 0)))
        xfno2d = jnp.pad(xfno2d, ((0, Rg - R), (0, 0)))
    Rw = Rg // G
    hw = h2d.reshape(Rw, K)
    xw = xfno2d.reshape(Rw, CW)

    TRW = _round_up(Rw, 8) if Rw <= row_tile else row_tile
    Rw_pad = _round_up(Rw, TRW)
    if Rw_pad != Rw:
        hw = jnp.pad(hw, ((0, Rw_pad - Rw), (0, 0)))
        xw = jnp.pad(xw, ((0, Rw_pad - Rw), (0, 0)))
    ntiles = Rw_pad // TRW

    w_big = jnp.kron(jnp.eye(G, dtype=jnp.float32), w.astype(jnp.float32))

    h_spec = pl.BlockSpec((TRW, K), lambda i: (i, 0))
    y_spec = pl.BlockSpec((TRW, CW), lambda i: (i, 0))
    w_spec = pl.BlockSpec((K, CW), lambda i: (0, 0))
    part_spec = pl.BlockSpec((8, CW), lambda i: (i, 0))

    y, s1, s2 = pl.pallas_call(
        _skip_add_stats_kernel,
        out_shape=[jax.ShapeDtypeStruct((Rw_pad, CW), jnp.float32),
                   jax.ShapeDtypeStruct((8 * ntiles, CW), jnp.float32),
                   jax.ShapeDtypeStruct((8 * ntiles, CW), jnp.float32)],
        grid=(ntiles,),
        in_specs=[h_spec, w_spec, y_spec],
        out_specs=[y_spec, part_spec, part_spec],
        compiler_params=pltpu.CompilerParams(
            dimension_semantics=("parallel",)),
    )(hw, w_big, xw)

    # Tiny XLA glue: reduce per-tile partials (each replicated over 8 sublanes)
    # and fold the G lane replicas back to per-channel BN statistics.
    s1c = (jnp.sum(s1.reshape(-1, cout_p), axis=0) / 8.0)[:cout]
    s2c = (jnp.sum(s2.reshape(-1, cout_p), axis=0) / 8.0)[:cout]
    mean = s1c / R
    var = s2c / R - mean * mean                     # biased var (BN training)
    inv = jax.lax.rsqrt(var + eps)
    scale = gamma.astype(jnp.float32) * inv
    shift = beta.astype(jnp.float32) - mean * scale
    if cout_p != cout:
        scale = jnp.pad(scale, ((0, cout_p - cout),))
        shift = jnp.pad(shift, ((0, cout_p - cout),))
    scale_w = jnp.tile(scale, G).reshape(1, CW)
    shift_w = jnp.tile(shift, G).reshape(1, CW)

    vec_spec = pl.BlockSpec((1, CW), lambda i: (0, 0))
    out = pl.pallas_call(
        _bn_apply_kernel,
        out_shape=jax.ShapeDtypeStruct((Rw_pad, CW), jnp.float32),
        grid=(ntiles,),
        in_specs=[y_spec, vec_spec, vec_spec],
        out_specs=y_spec,
        input_output_aliases={0: 0},
        compiler_params=pltpu.CompilerParams(
            dimension_semantics=("parallel",)),
    )(y, scale_w, shift_w)

    out = out.reshape(Rw_pad * G, cout_p)
    if Rw_pad * G != R or cout_p != cout:
        out = out[:R, :cout]
    return out


# ----------------------------------------------------------------------------
# Spectral conv (factored FFT glue in XLA, channel mixing in Pallas)
# ----------------------------------------------------------------------------
def spectral_conv3d(x, wr, wi, modes):
    """FactorizedSpectralConv3d-equivalent layer (dense reconstructed weights).

    x: (B, D, H, W, C) real.  wr/wi: (Cout, Cin, 4*modes**3) -- the 4 corner
    weight blocks flattened & concatenated along the mode axis.
    fft_norm='forward'.
    """
    B, D, H, W, C = x.shape
    m = modes
    cout = wr.shape[0]
    Wf = W // 2 + 1
    assert D >= 2 * m and H >= 2 * m and Wf >= m, "modes too large for grid"

    # Factored forward transform: slice to the retained modes between each
    # 1-D FFT so the H/D transforms only ever see m (resp. 2m x m) columns.
    xf = jnp.fft.rfft(x, axis=3, norm="forward")[:, :, :, :m, :]     # (B,D,H,m,C)
    xf = jnp.fft.fft(xf, axis=2, norm="forward")
    xf = jnp.concatenate([xf[:, :, :m], xf[:, :, H - m:]], axis=2)   # (B,D,2m,m,C)
    xf = jnp.fft.fft(xf, axis=1, norm="forward")
    xf = jnp.concatenate([xf[:, :m], xf[:, D - m:]], axis=1)         # (B,2m,2m,m,C)

    corners = [
        xf[:, :m, :m],     # (d0, h0)
        xf[:, m:, :m],     # (d1, h0)
        xf[:, :m, m:],     # (d0, h1)
        xf[:, m:, m:],     # (d1, h1)
    ]
    xm = jnp.stack(corners, axis=1)                   # (B, 4, m, m, m, C)
    xm = jnp.moveaxis(xm, -1, 1).reshape(B, C, 4 * m ** 3)   # (B, Cin, M)

    out_r, out_i = spectral_mul(
        jnp.real(xm).astype(jnp.float32),
        jnp.imag(xm).astype(jnp.float32),
        wr, wi)

    om = (out_r + 1j * out_i).astype(jnp.complex64).reshape(B, cout, 4, m, m, m)
    om = jnp.moveaxis(om, 1, -1)                      # (B, 4, m, m, m, Cout)

    # Compact retained spectrum (B, 2m, 2m, m, Cout), corners at +/-m on D/H.
    top = jnp.concatenate([om[:, 0], om[:, 2]], axis=2)        # d-half 0
    bot = jnp.concatenate([om[:, 1], om[:, 3]], axis=2)        # d-half 1
    yf = jnp.concatenate([top, bot], axis=1)                   # (B,2m,2m,m,C)

    # Factored inverse: expand D -> ifft(D) -> expand H -> ifft(H) -> irfft(W).
    z_d = jnp.zeros((B, D - 2 * m, 2 * m, m, cout), jnp.complex64)
    yf = jnp.concatenate([yf[:, :m], z_d, yf[:, m:]], axis=1)  # (B,D,2m,m,C)
    yf = jnp.fft.ifft(yf, axis=1, norm="forward")
    z_h = jnp.zeros((B, D, H - 2 * m, m, cout), jnp.complex64)
    yf = jnp.concatenate([yf[:, :, :m], z_h, yf[:, :, m:]], axis=2)  # (B,D,H,m,C)
    yf = jnp.fft.ifft(yf, axis=2, norm="forward")
    # irfft zero-pads the first-m W modes up to Wf internally (n=W), so no
    # explicit full-spectrum pad/scatter is materialized.
    y = jnp.fft.irfft(yf, n=W, axis=3, norm="forward")
    return y.astype(jnp.float32)


# ----------------------------------------------------------------------------
# Full forward pass
# ----------------------------------------------------------------------------
def tfno_forward(x, params, *, modes, padding, blocks):
    """x: (B, 1, D, H, W) (PyTorch NCDHW) -> (B, out_channels, D, H, W)."""
    x = jnp.transpose(x, (0, 2, 3, 4, 1))   # -> channels-last (B, D, H, W, 1)
    B, D, H, W, _ = x.shape

    # conv_in (1x1x1, bias=True)
    h = pointwise_conv(x.reshape(-1, x.shape[-1]), params["w_in"], params["b_in"])
    width = h.shape[-1]
    h = h.reshape(B, D, H, W, width)

    # pad_in: ConstantPad3d(padding, 0.0) over the three spatial dims
    p = padding
    h = jnp.pad(h, ((0, 0), (p, p), (p, p), (p, p), (0, 0)))
    Bp, Dp, Hp, Wp, C = h.shape
    R = Bp * Dp * Hp * Wp

    for l in range(blocks):
        x_fno = spectral_conv3d(h, params["spec_r"][l], params["spec_i"][l], modes)
        # fused skip-conv + residual add + BN(batch stats) + GELU
        h2d = skip_add_bn_gelu(
            h.reshape(R, C),
            x_fno.reshape(R, C),
            params["w_skip"][l],
            params["gamma"][l],
            params["beta"][l],
        )
        h = h2d.reshape(Bp, Dp, Hp, Wp, C)

    # pad_out: ConstantPad3d(-padding, 0.0) == crop
    h = h[:, p:Dp - p, p:Hp - p, p:Wp - p, :]

    # conv_out (1x1x1, bias=True)
    out = pointwise_conv(h.reshape(-1, C), params["w_out"], params["b_out"])
    out = out.reshape(B, D, H, W, -1)
    return jnp.transpose(out, (0, 4, 1, 2, 3))   # back to NCDHW


# ----------------------------------------------------------------------------
# Deterministic parameter initialization (synthetic, no checkpoint)
# ----------------------------------------------------------------------------
def init_params(key, width, modes, blocks, out_channels):
    M = 4 * modes ** 3
    keys = jax.random.split(key, 4 + blocks)
    params = {
        "w_in": 0.5 * jax.random.normal(keys[0], (1, width), jnp.float32),
        "b_in": 0.1 * jax.random.normal(keys[1], (width,), jnp.float32),
        "w_out": jax.random.normal(keys[2], (width, out_channels), jnp.float32)
        / (width ** 0.5),
        "b_out": 0.1 * jax.random.normal(keys[3], (out_channels,), jnp.float32),
        # spectral weights stored as (Cout, Cin, M) -- contiguous per-output views
        "spec_r": [],
        "spec_i": [],
        "w_skip": [],
        "gamma": [],
        "beta": [],
    }
    scale = 1.0 / (width * width)
    for l in range(blocks):
        k1, k2, k3 = jax.random.split(keys[4 + l], 3)
        params["spec_r"].append(
            scale * jax.random.normal(k1, (width, width, M), jnp.float32))
        params["spec_i"].append(
            scale * jax.random.normal(k2, (width, width, M), jnp.float32))
        params["w_skip"].append(
            jax.random.normal(k3, (width, width), jnp.float32) / (width ** 0.5))
        params["gamma"].append(jnp.ones((width,), jnp.float32))   # BN defaults
        params["beta"].append(jnp.zeros((width,), jnp.float32))
    return params


# ----------------------------------------------------------------------------
if __name__ == "__main__":
    B, S = 2, 8
    width, modes, blocks, padding, out_channels = 8, 4, 2, 2, 1

    key = jax.random.PRNGKey(0)
    kx, kp = jax.random.split(key)
    x = jax.random.normal(kx, (B, 1, S, S, S), jnp.float32)
    params = init_params(kp, width, modes, blocks, out_channels)

    fwd = jax.jit(
        functools.partial(tfno_forward, modes=modes, padding=padding, blocks=blocks)
    )
    out = fwd(x, params)
    jax.block_until_ready(out)
    assert out.shape == (B, out_channels, S, S, S), out.shape
    assert bool(jnp.all(jnp.isfinite(out)))
    print("KERNEL_OK")
</pallas_src>

<mosaic_0001>
module attributes {stable_mosaic.version = 11 : i64} {
  func.func @_pw_conv_bias_kernel(%arg0: i32, %arg1: memref<64x16xf32, #tpu.memory_space<vmem>>, %arg2: memref<16x128xf32, #tpu.memory_space<vmem>>, %arg3: memref<1x128xf32, #tpu.memory_space<vmem>>, %arg4: memref<64x128xf32, #tpu.memory_space<vmem>>) attributes {dimension_semantics = [#tpu.dimension_semantics<parallel>], iteration_bounds = array<i64: 1>, scalar_prefetch = 0 : i64, scratch_operands = 0 : i64, tpu.core_type = #tpu.core_type<tc>, window_params = [{transform_indices = @transform_0, window_bounds = array<i64: 64, 16>}, {pipeline_mode = #tpu.pipeline_mode<synchronous>, transform_indices = @transform_1, window_bounds = array<i64: 16, 128>}, {pipeline_mode = #tpu.pipeline_mode<synchronous>, transform_indices = @transform_2, window_bounds = array<i64: 1, 128>}, {transform_indices = @transform_3, window_bounds = array<i64: 64, 128>}]} {
    %c0 = arith.constant 0 : index
    %c0_0 = arith.constant 0 : index
    %0 = vector.load %arg1[%c0, %c0_0] : memref<64x16xf32, #tpu.memory_space<vmem>>, vector<64x16xf32>
    %c0_1 = arith.constant 0 : index
    %c0_2 = arith.constant 0 : index
    %1 = vector.load %arg2[%c0_1, %c0_2] : memref<16x128xf32, #tpu.memory_space<vmem>>, vector<16x128xf32>
    %cst = arith.constant dense<0.000000e+00> : vector<64x128xf32>
    %2 = tpu.matmul %0, %1, %cst {dimension_numbers = #tpu.dot_dimension_numbers<[1], [0], [0], [1], [0, 0, 1, 1], [], []>} : vector<64x16xf32>, vector<16x128xf32>, vector<64x128xf32> -> vector<64x128xf32>
    %c0_3 = arith.constant 0 : index
    %c0_4 = arith.constant 0 : index
    %3 = vector.load %arg3[%c0_3, %c0_4] : memref<1x128xf32, #tpu.memory_space<vmem>>, vector<1x128xf32>
    %4 = vector.broadcast %3 : vector<1x128xf32> to vector<64x128xf32>
    %5 = arith.addf %2, %4 : vector<64x128xf32>
    %c0_5 = arith.constant 0 : index
    %c0_6 = arith.constant 0 : index
    %6 = vector.load %arg4[%c0_5, %c0_6] : memref<64x128xf32, #tpu.memory_space<vmem>>, vector<64x128xf32>
    tpu.vector_store %arg4[%c0_5, %c0_6], %5 {strides = array<i32>} : memref<64x128xf32, #tpu.memory_space<vmem>>, vector<64x128xf32>,
    return
  }
  func.func @transform_0(%arg0: i32) -> (i32, i32) {
    %c0_i32 = arith.constant 0 : i32
    %c0_i32_0 = arith.constant 0 : i32
    return %arg0, %c0_i32 : i32, i32
  }
  func.func @transform_1(%arg0: i32) -> (i32, i32) {
    %c0_i32 = arith.constant 0 : i32
    %c0_i32_0 = arith.constant 0 : i32
    %c0_i32_1 = arith.constant 0 : i32
    return %c0_i32, %c0_i32_0 : i32, i32
  }
  func.func @transform_2(%arg0: i32) -> (i32, i32) {
    %c0_i32 = arith.constant 0 : i32
    %c0_i32_0 = arith.constant 0 : i32
    %c0_i32_1 = arith.constant 0 : i32
    return %c0_i32, %c0_i32_0 : i32, i32
  }
  func.func @transform_3(%arg0: i32) -> (i32, i32) {
    %c0_i32 = arith.constant 0 : i32
    %c0_i32_0 = arith.constant 0 : i32
    return %arg0, %c0_i32 : i32, i32
  }
}

module attributes {stable_mosaic.version = 11 : i64} {
  func.func @_spectral_mul_kernel(%arg0: i32, %arg1: i32, %arg2: memref<2x8x256xf32, #tpu.memory_space<vmem>>, %arg3: memref<2x8x256xf32, #tpu.memory_space<vmem>>, %arg4: memref<8x8x256xf32, #tpu.memory_space<vmem>>, %arg5: memref<8x8x256xf32, #tpu.memory_space<vmem>>, %arg6: memref<2x8x256xf32, #tpu.memory_space<vmem>>, %arg7: memref<2x8x256xf32, #tpu.memory_space<vmem>>) attributes {dimension_semantics = [#tpu.dimension_semantics<parallel>, #tpu.dimension_semantics<parallel>], iteration_bounds = array<i64: 1, 1>, scalar_prefetch = 0 : i64, scratch_operands = 0 : i64, tpu.core_type = #tpu.core_type<tc>, window_params = [{transform_indices = @transform_0, window_bounds = array<i64: 2, 8, 256>}, {transform_indices = @transform_1, window_bounds = array<i64: 2, 8, 256>}, {transform_indices = @transform_2, window_bounds = array<i64: 8, 8, 256>}, {transform_indices = @transform_3, window_bounds = array<i64: 8, 8, 256>}, {transform_indices = @transform_4, window_bounds = array<i64: 2, 8, 256>}, {transform_indices = @transform_5, window_bounds = array<i64: 2, 8, 256>}]} {
    %c0 = arith.constant 0 : index
    %c0_0 = arith.constant 0 : index
    %c0_1 = arith.constant 0 : index
    %0 = vector.load %arg2[%c0, %c0_0, %c0_1] : memref<2x8x256xf32, #tpu.memory_space<vmem>>, vector<2x8x256xf32>
    %c0_2 = arith.constant 0 : index
    %c0_3 = arith.constant 0 : index
    %c0_4 = arith.constant 0 : index
    %1 = vector.load %arg3[%c0_2, %c0_3, %c0_4] : memref<2x8x256xf32, #tpu.memory_space<vmem>>, vector<2x8x256xf32>
    %c0_5 = arith.constant 0 : index
    %c0_6 = arith.constant 0 : index
    %c0_7 = arith.constant 0 : index
    %2 = vector.load %arg4[%c0_5, %c0_6, %c0_7] : memref<8x8x256xf32, #tpu.memory_space<vmem>>, vector<1x8x256xf32>
    %3 = vector.shape_cast %2 : vector<1x8x256xf32> to vector<8x256xf32>
    %4 = vector.shape_cast %3 : vector<8x256xf32> to vector<1x8x256xf32>
    %c0_8 = arith.constant 0 : index
    %c0_9 = arith.constant 0 : index
    %c0_10 = arith.constant 0 : index
    %5 = vector.load %arg5[%c0_8, %c0_9, %c0_10] : memref<8x8x256xf32, #tpu.memory_space<vmem>>, vector<1x8x256xf32>
    %6 = vector.shape_cast %5 : vector<1x8x256xf32> to vector<8x256xf32>
    %7 = vector.shape_cast %6 : vector<8x256xf32> to vector<1x8x256xf32>
    %8 = vector.broadcast %4 : vector<1x8x256xf32> to vector<2x8x256xf32>
    %9 = arith.mulf %0, %8 : vector<2x8x256xf32>
    %10 = vector.broadcast %7 : vector<1x8x256xf32> to vector<2x8x256xf32>
    %11 = arith.mulf %1, %10 : vector<2x8x256xf32>
    %12 = arith.subf %9, %11 : vector<2x8x256xf32>
    %cst = arith.constant dense<0.000000e+00> : vector<2x256xf32>
    %13 = vector.multi_reduction <add>, %12, %cst [1] : vector<2x8x256xf32> to vector<2x256xf32>
    %14 = vector.broadcast %7 : vector<1x8x256xf32> to vector<2x8x256xf32>
    %15 = arith.mulf %0, %14 : vector<2x8x256xf32>
    %16 = vector.broadcast %4 : vector<1x8x256xf32> to vector<2x8x256xf32>
    %17 = arith.mulf %1, %16 : vector<2x8x256xf32>
    %18 = arith.addf %15, %17 : vector<2x8x256xf32>
    %cst_11 = arith.constant dense<0.000000e+00> : vector<2x256xf32>
    %19 = vector.multi_reduction <add>, %18, %cst_11 [1] : vector<2x8x256xf32> to vector<2x256xf32>
    %c1 = arith.constant 1 : index
    %c0_12 = arith.constant 0 : index
    %c0_13 = arith.constant 0 : index
    %20 = vector.load %arg4[%c1, %c0_12, %c0_13] : memref<8x8x256xf32, #tpu.memory_space<vmem>>, vector<1x8x256xf32>
    %21 = vector.shape_cast %20 : vector<1x8x256xf32> to vector<8x256xf32>
    %22 = vector.shape_cast %21 : vector<8x256xf32> to vector<1x8x256xf32>
    %c1_14 = arith.constant 1 : index
    %c0_15 = arith.constant 0 : index
    %c0_16 = arith.constant 0 : index
    %23 = vector.load %arg5[%c1_14, %c0_15, %c0_16] : memref<8x8x256xf32, #tpu.memory_space<vmem>>, vector<1x8x256xf32>
    %24 = vector.shape_cast %23 : vector<1x8x256xf32> to vector<8x256xf32>
    %25 = vector.shape_cast %24 : vector<8x256xf32> to vector<1x8x256xf32>
    %26 = vector.broadcast %22 : vector<1x8x256xf32> to vector<2x8x256xf32>
    %27 = arith.mulf %0, %26 : vector<2x8x256xf32>
    %28 = vector.broadcast %25 : vector<1x8x256xf32> to vector<2x8x256xf32>
    %29 = arith.mulf %1, %28 : vector<2x8x256xf32>
    %30 = arith.subf %27, %29 : vector<2x8x256xf32>
    %cst_17 = arith.constant dense<0.000000e+00> : vector<2x256xf32>
    %31 = vector.multi_reduction <add>, %30, %cst_17 [1] : vector<2x8x256xf32> to vector<2x256xf32>
    %32 = vector.broadcast %25 : vector<1x8x256xf32> to vector<2x8x256xf32>
    %33 = arith.mulf %0, %32 : vector<2x8x256xf32>
    %34 = vector.broadcast %22 : vector<1x8x256xf32> to vector<2x8x256xf32>
    %35 = arith.mulf %1, %34 : vector<2x8x256xf32>
    %36 = arith.addf %33, %35 : vector<2x8x256xf32>
    %cst_18 = arith.constant dense<0.000000e+00> : vector<2x256xf32>
    %37 = vector.multi_reduction <add>, %36, %cst_18 [1] : vector<2x8x256xf32> to vector<2x256xf32>
    %c2 = arith.constant 2 : index
    %c0_19 = arith.constant 0 : index
    %c0_20 = arith.constant 0 : index
    %38 = vector.load %arg4[%c2, %c0_19, %c0_20] : memref<8x8x256xf32, #tpu.memory_space<vmem>>, vector<1x8x256xf32>
    %39 = vector.shape_cast %38 : vector<1x8x256xf32> to vector<8x256xf32>
    %40 = vector.shape_cast %39 : vector<8x256xf32> to vector<1x8x256xf32>
    %c2_21 = arith.constant 2 : index
    %c0_22 = arith.constant 0 : index
    %c0_23 = arith.constant 0 : index
    %41 = vector.load %arg5[%c2_21, %c0_22, %c0_23] : memref<8x8x256xf32, #tpu.memory_space<vmem>>, vector<1x8x256xf32>
    %42 = vector.shape_cast %41 : vector<1x8x256xf32> to vector<8x256xf32>
    %43 = vector.shape_cast %42 : vector<8x256xf32> to vector<1x8x256xf32>
    %44 = vector.broadcast %40 : vector<1x8x256xf32> to vector<2x8x256xf32>
    %45 = arith.mulf %0, %44 : vector<2x8x256xf32>
    %46 = vector.broadcast %43 : vector<1x8x256xf32> to vector<2x8x256xf32>
    %47 = arith.mulf %1, %46 : vector<2x8x256xf32>
    %48 = arith.subf %45, %47 : vector<2x8x256xf32>
    %cst_24 = arith.constant dense<0.000000e+00> : vector<2x256xf32>
    %49 = vector.multi_reduction <add>, %48, %cst_24 [1] : vector<2x8x256xf32> to vector<2x256xf32>
    %50 = vector.broadcast %43 : vector<1x8x256xf32> to vector<2x8x256xf32>
    %51 = arith.mulf %0, %50 : vector<2x8x256xf32>
    %52 = vector.broadcast %40 : vector<1x8x256xf32> to vector<2x8x256xf32>
    %53 = arith.mulf %1, %52 : vector<2x8x256xf32>
    %54 = arith.addf %51, %53 : vector<2x8x256xf32>
    %cst_25 = arith.constant dense<0.000000e+00> : vector<2x256xf32>
    %55 = vector.multi_reduction <add>, %54, %cst_25 [1] : vector<2x8x256xf32> to vector<2x256xf32>
    %c3 = arith.constant 3 : index
    %c0_26 = arith.constant 0 : index
    %c0_27 = arith.constant 0 : index
    %56 = vector.load %arg4[%c3, %c0_26, %c0_27] : memref<8x8x256xf32, #tpu.memory_space<vmem>>, vector<1x8x256xf32>
    %57 = vector.shape_cast %56 : vector<1x8x256xf32> to vector<8x256xf32>
    %58 = vector.shape_cast %57 : vector<8x256xf32> to vector<1x8x256xf32>
    %c3_28 = arith.constant 3 : index
    %c0_29 = arith.constant 0 : index
    %c0_30 = arith.constant 0 : index
    %59 = vector.load %arg5[%c3_28, %c0_29, %c0_30] : memref<8x8x256xf32, #tpu.memory_space<vmem>>, vector<1x8x256xf32>
    %60 = vector.shape_cast %59 : vector<1x8x256xf32> to vector<8x256xf32>
    %61 = vector.shape_cast %60 : vector<8x256xf32> to vector<1x8x256xf32>
    %62 = vector.broadcast %58 : vector<1x8x256xf32> to vector<2x8x256xf32>
    %63 = arith.mulf %0, %62 : vector<2x8x256xf32>
    %64 = vector.broadcast %61 : vector<1x8x256xf32> to vector<2x8x256xf32>
    %65 = arith.mulf %1, %64 : vector<2x8x256xf32>
    %66 = arith.subf %63, %65 : vector<2x8x256xf32>
    %cst_31 = arith.constant dense<0.000000e+00> : vector<2x256xf32>
    %67 = vector.multi_reduction <add>, %66, %cst_31 [1] : vector<2x8x256xf32> to vector<2x256xf32>
    %68 = vector.broadcast %61 : vector<1x8x256xf32> to vector<2x8x256xf32>
    %69 = arith.mulf %0, %68 : vector<2x8x256xf32>
    %70 = vector.broadcast %58 : vector<1x8x256xf32> to vector<2x8x256xf32>
    %71 = arith.mulf %1, %70 : vector<2x8x256xf32>
    %72 = arith.addf %69, %71 : vector<2x8x256xf32>
    %cst_32 = arith.constant dense<0.000000e+00> : vector<2x256xf32>
    %73 = vector.multi_reduction <add>, %72, %cst_32 [1] : vector<2x8x256xf32> to vector<2x256xf32>
    %c4 = arith.constant 4 : index
    %c0_33 = arith.constant 0 : index
    %c0_34 = arith.constant 0 : index
    %74 = vector.load %arg4[%c4, %c0_33, %c0_34] : memref<8x8x256xf32, #tpu.memory_space<vmem>>, vector<1x8x256xf32>
    %75 = vector.shape_cast %74 : vector<1x8x256xf32> to vector<8x256xf32>
    %76 = vector.shape_cast %75 : vector<8x256xf32> to vector<1x8x256xf32>
    %c4_35 = arith.constant 4 : index
    %c0_36 = arith.constant 0 : index
    %c0_37 = arith.constant 0 : index
    %77 = vector.load %arg5[%c4_35, %c0_36, %c0_37] : memref<8x8x256xf32, #tpu.memory_space<vmem>>, vector<1x8x256xf32>
    %78 = vector.shape_cast %77 : vector<1x8x256xf32> to vector<8x256xf32>
    %79 = vector.shape_cast %78 : vector<8x256xf32> to vector<1x8x256xf32>
    %80 = vector.broadcast %76 : vector<1x8x256xf32> to vector<2x8x256xf32>
    %81 = arith.mulf %0, %80 : vector<2x8x256xf32>
    %82 = vector.broadcast %79 : vector<1x8x256xf32> to vector<2x8x256xf32>
    %83 = arith.mulf %1, %82 : vector<2x8x256xf32>
    %84 = arith.subf %81, %83 : vector<2x8x256xf32>
    %cst_38 = arith.constant dense<0.000000e+00> : vector<2x256xf32>
    %85 = vector.multi_reduction <add>, %84, %cst_38 [1] : vector<2x8x256xf32> to vector<2x256xf32>
    %86 = vector.broadcast %79 : vector<1x8x256xf32> to vector<2x8x256xf32>
    %87 = arith.mulf %0, %86 : vector<2x8x256xf32>
    %88 = vector.broadcast %76 : vector<1x8x256xf32> to vector<2x8x256xf32>
    %89 = arith.mulf %1, %88 : vector<2x8x256xf32>
    %90 = arith.addf %87, %89 : vector<2x8x256xf32>
    %cst_39 = arith.constant dense<0.000000e+00> : vector<2x256xf32>
    %91 = vector.multi_reduction <add>, %90, %cst_39 [1] : vector<2x8x256xf32> to vector<2x256xf32>
    %c5 = arith.constant 5 : index
    %c0_40 = arith.constant 0 : index
    %c0_41 = arith.constant 0 : index
    %92 = vector.load %arg4[%c5, %c0_40, %c0_41] : memref<8x8x256xf32, #tpu.memory_space<vmem>>, vector<1x8x256xf32>
    %93 = vector.shape_cast %92 : vector<1x8x256xf32> to vector<8x256xf32>
    %94 = vector.shape_cast %93 : vector<8x256xf32> to vector<1x8x256xf32>
    %c5_42 = arith.constant 5 : index
    %c0_43 = arith.constant 0 : index
    %c0_44 = arith.constant 0 : index
    %95 = vector.load %arg5[%c5_42, %c0_43, %c0_44] : memref<8x8x256xf32, #tpu.memory_space<vmem>>, vector<1x8x256xf32>
    %96 = vector.shape_cast %95 : vector<1x8x256xf32> to vector<8x256xf32>
    %97 = vector.shape_cast %96 : vector<8x256xf32> to vector<1x8x256xf32>
    %98 = vector.broadcast %94 : vector<1x8x256xf32> to vector<2x8x256xf32>
    %99 = arith.mulf %0, %98 : vector<2x8x256xf32>
    %100 = vector.broadcast %97 : vector<1x8x256xf32> to vector<2x8x256xf32>
    %101 = arith.mulf %1, %100 : vector<2x8x256xf32>
    %102 = arith.subf %99, %101 : vector<2x8x256xf32>
    %cst_45 = arith.constant dense<0.000000e+00> : vector<2x256xf32>
    %103 = vector.multi_reduction <add>, %102, %cst_45 [1] : vector<2x8x256xf32> to vector<2x256xf32>
    %104 = vector.broadcast %97 : vector<1x8x256xf32> to vector<2x8x256xf32>
    %105 = arith.mulf %0, %104 : vector<2x8x256xf32>
    %106 = vector.broadcast %94 : vector<1x8x256xf32> to vector<2x8x256xf32>
    %107 = arith.mulf %1, %106 : vector<2x8x256xf32>
    %108 = arith.addf %105, %107 : vector<2x8x256xf32>
    %cst_46 = arith.constant dense<0.000000e+00> : vector<2x256xf32>
    %109 = vector.multi_reduction <add>, %108, %cst_46 [1] : vector<2x8x256xf32> to vector<2x256xf32>
    %c6 = arith.constant 6 : index
    %c0_47 = arith.constant 0 : index
    %c0_48 = arith.constant 0 : index
    %110 = vector.load %arg4[%c6, %c0_47, %c0_48] : memref<8x8x256xf32, #tpu.memory_space<vmem>>, vector<1x8x256xf32>
    %111 = vector.shape_cast %110 : vector<1x8x256xf32> to vector<8x256xf32>
    %112 = vector.shape_cast %111 : vector<8x256xf32> to vector<1x8x256xf32>
    %c6_49 = arith.constant 6 : index
    %c0_50 = arith.constant 0 : index
    %c0_51 = arith.constant 0 : index
    %113 = vector.load %arg5[%c6_49, %c0_50, %c0_51] : memref<8x8x256xf32, #tpu.memory_space<vmem>>, vector<1x8x256xf32>
    %114 = vector.shape_cast %113 : vector<1x8x256xf32> to vector<8x256xf32>
    %115 = vector.shape_cast %114 : vector<8x256xf32> to vector<1x8x256xf32>
    %116 = vector.broadcast %112 : vector<1x8x256xf32> to vector<2x8x256xf32>
    %117 = arith.mulf %0, %116 : vector<2x8x256xf32>
    %118 = vector.broadcast %115 : vector<1x8x256xf32> to vector<2x8x256xf32>
    %119 = arith.mulf %1, %118 : vector<2x8x256xf32>
    %120 = arith.subf %117, %119 : vector<2x8x256xf32>
    %cst_52 = arith.constant dense<0.000000e+00> : vector<2x256xf32>
    %121 = vector.multi_reduction <add>, %120, %cst_52 [1] : vector<2x8x256xf32> to vector<2x256xf32>
    %122 = vector.broadcast %115 : vector<1x8x256xf32> to vector<2x8x256xf32>
    %123 = arith.mulf %0, %122 : vector<2x8x256xf32>
    %124 = vector.broadcast %112 : vector<1x8x256xf32> to vector<2x8x256xf32>
    %125 = arith.mulf %1, %124 : vector<2x8x256xf32>
    %126 = arith.addf %123, %125 : vector<2x8x256xf32>
    %cst_53 = arith.constant dense<0.000000e+00> : vector<2x256xf32>
    %127 = vector.multi_reduction <add>, %126, %cst_53 [1] : vector<2x8x256xf32> to vector<2x256xf32>
    %c7 = arith.constant 7 : index
    %c0_54 = arith.constant 0 : index
    %c0_55 = arith.constant 0 : index
    %128 = vector.load %arg4[%c7, %c0_54, %c0_55] : memref<8x8x256xf32, #tpu.memory_space<vmem>>, vector<1x8x256xf32>
    %129 = vector.shape_cast %128 : vector<1x8x256xf32> to vector<8x256xf32>
    %130 = vector.shape_cast %129 : vector<8x256xf32> to vector<1x8x256xf32>
    %c7_56 = arith.constant 7 : index
    %c0_57 = arith.constant 0 : index
    %c0_58 = arith.constant 0 : index
    %131 = vector.load %arg5[%c7_56, %c0_57, %c0_58] : memref<8x8x256xf32, #tpu.memory_space<vmem>>, vector<1x8x256xf32>
    %132 = vector.shape_cast %131 : vector<1x8x256xf32> to vector<8x256xf32>
    %133 = vector.shape_cast %132 : vector<8x256xf32> to vector<1x8x256xf32>
    %134 = vector.broadcast %130 : vector<1x8x256xf32> to vector<2x8x256xf32>
    %135 = arith.mulf %0, %134 : vector<2x8x256xf32>
    %136 = vector.broadcast %133 : vector<1x8x256xf32> to vector<2x8x256xf32>
    %137 = arith.mulf %1, %136 : vector<2x8x256xf32>
    %138 = arith.subf %135, %137 : vector<2x8x256xf32>
    %cst_59 = arith.constant dense<0.000000e+00> : vector<2x256xf32>
    %139 = vector.multi_reduction <add>, %138, %cst_59 [1] : vector<2x8x256xf32> to vector<2x256xf32>
    %140 = vector.broadcast %133 : vector<1x8x256xf32> to vector<2x8x256xf32>
    %141 = arith.mulf %0, %140 : vector<2x8x256xf32>
    %142 = vector.broadcast %130 : vector<1x8x256xf32> to vector<2x8x256xf32>
    %143 = arith.mulf %1, %142 : vector<2x8x256xf32>
    %144 = arith.addf %141, %143 : vector<2x8x256xf32>
    %cst_60 = arith.constant dense<0.000000e+00> : vector<2x256xf32>
    %145 = vector.multi_reduction <add>, %144, %cst_60 [1] : vector<2x8x256xf32> to vector<2x256xf32>
    %146 = vector.shape_cast %13 : vector<2x256xf32> to vector<2x1x256xf32>
    %147 = vector.shape_cast %31 : vector<2x256xf32> to vector<2x1x256xf32>
    %148 = vector.shape_cast %49 : vector<2x256xf32> to vector<2x1x256xf32>
    %149 = vector.shape_cast %67 : vector<2x256xf32> to vector<2x1x256xf32>
    %150 = vector.shape_cast %85 : vector<2x256xf32> to vector<2x1x256xf32>
    %151 = vector.shape_cast %103 : vector<2x256xf32> to vector<2x1x256xf32>
    %152 = vector.shape_cast %121 : vector<2x256xf32> to vector<2x1x256xf32>
    %153 = vector.shape_cast %139 : vector<2x256xf32> to vector<2x1x256xf32>
    %154 = tpu.concatenate %146, %147, %148, %149, %150, %151, %152, %153 in 1 : vector<2x1x256xf32>, vector<2x1x256xf32>, vector<2x1x256xf32>, vector<2x1x256xf32>, vector<2x1x256xf32>, vector<2x1x256xf32>, vector<2x1x256xf32>, vector<2x1x256xf32> -> vector<2x8x256xf32>
    %c0_61 = arith.constant 0 : index
    %c0_62 = arith.constant 0 : index
    %c0_63 = arith.constant 0 : index
    %155 = vector.load %arg6[%c0_61, %c0_62, %c0_63] : memref<2x8x256xf32, #tpu.memory_space<vmem>>, vector<2x8x256xf32>
    tpu.vector_store %arg6[%c0_61, %c0_62, %c0_63], %154 {strides = array<i32>} : memref<2x8x256xf32, #tpu.memory_space<vmem>>, vector<2x8x256xf32>,
    %156 = vector.shape_cast %19 : vector<2x256xf32> to vector<2x1x256xf32>
    %157 = vector.shape_cast %37 : vector<2x256xf32> to vector<2x1x256xf32>
    %158 = vector.shape_cast %55 : vector<2x256xf32> to vector<2x1x256xf32>
    %159 = vector.shape_cast %73 : vector<2x256xf32> to vector<2x1x256xf32>
    %160 = vector.shape_cast %91 : vector<2x256xf32> to vector<2x1x256xf32>
    %161 = vector.shape_cast %109 : vector<2x256xf32> to vector<2x1x256xf32>
    %162 = vector.shape_cast %127 : vector<2x256xf32> to vector<2x1x256xf32>
    %163 = vector.shape_cast %145 : vector<2x256xf32> to vector<2x1x256xf32>
    %164 = tpu.concatenate %156, %157, %158, %159, %160, %161, %162, %163 in 1 : vector<2x1x256xf32>, vector<2x1x256xf32>, vector<2x1x256xf32>, vector<2x1x256xf32>, vector<2x1x256xf32>, vector<2x1x256xf32>, vector<2x1x256xf32>, vector<2x1x256xf32> -> vector<2x8x256xf32>
    %c0_64 = arith.constant 0 : index
    %c0_65 = arith.constant 0 : index
    %c0_66 = arith.constant 0 : index
    %165 = vector.load %arg7[%c0_64, %c0_65, %c0_66] : memref<2x8x256xf32, #tpu.memory_space<vmem>>, vector<2x8x256xf32>
    tpu.vector_store %arg7[%c0_64, %c0_65, %c0_66], %164 {strides = array<i32>} : memref<2x8x256xf32, #tpu.memory_space<vmem>>, vector<2x8x256xf32>,
    return
  }
  func.func @transform_0(%arg0: i32, %arg1: i32) -> (i32, i32, i32) {
    %c0_i32 = arith.constant 0 : i32
    %c0_i32_0 = arith.constant 0 : i32
    %c0_i32_1 = arith.constant 0 : i32
    return %c0_i32, %c0_i32_0, %arg1 : i32, i32, i32
  }
  func.func @transform_1(%arg0: i32, %arg1: i32) -> (i32, i32, i32) {
    %c0_i32 = arith.constant 0 : i32
    %c0_i32_0 = arith.constant 0 : i32
    %c0_i32_1 = arith.constant 0 : i32
    return %c0_i32, %c0_i32_0, %arg1 : i32, i32, i32
  }
  func.func @transform_2(%arg0: i32, %arg1: i32) -> (i32, i32, i32) {
    %c0_i32 = arith.constant 0 : i32
    %c0_i32_0 = arith.constant 0 : i32
    return %arg0, %c0_i32, %arg1 : i32, i32, i32
  }
  func.func @transform_3(%arg0: i32, %arg1: i32) -> (i32, i32, i32) {
    %c0_i32 = arith.constant 0 : i32
    %c0_i32_0 = arith.constant 0 : i32
    return %arg0, %c0_i32, %arg1 : i32, i32, i32
  }
  func.func @transform_4(%arg0: i32, %arg1: i32) -> (i32, i32, i32) {
    %c0_i32 = arith.constant 0 : i32
    %c0_i32_0 = arith.constant 0 : i32
    return %c0_i32, %arg0, %arg1 : i32, i32, i32
  }
  func.func @transform_5(%arg0: i32, %arg1: i32) -> (i32, i32, i32) {
    %c0_i32 = arith.constant 0 : i32
    %c0_i32_0 = arith.constant 0 : i32
    return %c0_i32, %arg0, %arg1 : i32, i32, i32
  }
}

module attributes {stable_mosaic.version = 11 : i64} {
  func.func @_skip_add_stats_kernel(%arg0: i32, %arg1: memref<216x128xf32, #tpu.memory_space<vmem>>, %arg2: memref<128x128xf32, #tpu.memory_space<vmem>>, %arg3: memref<216x128xf32, #tpu.memory_space<vmem>>, %arg4: memref<216x128xf32, #tpu.memory_space<vmem>>, %arg5: memref<8x128xf32, #tpu.memory_space<vmem>>, %arg6: memref<8x128xf32, #tpu.memory_space<vmem>>) attributes {dimension_semantics = [#tpu.dimension_semantics<parallel>], iteration_bounds = array<i64: 1>, scalar_prefetch = 0 : i64, scratch_operands = 0 : i64, tpu.core_type = #tpu.core_type<tc>, window_params = [{transform_indices = @transform_0, window_bounds = array<i64: 216, 128>}, {pipeline_mode = #tpu.pipeline_mode<synchronous>, transform_indices = @transform_1, window_bounds = array<i64: 128, 128>}, {transform_indices = @transform_2, window_bounds = array<i64: 216, 128>}, {transform_indices = @transform_3, window_bounds = array<i64: 216, 128>}, {transform_indices = @transform_4, window_bounds = array<i64: 8, 128>}, {transform_indices = @transform_5, window_bounds = array<i64: 8, 128>}]} {
    %c0 = arith.constant 0 : index
    %c0_0 = arith.constant 0 : index
    %0 = vector.load %arg1[%c0, %c0_0] : memref<216x128xf32, #tpu.memory_space<vmem>>, vector<216x128xf32>
    %c0_1 = arith.constant 0 : index
    %c0_2 = arith.constant 0 : index
    %1 = vector.load %arg2[%c0_1, %c0_2] : memref<128x128xf32, #tpu.memory_space<vmem>>, vector<128x128xf32>
    %cst = arith.constant dense<0.000000e+00> : vector<216x128xf32>
    %2 = tpu.matmul %0, %1, %cst {dimension_numbers = #tpu.dot_dimension_numbers<[1], [0], [0], [1], [0, 0, 1, 1], [], []>} : vector<216x128xf32>, vector<128x128xf32>, vector<216x128xf32> -> vector<216x128xf32>
    %c0_3 = arith.constant 0 : index
    %c0_4 = arith.constant 0 : index
    %3 = vector.load %arg3[%c0_3, %c0_4] : memref<216x128xf32, #tpu.memory_space<vmem>>, vector<216x128xf32>
    %4 = arith.addf %2, %3 : vector<216x128xf32>
    %c0_5 = arith.constant 0 : index
    %c0_6 = arith.constant 0 : index
    %5 = vector.load %arg4[%c0_5, %c0_6] : memref<216x128xf32, #tpu.memory_space<vmem>>, vector<216x128xf32>
    tpu.vector_store %arg4[%c0_5, %c0_6], %4 {strides = array<i32>} : memref<216x128xf32, #tpu.memory_space<vmem>>, vector<216x128xf32>,
    %cst_7 = arith.constant dense<0.000000e+00> : vector<128xf32>
    %6 = vector.multi_reduction <add>, %4, %cst_7 [0] : vector<216x128xf32> to vector<128xf32>
    %7 = vector.shape_cast %6 : vector<128xf32> to vector<1x128xf32>
    %8 = arith.mulf %4, %4 : vector<216x128xf32>
    %cst_8 = arith.constant dense<0.000000e+00> : vector<128xf32>
    %9 = vector.multi_reduction <add>, %8, %cst_8 [0] : vector<216x128xf32> to vector<128xf32>
    %10 = vector.shape_cast %9 : vector<128xf32> to vector<1x128xf32>
    %11 = vector.shape_cast %7 : vector<1x128xf32> to vector<1x128xf32>
    %12 = vector.broadcast %11 : vector<1x128xf32> to vector<8x128xf32>
    %c0_9 = arith.constant 0 : index
    %c0_10 = arith.constant 0 : index
    %13 = vector.load %arg5[%c0_9, %c0_10] : memref<8x128xf32, #tpu.memory_space<vmem>>, vector<8x128xf32>
    tpu.vector_store %arg5[%c0_9, %c0_10], %12 {strides = array<i32>} : memref<8x128xf32, #tpu.memory_space<vmem>>, vector<8x128xf32>,
    %14 = vector.shape_cast %10 : vector<1x128xf32> to vector<1x128xf32>
    %15 = vector.broadcast %14 : vector<1x128xf32> to vector<8x128xf32>
    %c0_11 = arith.constant 0 : index
    %c0_12 = arith.constant 0 : index
    %16 = vector.load %arg6[%c0_11, %c0_12] : memref<8x128xf32, #tpu.memory_space<vmem>>, vector<8x128xf32>
    tpu.vector_store %arg6[%c0_11, %c0_12], %15 {strides = array<i32>} : memref<8x128xf32, #tpu.memory_space<vmem>>, vector<8x128xf32>,
    return
  }
  func.func @transform_0(%arg0: i32) -> (i32, i32) {
    %c0_i32 = arith.constant 0 : i32
    %c0_i32_0 = arith.constant 0 : i32
    return %arg0, %c0_i32 : i32, i32
  }
  func.func @transform_1(%arg0: i32) -> (i32, i32) {
    %c0_i32 = arith.constant 0 : i32
    %c0_i32_0 = arith.constant 0 : i32
    %c0_i32_1 = arith.constant 0 : i32
    return %c0_i32, %c0_i32_0 : i32, i32
  }
  func.func @transform_2(%arg0: i32) -> (i32, i32) {
    %c0_i32 = arith.constant 0 : i32
    %c0_i32_0 = arith.constant 0 : i32
    return %arg0, %c0_i32 : i32, i32
  }
  func.func @transform_3(%arg0: i32) -> (i32, i32) {
    %c0_i32 = arith.constant 0 : i32
    %c0_i32_0 = arith.constant 0 : i32
    return %arg0, %c0_i32 : i32, i32
  }
  func.func @transform_4(%arg0: i32) -> (i32, i32) {
    %c0_i32 = arith.constant 0 : i32
    %c0_i32_0 = arith.constant 0 : i32
    return %arg0, %c0_i32 : i32, i32
  }
  func.func @transform_5(%arg0: i32) -> (i32, i32) {
    %c0_i32 = arith.constant 0 : i32
    %c0_i32_0 = arith.constant 0 : i32
    return %arg0, %c0_i32 : i32, i32
  }
}

module attributes {stable_mosaic.version = 11 : i64} {
  func.func @_bn_apply_kernel(%arg0: i32, %arg1: memref<216x128xf32, #tpu.memory_space<vmem>>, %arg2: memref<1x128xf32, #tpu.memory_space<vmem>>, %arg3: memref<1x128xf32, #tpu.memory_space<vmem>>, %arg4: memref<216x128xf32, #tpu.memory_space<vmem>>) attributes {dimension_semantics = [#tpu.dimension_semantics<parallel>], iteration_bounds = array<i64: 1>, scalar_prefetch = 0 : i64, scratch_operands = 0 : i64, tpu.core_type = #tpu.core_type<tc>, window_params = [{transform_indices = @transform_0, window_bounds = array<i64: 216, 128>}, {pipeline_mode = #tpu.pipeline_mode<synchronous>, transform_indices = @transform_1, window_bounds = array<i64: 1, 128>}, {pipeline_mode = #tpu.pipeline_mode<synchronous>, transform_indices = @transform_2, window_bounds = array<i64: 1, 128>}, {transform_indices = @transform_3, window_bounds = array<i64: 216, 128>}]} {
    %c0 = arith.constant 0 : index
    %c0_0 = arith.constant 0 : index
    %0 = vector.load %arg1[%c0, %c0_0] : memref<216x128xf32, #tpu.memory_space<vmem>>, vector<216x128xf32>
    %c0_1 = arith.constant 0 : index
    %c0_2 = arith.constant 0 : index
    %1 = vector.load %arg2[%c0_1, %c0_2] : memref<1x128xf32, #tpu.memory_space<vmem>>, vector<1x128xf32>
    %2 = vector.broadcast %1 : vector<1x128xf32> to vector<216x128xf32>
    %3 = arith.mulf %0, %2 : vector<216x128xf32>
    %c0_3 = arith.constant 0 : index
    %c0_4 = arith.constant 0 : index
    %4 = vector.load %arg3[%c0_3, %c0_4] : memref<1x128xf32, #tpu.memory_space<vmem>>, vector<1x128xf32>
    %5 = vector.broadcast %4 : vector<1x128xf32> to vector<216x128xf32>
    %6 = arith.addf %3, %5 : vector<216x128xf32>
    %cst = arith.constant 5.000000e-01 : f32
    %7 = vector.broadcast %cst : f32 to vector<216x128xf32>
    %8 = arith.mulf %7, %6 : vector<216x128xf32>
    %cst_5 = arith.constant 0.707106769 : f32
    %9 = vector.broadcast %cst_5 : f32 to vector<216x128xf32>
    %10 = arith.mulf %6, %9 : vector<216x128xf32>
    %cst_6 = arith.constant 0.000000e+00 : f32
    %11 = vector.broadcast %cst_6 : f32 to vector<216x128xf32>
    %12 = arith.cmpf oge, %10, %11 : vector<216x128xf32>
    %cst_7 = arith.constant 1.000000e+00 : f32
    %cst_8 = arith.constant -1.000000e+00 : f32
    %13 = vector.broadcast %cst_7 : f32 to vector<216x128xf32>
    %14 = vector.broadcast %cst_8 : f32 to vector<216x128xf32>
    %15 = arith.select %12, %13, %14 : vector<216x128xi1>, vector<216x128xf32>
    %16 = math.absf %10 : vector<216x128xf32>
    %cst_9 = arith.constant 0.327591091 : f32
    %17 = vector.broadcast %cst_9 : f32 to vector<216x128xf32>
    %18 = arith.mulf %17, %16 : vector<216x128xf32>
    %cst_10 = arith.constant 1.000000e+00 : f32
    %19 = vector.broadcast %cst_10 : f32 to vector<216x128xf32>
    %20 = arith.addf %19, %18 : vector<216x128xf32>
    %21 = tpu.reciprocal %20 {approx = true} : vector<216x128xf32> -> vector<216x128xf32>
    %cst_11 = arith.constant 1.06140542 : f32
    %22 = vector.broadcast %cst_11 : f32 to vector<216x128xf32>
    %23 = arith.mulf %21, %22 : vector<216x128xf32>
    %cst_12 = arith.constant -1.45315206 : f32
    %24 = vector.broadcast %cst_12 : f32 to vector<216x128xf32>
    %25 = arith.addf %24, %23 : vector<216x128xf32>
    %26 = arith.mulf %21, %25 : vector<216x128xf32>
    %cst_13 = arith.constant 1.42141378 : f32
    %27 = vector.broadcast %cst_13 : f32 to vector<216x128xf32>
    %28 = arith.addf %27, %26 : vector<216x128xf32>
    %29 = arith.mulf %21, %28 : vector<216x128xf32>
    %cst_14 = arith.constant -0.284496725 : f32
    %30 = vector.broadcast %cst_14 : f32 to vector<216x128xf32>
    %31 = arith.addf %30, %29 : vector<216x128xf32>
    %32 = arith.mulf %21, %31 : vector<216x128xf32>
    %cst_15 = arith.constant 0.254829586 : f32
    %33 = vector.broadcast %cst_15 : f32 to vector<216x128xf32>
    %34 = arith.addf %33, %32 : vector<216x128xf32>
    %35 = arith.mulf %21, %34 : vector<216x128xf32>
    %cst_16 = arith.constant 0.000000e+00 : f32
    %36 = vector.broadcast %cst_16 : f32 to vector<216x128xf32>
    %37 = arith.subf %36, %16 : vector<216x128xf32>
    %38 = arith.mulf %37, %16 : vector<216x128xf32>
    %39 = math.exp %38 : vector<216x128xf32>
    %40 = arith.mulf %35, %39 : vector<216x128xf32>
    %cst_17 = arith.constant 1.000000e+00 : f32
    %41 = vector.broadcast %cst_17 : f32 to vector<216x128xf32>
    %42 = arith.subf %41, %40 : vector<216x128xf32>
    %43 = arith.mulf %15, %42 : vector<216x128xf32>
    %cst_18 = arith.constant 1.000000e+00 : f32
    %44 = vector.broadcast %cst_18 : f32 to vector<216x128xf32>
    %45 = arith.addf %44, %43 : vector<216x128xf32>
    %46 = arith.mulf %8, %45 : vector<216x128xf32>
    %c0_19 = arith.constant 0 : index
    %c0_20 = arith.constant 0 : index
    %47 = vector.load %arg4[%c0_19, %c0_20] : memref<216x128xf32, #tpu.memory_space<vmem>>, vector<216x128xf32>
    tpu.vector_store %arg4[%c0_19, %c0_20], %46 {strides = array<i32>} : memref<216x128xf32, #tpu.memory_space<vmem>>, vector<216x128xf32>,
    return
  }
  func.func @transform_0(%arg0: i32) -> (i32, i32) {
    %c0_i32 = arith.constant 0 : i32
    %c0_i32_0 = arith.constant 0 : i32
    return %arg0, %c0_i32 : i32, i32
  }
  func.func @transform_1(%arg0: i32) -> (i32, i32) {
    %c0_i32 = arith.constant 0 : i32
    %c0_i32_0 = arith.constant 0 : i32
    %c0_i32_1 = arith.constant 0 : i32
    return %c0_i32, %c0_i32_0 : i32, i32
  }
  func.func @transform_2(%arg0: i32) -> (i32, i32) {
    %c0_i32 = arith.constant 0 : i32
    %c0_i32_0 = arith.constant 0 : i32
    %c0_i32_1 = arith.constant 0 : i32
    return %c0_i32, %c0_i32_0 : i32, i32
  }
  func.func @transform_3(%arg0: i32) -> (i32, i32) {
    %c0_i32 = arith.constant 0 : i32
    %c0_i32_0 = arith.constant 0 : i32
    return %arg0, %c0_i32 : i32, i32
  }
}

module attributes {stable_mosaic.version = 11 : i64} {
  func.func @_pw_conv_bias_kernel(%arg0: i32, %arg1: memref<16x512xf32, #tpu.memory_space<vmem>>, %arg2: memref<512x64xf32, #tpu.memory_space<vmem>>, %arg3: memref<1x64xf32, #tpu.memory_space<vmem>>, %arg4: memref<16x64xf32, #tpu.memory_space<vmem>>) attributes {dimension_semantics = [#tpu.dimension_semantics<parallel>], iteration_bounds = array<i64: 1>, scalar_prefetch = 0 : i64, scratch_operands = 0 : i64, tpu.core_type = #tpu.core_type<tc>, window_params = [{transform_indices = @transform_0, window_bounds = array<i64: 16, 512>}, {pipeline_mode = #tpu.pipeline_mode<synchronous>, transform_indices = @transform_1, window_bounds = array<i64: 512, 64>}, {pipeline_mode = #tpu.pipeline_mode<synchronous>, transform_indices = @transform_2, window_bounds = array<i64: 1, 64>}, {transform_indices = @transform_3, window_bounds = array<i64: 16, 64>}]} {
    %c0 = arith.constant 0 : index
    %c0_0 = arith.constant 0 : index
    %0 = vector.load %arg1[%c0, %c0_0] : memref<16x512xf32, #tpu.memory_space<vmem>>, vector<16x512xf32>
    %c0_1 = arith.constant 0 : index
    %c0_2 = arith.constant 0 : index
    %1 = vector.load %arg2[%c0_1, %c0_2] : memref<512x64xf32, #tpu.memory_space<vmem>>, vector<512x64xf32>
    %cst = arith.constant dense<0.000000e+00> : vector<16x64xf32>
    %2 = tpu.matmul %0, %1, %cst {dimension_numbers = #tpu.dot_dimension_numbers<[1], [0], [0], [1], [0, 0, 1, 1], [], []>} : vector<16x512xf32>, vector<512x64xf32>, vector<16x64xf32> -> vector<16x64xf32>
    %c0_3 = arith.constant 0 : index
    %c0_4 = arith.constant 0 : index
    %3 = vector.load %arg3[%c0_3, %c0_4] : memref<1x64xf32, #tpu.memory_space<vmem>>, vector<1x64xf32>
    %4 = vector.broadcast %3 : vector<1x64xf32> to vector<16x64xf32>
    %5 = arith.addf %2, %4 : vector<16x64xf32>
    %c0_5 = arith.constant 0 : index
    %c0_6 = arith.constant 0 : index
    %6 = vector.load %arg4[%c0_5, %c0_6] : memref<16x64xf32, #tpu.memory_space<vmem>>, vector<16x64xf32>
    tpu.vector_store %arg4[%c0_5, %c0_6], %5 {strides = array<i32>} : memref<16x64xf32, #tpu.memory_space<vmem>>, vector<16x64xf32>,
    return
  }
  func.func @transform_0(%arg0: i32) -> (i32, i32) {
    %c0_i32 = arith.constant 0 : i32
    %c0_i32_0 = arith.constant 0 : i32
    return %arg0, %c0_i32 : i32, i32
  }
  func.func @transform_1(%arg0: i32) -> (i32, i32) {
    %c0_i32 = arith.constant 0 : i32
    %c0_i32_0 = arith.constant 0 : i32
    %c0_i32_1 = arith.constant 0 : i32
    return %c0_i32, %c0_i32_0 : i32, i32
  }
  func.func @transform_2(%arg0: i32) -> (i32, i32) {
    %c0_i32 = arith.constant 0 : i32
    %c0_i32_0 = arith.constant 0 : i32
    %c0_i32_1 = arith.constant 0 : i32
    return %c0_i32, %c0_i32_0 : i32, i32
  }
  func.func @transform_3(%arg0: i32) -> (i32, i32) {
    %c0_i32 = arith.constant 0 : i32
    %c0_i32_0 = arith.constant 0 : i32
    return %arg0, %c0_i32 : i32, i32
  }
}

</mosaic_0001>

<llo_original>
// kernel: tile.34
$region0: #{tile.34}
  %s0 = inlined_call_operand.vmem [shape: f32[16,8], index: 0, kind: input, shape index: {}]
  %s1 = inlined_call_operand.vmem [shape: f32[1,128], index: 1, kind: output, shape index: {}]
  $region1: #{tile.34} parent=0
    #allocation0 [shape = 'u8[4096]{0}', space=vmem, size = 0x1000, scoped, tag = 'scoped mem for output reshape']
    %v2 = vld [vmem:[%s0] sm:$0x1]
    %vm3 = vcmask 64512
    %4 = vst.msk [vmem:[#allocation0] sm:$0x1] %vm3, %v2
    %s5 = scalar_lea.vmem %s0, 15
    %v6 = vld [vmem:[%s5] sm:$0x1]
    %7 = vrot.lane.b32.xlu0 %v6, 120
    %v8 = vpop.permute.xlu0 %7
    %vm9 = vcmask 1048512
    %10 = vst.msk [vmem:[#allocation0] sm:$0x1] %vm9, %v8
    %s11 = scalar_lea.vmem %s0, 14
    %v12 = vld [vmem:[%s11] sm:$0x1]
    %13 = vrot.lane.b32.xlu0 %v12, 112
    %v14 = vpop.permute.xlu0 %13
    %vm15 = vcmask 982912
    %16 = vst.msk [vmem:[#allocation0] sm:$0x1] %vm15, %v14
    %s17 = scalar_lea.vmem %s0, 13
    %v18 = vld [vmem:[%s17] sm:$0x1]
    %19 = vrot.lane.b32.xlu0 %v18, 104
    %v20 = vpop.permute.xlu0 %19
    %vm21 = vcmask 917312
    %22 = vst.msk [vmem:[#allocation0] sm:$0x1] %vm21, %v20
    %s23 = scalar_lea.vmem %s0, 12
    %v24 = vld [vmem:[%s23] sm:$0x1]
    %25 = vrot.lane.b32.xlu0 %v24, 96
    %v26 = vpop.permute.xlu0 %25
    %vm27 = vcmask 851712
    %28 = vst.msk [vmem:[#allocation0] sm:$0x1] %vm27, %v26
    %s29 = scalar_lea.vmem %s0, 11
    %v30 = vld [vmem:[%s29] sm:$0x1]
    %31 = vrot.lane.b32.xlu0 %v30, 88
    %v32 = vpop.permute.xlu0 %31
    %vm33 = vcmask 786112
    %34 = vst.msk [vmem:[#allocation0] sm:$0x1] %vm33, %v32
    %s35 = scalar_lea.vmem %s0, 10
    %v36 = vld [vmem:[%s35] sm:$0x1]
    %37 = vrot.lane.b32.xlu0 %v36, 80
    %v38 = vpop.permute.xlu0 %37
    %vm39 = vcmask 720512
    %40 = vst.msk [vmem:[#allocation0] sm:$0x1] %vm39, %v38
    %s41 = scalar_lea.vmem %s0, 9
    %v42 = vld [vmem:[%s41] sm:$0x1]
    %43 = vrot.lane.b32.xlu0 %v42, 72
    %v44 = vpop.permute.xlu0 %43
    %vm45 = vcmask 654912
    %46 = vst.msk [vmem:[#allocation0] sm:$0x1] %vm45, %v44
    %s47 = scalar_lea.vmem %s0, 8
    %v48 = vld [vmem:[%s47] sm:$0x1]
    %49 = vrot.lane.b32.xlu0 %v48, 64
    %v50 = vpop.permute.xlu0 %49
    %vm51 = vcmask 589312
    %52 = vst.msk [vmem:[#allocation0] sm:$0x1] %vm51, %v50
    %s53 = scalar_lea.vmem %s0, 7
    %v54 = vld [vmem:[%s53] sm:$0x1]
    %55 = vrot.lane.b32.xlu0 %v54, 56
    %v56 = vpop.permute.xlu0 %55
    %vm57 = vcmask 523712
    %58 = vst.msk [vmem:[#allocation0] sm:$0x1] %vm57, %v56
    %s59 = scalar_lea.vmem %s0, 6
    %v60 = vld [vmem:[%s59] sm:$0x1]
    %61 = vrot.lane.b32.xlu0 %v60, 48
    %v62 = vpop.permute.xlu0 %61
    %vm63 = vcmask 458112
    %64 = vst.msk [vmem:[#allocation0] sm:$0x1] %vm63, %v62
    %s65 = scalar_lea.vmem %s0, 5
    %v66 = vld [vmem:[%s65] sm:$0x1]
    %67 = vrot.lane.b32.xlu0 %v66, 40
    %v68 = vpop.permute.xlu0 %67
    %vm69 = vcmask 392512
    %70 = vst.msk [vmem:[#allocation0] sm:$0x1] %vm69, %v68
    %s71 = scalar_lea.vmem %s0, 4
    %v72 = vld [vmem:[%s71] sm:$0x1]
    %73 = vrot.lane.b32.xlu0 %v72, 32
    %v74 = vpop.permute.xlu0 %73
    %vm75 = vcmask 326912
    %76 = vst.msk [vmem:[#allocation0] sm:$0x1] %vm75, %v74
    %s77 = scalar_lea.vmem %s0, 3
    %v78 = vld [vmem:[%s77] sm:$0x1]
    %79 = vrot.lane.b32.xlu0 %v78, 24
    %v80 = vpop.permute.xlu0 %79
    %vm81 = vcmask 261312
    %82 = vst.msk [vmem:[#allocation0] sm:$0x1] %vm81, %v80
    %s83 = scalar_lea.vmem %s0, 2
    %v84 = vld [vmem:[%s83] sm:$0x1]
    %85 = vrot.lane.b32.xlu0 %v84, 16
    %v86 = vpop.permute.xlu0 %85
    %vm87 = vcmask 195712
    %88 = vst.msk [vmem:[#allocation0] sm:$0x1] %vm87, %v86
    %s89 = scalar_lea.vmem %s0, 1
    %v90 = vld [vmem:[%s89] sm:$0x1]
    %91 = vrot.lane.b32.xlu0 %v90, 8
    %v92 = vpop.permute.xlu0 %91
    %vm93 = vcmask 130112
    %94 = vst.msk [vmem:[#allocation0] sm:$0x1] %vm93, %v92
    %s96 = sshll.u32 1, 1
    %s97 = ssub.s32 %s96, 1
    %v99 = vld [vmem:[#allocation0] sm:%s97]
    %s100 = sshll.u32 1, 1
    %s101 = ssub.s32 %s100, 1
    %102 = vst [vmem:[%s1] sm:%s101] %v99

// kernel: tfno_forward.8
$region0: #{tfno_forward.8}
  #allocation0 [shape = 'u32[]', space=smem, size = 0x4, offset = 0x4, fixed_abs, tag = 'smem constant byte address 0x4 - core index']
  #allocation1 [shape = 'u32[144,128]{1,0:T(1,128)}', space=vmem, size = 0x12000, scoped, tag = 'internal scratch']
  %s0 = inlined_call_operand.vmem [shape: f32[64,16], index: 0, kind: input, shape index: {}]
  %s1 = inlined_call_operand.vmem [shape: f32[16,128], index: 1, kind: input, shape index: {}]
  %s2 = inlined_call_operand.vmem [shape: f32[1,128], index: 2, kind: input, shape index: {}]
  %s3 = inlined_call_operand.vmem [shape: f32[64,128], index: 3, kind: output, shape index: {}]
  %s4 = sld [smem:[#allocation0]]
  $region22: #{tfno_forward.8} parent=0
    _
  %s6 = ssub.s32 1, %s4
  %s7 = scalar_select 0, %s6, %s4
  // Predicated region
  $region2: #{tfno_forward.8} parent=0 // pred_check
    _
  $region3: #{tfno_forward.8} parent=0 // pred_check_branch
    %9 = sbr.rel (0) target = $region5
  $region4: #{tfno_forward.8} parent=0 // pred_region
    _
  $region5: #{tfno_forward.8} parent=0 // pred_fallthru
    _
  // Predicated region
  $region6: #{tfno_forward.8} parent=0 // pred_check
    _
  $region7: #{tfno_forward.8} parent=0 // pred_check_branch
    %11 = sbr.rel (0) target = $region9
  $region8: #{tfno_forward.8} parent=0 // pred_region
    _
  $region9: #{tfno_forward.8} parent=0 // pred_fallthru
    _
  // Predicated region
  $region10: #{tfno_forward.8} parent=0 // pred_check
    _
  $region11: #{tfno_forward.8} parent=0 // pred_check_branch
    %13 = sbr.rel (0) target = $region13
  $region12: #{tfno_forward.8} parent=0 // pred_region
    _
  $region13: #{tfno_forward.8} parent=0 // pred_fallthru
    _
  %v14 = vld [vmem:[%s0] sm:$0xff]
  %v15 = vld [vmem:[%s0 + $0x8] sm:$0xff]
  %v16 = vld [vmem:[%s0 + $0x10] sm:$0xff]
  %v17 = vld [vmem:[%s0 + $0x18] sm:$0xff]
  %v18 = vld [vmem:[%s0 + $0x20] sm:$0xff]
  %v19 = vld [vmem:[%s0 + $0x28] sm:$0xff]
  %v20 = vld [vmem:[%s0 + $0x30] sm:$0xff]
  %v21 = vld [vmem:[%s0 + $0x38] sm:$0xff]
  %v22 = vld [vmem:[%s1] sm:$0xff]
  %v23 = vld [vmem:[%s1 + $0x8] sm:$0xff]
  %v24 = vld [vmem:[%s2] sm:$0x1]
  %v26 = vlaneseq
  %v27 = vshrl.u32 %v26, 7
  %v28 = vsub.s32 0, %v27
  %v29 = vrot.slane %v24, %v28
  %vm31 = vcmask 130048
  %v33 = vsel %vm31, %v14, 0
  %v36 = vsel %vm31, %v15, 0
  %v39 = vsel %vm31, %v16, 0
  %v42 = vsel %vm31, %v17, 0
  %v45 = vsel %vm31, %v18, 0
  %v48 = vsel %vm31, %v19, 0
  %v51 = vsel %vm31, %v20, 0
  %v54 = vsel %vm31, %v21, 0
  %56 = vmatprep.subr.mxu0 0.0
  %57 = vmatpush1.msra.mxu0 0.0
  %58 = vmatprep.subr.mxu0 0.0
  %59 = vmatpush1.msra.mxu0 0.0
  %60 = vmatprep.subr.mxu0 0.0
  %61 = vmatpush1.msra.mxu0 0.0
  %62 = vmatprep.subr.mxu0 0.0
  %63 = vmatpush1.msra.mxu0 0.0
  %64 = vmatprep.subr.mxu0 0.0
  %65 = vmatpush1.msra.mxu0 0.0
  %66 = vmatprep.subr.mxu0 0.0
  %67 = vmatpush1.msra.mxu0 0.0
  %68 = vmatprep.subr.mxu0 0.0
  %69 = vmatpush1.msra.mxu0 0.0
  %70 = vmatprep.subr.mxu0 0.0
  %71 = vmatpush1.msra.mxu0 0.0
  %72 = vmatprep.subr.mxu0 0.0
  %73 = vmatpush1.msra.mxu0 0.0
  %74 = vmatprep.subr.mxu0 0.0
  %75 = vmatpush1.msra.mxu0 0.0
  %76 = vmatprep.subr.mxu0 0.0
  %77 = vmatpush1.msra.mxu0 0.0
  %78 = vmatprep.subr.mxu0 0.0
  %79 = vmatpush1.msra.mxu0 0.0
  %80 = vmatprep.subr.mxu0 0.0
  %81 = vmatpush1.msra.mxu0 0.0
  %82 = vmatprep.subr.mxu0 0.0
  %83 = vmatpush1.msra.mxu0 0.0
  %84 = vmatprep.subr.mxu0 0.0
  %85 = vmatpush1.msra.mxu0 %v23
  %86 = vmatprep.subr.mxu0 0.0
  %87 = vmatpush1.msra.mxu0 %v22
  %88 = vmatprep.subr.mxu0 0.0
  %89 = vmatpush2.msra.mxu0 0.0
  %90 = vmatprep.subr.mxu0 0.0
  %91 = vmatpush2.msra.mxu0 0.0
  %92 = vmatprep.subr.mxu0 0.0
  %93 = vmatpush2.msra.mxu0 0.0
  %94 = vmatprep.subr.mxu0 0.0
  %95 = vmatpush2.msra.mxu0 0.0
  %96 = vmatprep.subr.mxu0 0.0
  %97 = vmatpush2.msra.mxu0 0.0
  %98 = vmatprep.subr.mxu0 0.0
  %99 = vmatpush2.msra.mxu0 0.0
  %100 = vmatprep.subr.mxu0 0.0
  %101 = vmatpush2.msra.mxu0 0.0
  %102 = vmatprep.subr.mxu0 0.0
  %103 = vmatpush2.msra.mxu0 0.0
  %104 = vmatprep.subr.mxu0 0.0
  %105 = vmatpush2.msra.mxu0 0.0
  %106 = vmatprep.subr.mxu0 0.0
  %107 = vmatpush2.msra.mxu0 0.0
  %108 = vmatprep.subr.mxu0 0.0
  %109 = vmatpush2.msra.mxu0 0.0
  %110 = vmatprep.subr.mxu0 0.0
  %111 = vmatpush2.msra.mxu0 0.0
  %112 = vmatprep.subr.mxu0 0.0
  %113 = vmatpush2.msra.mxu0 0.0
  %114 = vmatprep.subr.mxu0 0.0
  %115 = vmatpush2.msra.mxu0 0.0
  %116 = vmatprep.subr.mxu0 0.0
  %117 = vmatpush2.msra.mxu0 0.0
  %118 = vmatprep.subr.mxu0 0.0
  %119 = vmatpush2.msra.mxu0 0.0
  %120 = vmatprep.mubr.f32.mxu0 0.0
  %121 = vmatmul.mubr.f32.gmra.mxu0 %v33
  %v122 = vpop.f32.mrf.mxu0
  %v123 = vadd.f32 %v29, %v122
  %v124 = vpop.f32.mrf.mxu0
  %125 = vmatprep.mubr.f32.mxu0 0.0
  %126 = vmatmul.mubr.f32.gmra.mxu0 %v36
  %v127 = vpop.f32.mrf.mxu0
  %v128 = vadd.f32 %v29, %v127
  %v129 = vpop.f32.mrf.mxu0
  %130 = vmatprep.mubr.f32.mxu0 0.0
  %131 = vmatmul.mubr.f32.gmra.mxu0 %v39
  %v132 = vpop.f32.mrf.mxu0
  %v133 = vadd.f32 %v29, %v132
  %v134 = vpop.f32.mrf.mxu0
  %135 = vmatprep.mubr.f32.mxu0 0.0
  %136 = vmatmul.mubr.f32.gmra.mxu0 %v42
  %v137 = vpop.f32.mrf.mxu0
  %v138 = vadd.f32 %v29, %v137
  %v139 = vpop.f32.mrf.mxu0
  %140 = vmatprep.mubr.f32.mxu0 0.0
  %141 = vmatmul.mubr.f32.gmra.mxu0 %v45
  %v142 = vpop.f32.mrf.mxu0
  %v143 = vadd.f32 %v29, %v142
  %v144 = vpop.f32.mrf.mxu0
  %145 = vmatprep.mubr.f32.mxu0 0.0
  %146 = vmatmul.mubr.f32.gmra.mxu0 %v48
  %v147 = vpop.f32.mrf.mxu0
  %v148 = vadd.f32 %v29, %v147
  %v149 = vpop.f32.mrf.mxu0
  %150 = vmatprep.mubr.f32.mxu0 0.0
  %151 = vmatmul.mubr.f32.gmra.mxu0 %v51
  %v152 = vpop.f32.mrf.mxu0
  %v153 = vadd.f32 %v29, %v152
  %v154 = vpop.f32.mrf.mxu0
  %155 = vmatprep.mubr.f32.mxu0 0.0
  %156 = vmatmul.mubr.f32.gmra.mxu0 %v54
  %v157 = vpop.f32.mrf.mxu0
  %v158 = vadd.f32 %v29, %v157
  %v159 = vpop.f32.mrf.mxu0
  %160 = vdwg.mxu0
  %161 = vst [vmem:[%s3] sm:$0xff] %v123
  %162 = vst [vmem:[%s3 + $0x8] sm:$0xff] %v128
  %163 = vst [vmem:[%s3 + $0x10] sm:$0xff] %v133
  %164 = vst [vmem:[%s3 + $0x18] sm:$0xff] %v138
  %165 = vst [vmem:[%s3 + $0x20] sm:$0xff] %v143
  %166 = vst [vmem:[%s3 + $0x28] sm:$0xff] %v148
  %167 = vst [vmem:[%s3 + $0x30] sm:$0xff] %v153
  %168 = vst [vmem:[%s3 + $0x38] sm:$0xff] %v158
  // Predicated region
  $region14: #{tfno_forward.8} parent=0 // pred_check
    _
  $region15: #{tfno_forward.8} parent=0 // pred_check_branch
    %170 = sbr.rel (0) target = $region17
  $region16: #{tfno_forward.8} parent=0 // pred_region
    _
  $region17: #{tfno_forward.8} parent=0 // pred_fallthru
    _
  // Predicated region
  $region18: #{tfno_forward.8} parent=0 // pred_check
    _
  $region19: #{tfno_forward.8} parent=0 // pred_check_branch
    %172 = sbr.rel (0) target = $region21
  $region20: #{tfno_forward.8} parent=0 // pred_region
    _
  $region21: #{tfno_forward.8} parent=0 // pred_fallthru
    _

// kernel: tfno_forward.9
$region0: #{tfno_forward.9}
  #allocation0 [shape = 'u32[]', space=smem, size = 0x4, offset = 0x4, fixed_abs, tag = 'smem constant byte address 0x4 - core index']
  #allocation1 [shape = 'u32[144,128]{1,0:T(1,128)}', space=vmem, size = 0x12000, scoped, tag = 'internal scratch']
  %s0 = inlined_call_operand.vmem [shape: f32[2,8,256], index: 0, kind: input, shape index: {}]
  %s1 = inlined_call_operand.vmem [shape: f32[2,8,256], index: 1, kind: input, shape index: {}]
  %s2 = inlined_call_operand.vmem [shape: f32[8,8,256], index: 2, kind: input, shape index: {}]
  %s3 = inlined_call_operand.vmem [shape: f32[8,8,256], index: 3, kind: input, shape index: {}]
  %s4 = inlined_call_operand.vmem [shape: f32[2,8,256], index: 4, kind: output, shape index: {0}]
  %s5 = inlined_call_operand.vmem [shape: f32[2,8,256], index: 5, kind: output, shape index: {1}]
  %6 = xla_tuple %s4, %s5
  %s7 = sld [smem:[#allocation0]]
  $region34: #{tfno_forward.9} parent=0
    _
  %s9 = ssub.s32 1, %s7
  %s10 = scalar_select 0, %s9, %s7
  // Predicated region
  $region2: #{tfno_forward.9} parent=0 // pred_check
    _
  $region3: #{tfno_forward.9} parent=0 // pred_check_branch
    %12 = sbr.rel (0) target = $region5
  $region4: #{tfno_forward.9} parent=0 // pred_region
    _
  $region5: #{tfno_forward.9} parent=0 // pred_fallthru
    _
  // Predicated region
  $region6: #{tfno_forward.9} parent=0 // pred_check
    _
  $region7: #{tfno_forward.9} parent=0 // pred_check_branch
    %14 = sbr.rel (0) target = $region9
  $region8: #{tfno_forward.9} parent=0 // pred_region
    _
  $region9: #{tfno_forward.9} parent=0 // pred_fallthru
    _
  // Predicated region
  $region10: #{tfno_forward.9} parent=0 // pred_check
    _
  $region11: #{tfno_forward.9} parent=0 // pred_check_branch
    %16 = sbr.rel (0) target = $region13
  $region12: #{tfno_forward.9} parent=0 // pred_region
    _
  $region13: #{tfno_forward.9} parent=0 // pred_fallthru
    _
  // Predicated region
  $region14: #{tfno_forward.9} parent=0 // pred_check
    _
  $region15: #{tfno_forward.9} parent=0 // pred_check_branch
    %18 = sbr.rel (0) target = $region17
  $region16: #{tfno_forward.9} parent=0 // pred_region
    _
  $region17: #{tfno_forward.9} parent=0 // pred_fallthru
    _
  %v19 = vld [vmem:[%s0] sm:$0xff]
  %v20 = vld [vmem:[%s0 + $0x8] sm:$0xff]
  %v21 = vld [vmem:[%s0 + $0x10] sm:$0xff]
  %v22 = vld [vmem:[%s0 + $0x18] sm:$0xff]
  %v23 = vld [vmem:[%s1] sm:$0xff]
  %v24 = vld [vmem:[%s1 + $0x8] sm:$0xff]
  %v25 = vld [vmem:[%s1 + $0x10] sm:$0xff]
  %v26 = vld [vmem:[%s1 + $0x18] sm:$0xff]
  %v27 = vld [vmem:[%s2] sm:$0xff]
  %v28 = vld [vmem:[%s2 + $0x8] sm:$0xff]
  %v29 = vld [vmem:[%s3] sm:$0xff]
  %v30 = vld [vmem:[%s3 + $0x8] sm:$0xff]
  %v31 = vmul.f32 %v19, %v27
  %v32 = vmul.f32 %v20, %v28
  %v33 = vmul.f32 %v21, %v27
  %v34 = vmul.f32 %v22, %v28
  %v35 = vmul.f32 %v23, %v29
  %v36 = vmul.f32 %v24, %v30
  %v37 = vmul.f32 %v25, %v29
  %v38 = vmul.f32 %v26, %v30
  %v39 = vsub.f32 %v31, %v35
  %v40 = vsub.f32 %v32, %v36
  %v41 = vsub.f32 %v33, %v37
  %v42 = vsub.f32 %v34, %v38
  %v43 = vrot.slane %v39, 4
  %v44 = vadd.f32 %v39, %v43
  %v45 = vrot.slane %v44, 2
  %v46 = vadd.f32 %v44, %v45
  %v47 = vrot.slane %v46, 1
  %v48 = vadd.f32 %v46, %v47
  %v49 = vrot.slane %v40, 4
  %v50 = vadd.f32 %v40, %v49
  %v51 = vrot.slane %v50, 2
  %v52 = vadd.f32 %v50, %v51
  %v53 = vrot.slane %v52, 1
  %v54 = vadd.f32 %v52, %v53
  %v55 = vrot.slane %v41, 4
  %v56 = vadd.f32 %v41, %v55
  %v57 = vrot.slane %v56, 2
  %v58 = vadd.f32 %v56, %v57
  %v59 = vrot.slane %v58, 1
  %v60 = vadd.f32 %v58, %v59
  %v61 = vrot.slane %v42, 4
  %v62 = vadd.f32 %v42, %v61
  %v63 = vrot.slane %v62, 2
  %v64 = vadd.f32 %v62, %v63
  %v65 = vrot.slane %v64, 1
  %v66 = vadd.f32 %v64, %v65
  %v67 = vmul.f32 %v19, %v29
  %v68 = vmul.f32 %v20, %v30
  %v69 = vmul.f32 %v21, %v29
  %v70 = vmul.f32 %v22, %v30
  %v71 = vmul.f32 %v23, %v27
  %v72 = vmul.f32 %v24, %v28
  %v73 = vmul.f32 %v25, %v27
  %v74 = vmul.f32 %v26, %v28
  %v75 = vadd.f32 %v67, %v71
  %v76 = vadd.f32 %v68, %v72
  %v77 = vadd.f32 %v69, %v73
  %v78 = vadd.f32 %v70, %v74
  %v79 = vrot.slane %v75, 4
  %v80 = vadd.f32 %v75, %v79
  %v81 = vrot.slane %v80, 2
  %v82 = vadd.f32 %v80, %v81
  %v83 = vrot.slane %v82, 1
  %v84 = vadd.f32 %v82, %v83
  %v85 = vrot.slane %v76, 4
  %v86 = vadd.f32 %v76, %v85
  %v87 = vrot.slane %v86, 2
  %v88 = vadd.f32 %v86, %v87
  %v89 = vrot.slane %v88, 1
  %v90 = vadd.f32 %v88, %v89
  %v91 = vrot.slane %v77, 4
  %v92 = vadd.f32 %v77, %v91
  %v93 = vrot.slane %v92, 2
  %v94 = vadd.f32 %v92, %v93
  %v95 = vrot.slane %v94, 1
  %v96 = vadd.f32 %v94, %v95
  %v97 = vrot.slane %v78, 4
  %v98 = vadd.f32 %v78, %v97
  %v99 = vrot.slane %v98, 2
  %v100 = vadd.f32 %v98, %v99
  %v101 = vrot.slane %v100, 1
  %v102 = vadd.f32 %v100, %v101
  %s103 = scalar_lea.vmem %s2, 16
  %v104 = vld [vmem:[%s103] sm:$0xff]
  %v105 = vld [vmem:[%s103 + $0x8] sm:$0xff]
  %s106 = scalar_lea.vmem %s3, 16
  %v107 = vld [vmem:[%s106] sm:$0xff]
  %v108 = vld [vmem:[%s106 + $0x8] sm:$0xff]
  %v109 = vmul.f32 %v19, %v104
  %v110 = vmul.f32 %v20, %v105
  %v111 = vmul.f32 %v21, %v104
  %v112 = vmul.f32 %v22, %v105
  %v113 = vmul.f32 %v23, %v107
  %v114 = vmul.f32 %v24, %v108
  %v115 = vmul.f32 %v25, %v107
  %v116 = vmul.f32 %v26, %v108
  %v117 = vsub.f32 %v109, %v113
  %v118 = vsub.f32 %v110, %v114
  %v119 = vsub.f32 %v111, %v115
  %v120 = vsub.f32 %v112, %v116
  %v121 = vrot.slane %v117, 4
  %v122 = vadd.f32 %v117, %v121
  %v123 = vrot.slane %v122, 2
  %v124 = vadd.f32 %v122, %v123
  %v125 = vrot.slane %v124, 1
  %v126 = vadd.f32 %v124, %v125
  %v127 = vrot.slane %v118, 4
  %v128 = vadd.f32 %v118, %v127
  %v129 = vrot.slane %v128, 2
  %v130 = vadd.f32 %v128, %v129
  %v131 = vrot.slane %v130, 1
  %v132 = vadd.f32 %v130, %v131
  %v133 = vrot.slane %v119, 4
  %v134 = vadd.f32 %v119, %v133
  %v135 = vrot.slane %v134, 2
  %v136 = vadd.f32 %v134, %v135
  %v137 = vrot.slane %v136, 1
  %v138 = vadd.f32 %v136, %v137
  %v139 = vrot.slane %v120, 4
  %v140 = vadd.f32 %v120, %v139
  %v141 = vrot.slane %v140, 2
  %v142 = vadd.f32 %v140, %v141
  %v143 = vrot.slane %v142, 1
  %v144 = vadd.f32 %v142, %v143
  %v145 = vmul.f32 %v19, %v107
  %v146 = vmul.f32 %v20, %v108
  %v147 = vmul.f32 %v21, %v107
  %v148 = vmul.f32 %v22, %v108
  %v149 = vmul.f32 %v23, %v104
  %v150 = vmul.f32 %v24, %v105
  %v151 = vmul.f32 %v25, %v104
  %v152 = vmul.f32 %v26, %v105
  %v153 = vadd.f32 %v145, %v149
  %v154 = vadd.f32 %v146, %v150
  %v155 = vadd.f32 %v147, %v151
  %v156 = vadd.f32 %v148, %v152
  %v157 = vrot.slane %v153, 4
  %v158 = vadd.f32 %v153, %v157
  %v159 = vrot.slane %v158, 2
  %v160 = vadd.f32 %v158, %v159
  %v161 = vrot.slane %v160, 1
  %v162 = vadd.f32 %v160, %v161
  %v163 = vrot.slane %v154, 4
  %v164 = vadd.f32 %v154, %v163
  %v165 = vrot.slane %v164, 2
  %v166 = vadd.f32 %v164, %v165
  %v167 = vrot.slane %v166, 1
  %v168 = vadd.f32 %v166, %v167
  %v169 = vrot.slane %v155, 4
  %v170 = vadd.f32 %v155, %v169
  %v171 = vrot.slane %v170, 2
  %v172 = vadd.f32 %v170, %v171
  %v173 = vrot.slane %v172, 1
  %v174 = vadd.f32 %v172, %v173
  %v175 = vrot.slane %v156, 4
  %v176 = vadd.f32 %v156, %v175
  %v177 = vrot.slane %v176, 2
  %v178 = vadd.f32 %v176, %v177
  %v179 = vrot.slane %v178, 1
  %v180 = vadd.f32 %v178, %v179
  %s181 = scalar_lea.vmem %s2, 32
  %v182 = vld [vmem:[%s181] sm:$0xff]
  %v183 = vld [vmem:[%s181 + $0x8] sm:$0xff]
  %s184 = scalar_lea.vmem %s3, 32
  %v185 = vld [vmem:[%s184] sm:$0xff]
  %v186 = vld [vmem:[%s184 + $0x8] sm:$0xff]
  %v187 = vmul.f32 %v19, %v182
  %v188 = vmul.f32 %v20, %v183
  %v189 = vmul.f32 %v21, %v182
  %v190 = vmul.f32 %v22, %v183
  %v191 = vmul.f32 %v23, %v185
  %v192 = vmul.f32 %v24, %v186
  %v193 = vmul.f32 %v25, %v185
  %v194 = vmul.f32 %v26, %v186
  %v195 = vsub.f32 %v187, %v191
  %v196 = vsub.f32 %v188, %v192
  %v197 = vsub.f32 %v189, %v193
  %v198 = vsub.f32 %v190, %v194
  %v199 = vrot.slane %v195, 4
  %v200 = vadd.f32 %v195, %v199
  %v201 = vrot.slane %v200, 2
  %v202 = vadd.f32 %v200, %v201
  %v203 = vrot.slane %v202, 1
  %v204 = vadd.f32 %v202, %v203
  %v205 = vrot.slane %v196, 4
  %v206 = vadd.f32 %v196, %v205
  %v207 = vrot.slane %v206, 2
  %v208 = vadd.f32 %v206, %v207
  %v209 = vrot.slane %v208, 1
  %v210 = vadd.f32 %v208, %v209
  %v211 = vrot.slane %v197, 4
  %v212 = vadd.f32 %v197, %v211
  %v213 = vrot.slane %v212, 2
  %v214 = vadd.f32 %v212, %v213
  %v215 = vrot.slane %v214, 1
  %v216 = vadd.f32 %v214, %v215
  %v217 = vrot.slane %v198, 4
  %v218 = vadd.f32 %v198, %v217
  %v219 = vrot.slane %v218, 2
  %v220 = vadd.f32 %v218, %v219
  %v221 = vrot.slane %v220, 1
  %v222 = vadd.f32 %v220, %v221
  %v223 = vmul.f32 %v19, %v185
  %v224 = vmul.f32 %v20, %v186
  %v225 = vmul.f32 %v21, %v185
  %v226 = vmul.f32 %v22, %v186
  %v227 = vmul.f32 %v23, %v182
  %v228 = vmul.f32 %v24, %v183
  %v229 = vmul.f32 %v25, %v182
  %v230 = vmul.f32 %v26, %v183
  %v231 = vadd.f32 %v223, %v227
  %v232 = vadd.f32 %v224, %v228
  %v233 = vadd.f32 %v225, %v229
  %v234 = vadd.f32 %v226, %v230
  %v235 = vrot.slane %v231, 4
  %v236 = vadd.f32 %v231, %v235
  %v237 = vrot.slane %v236, 2
  %v238 = vadd.f32 %v236, %v237
  %v239 = vrot.slane %v238, 1
  %v240 = vadd.f32 %v238, %v239
  %v241 = vrot.slane %v232, 4
  %v242 = vadd.f32 %v232, %v241
  %v243 = vrot.slane %v242, 2
  %v244 = vadd.f32 %v242, %v243
  %v245 = vrot.slane %v244, 1
  %v246 = vadd.f32 %v244, %v245
  %v247 = vrot.slane %v233, 4
  %v248 = vadd.f32 %v233, %v247
  %v249 = vrot.slane %v248, 2
  %v250 = vadd.f32 %v248, %v249
  %v251 = vrot.slane %v250, 1
  %v252 = vadd.f32 %v250, %v251
  %v253 = vrot.slane %v234, 4
  %v254 = vadd.f32 %v234, %v253
  %v255 = vrot.slane %v254, 2
  %v256 = vadd.f32 %v254, %v255
  %v257 = vrot.slane %v256, 1
  %v258 = vadd.f32 %v256, %v257
  %s259 = scalar_lea.vmem %s2, 48
  %v260 = vld [vmem:[%s259] sm:$0xff]
  %v261 = vld [vmem:[%s259 + $0x8] sm:$0xff]
  %s262 = scalar_lea.vmem %s3, 48
  %v263 = vld [vmem:[%s262] sm:$0xff]
  %v264 = vld [vmem:[%s262 + $0x8] sm:$0xff]
  %v265 = vmul.f32 %v19, %v260
  %v266 = vmul.f32 %v20, %v261
  %v267 = vmul.f32 %v21, %v260
  %v268 = vmul.f32 %v22, %v261
  %v269 = vmul.f32 %v23, %v263
  %v270 = vmul.f32 %v24, %v264
  %v271 = vmul.f32 %v25, %v263
  %v272 = vmul.f32 %v26, %v264
  %v273 = vsub.f32 %v265, %v269
  %v274 = vsub.f32 %v266, %v270
  %v275 = vsub.f32 %v267, %v271
  %v276 = vsub.f32 %v268, %v272
  %v277 = vrot.slane %v273, 4
  %v278 = vadd.f32 %v273, %v277
  %v279 = vrot.slane %v278, 2
  %v280 = vadd.f32 %v278, %v279
  %v281 = vrot.slane %v280, 1
  %v282 = vadd.f32 %v280, %v281
  %v283 = vrot.slane %v274, 4
  %v284 = vadd.f32 %v274, %v283
  %v285 = vrot.slane %v284, 2
  %v286 = vadd.f32 %v284, %v285
  %v287 = vrot.slane %v286, 1
  %v288 = vadd.f32 %v286, %v287
  %v289 = vrot.slane %v275, 4
  %v290 = vadd.f32 %v275, %v289
  %v291 = vrot.slane %v290, 2
  %v292 = vadd.f32 %v290, %v291
  %v293 = vrot.slane %v292, 1
  %v294 = vadd.f32 %v292, %v293
  %v295 = vrot.slane %v276, 4
  %v296 = vadd.f32 %v276, %v295
  %v297 = vrot.slane %v296, 2
  %v298 = vadd.f32 %v296, %v297
  %v299 = vrot.slane %v298, 1
  %v300 = vadd.f32 %v298, %v299
  %v301 = vmul.f32 %v19, %v263
  %v302 = vmul.f32 %v20, %v264
  %v303 = vmul.f32 %v21, %v263
  %v304 = vmul.f32 %v22, %v264
  %v305 = vmul.f32 %v23, %v260
  %v306 = vmul.f32 %v24, %v261
  %v307 = vmul.f32 %v25, %v260
  %v308 = vmul.f32 %v26, %v261
  %v309 = vadd.f32 %v301, %v305
  %v310 = vadd.f32 %v302, %v306
  %v311 = vadd.f32 %v303, %v307
  %v312 = vadd.f32 %v304, %v308
  %v313 = vrot.slane %v309, 4
  %v314 = vadd.f32 %v309, %v313
  %v315 = vrot.slane %v314, 2
  %v316 = vadd.f32 %v314, %v315
  %v317 = vrot.slane %v316, 1
  %v318 = vadd.f32 %v316, %v317
  %v319 = vrot.slane %v310, 4
  %v320 = vadd.f32 %v310, %v319
  %v321 = vrot.slane %v320, 2
  %v322 = vadd.f32 %v320, %v321
  %v323 = vrot.slane %v322, 1
  %v324 = vadd.f32 %v322, %v323
  %v325 = vrot.slane %v311, 4
  %v326 = vadd.f32 %v311, %v325
  %v327 = vrot.slane %v326, 2
  %v328 = vadd.f32 %v326, %v327
  %v329 = vrot.slane %v328, 1
  %v330 = vadd.f32 %v328, %v329
  %v331 = vrot.slane %v312, 4
  %v332 = vadd.f32 %v312, %v331
  %v333 = vrot.slane %v332, 2
  %v334 = vadd.f32 %v332, %v333
  %v335 = vrot.slane %v334, 1
  %v336 = vadd.f32 %v334, %v335
  %s337 = scalar_lea.vmem %s2, 64
  %v338 = vld [vmem:[%s337] sm:$0xff]
  %v339 = vld [vmem:[%s337 + $0x8] sm:$0xff]
  %s340 = scalar_lea.vmem %s3, 64
  %v341 = vld [vmem:[%s340] sm:$0xff]
  %v342 = vld [vmem:[%s340 + $0x8] sm:$0xff]
  %v343 = vmul.f32 %v19, %v338
  %v344 = vmul.f32 %v20, %v339
  %v345 = vmul.f32 %v21, %v338
  %v346 = vmul.f32 %v22, %v339
  %v347 = vmul.f32 %v23, %v341
  %v348 = vmul.f32 %v24, %v342
  %v349 = vmul.f32 %v25, %v341
  %v350 = vmul.f32 %v26, %v342
  %v351 = vsub.f32 %v343, %v347
  %v352 = vsub.f32 %v344, %v348
  %v353 = vsub.f32 %v345, %v349
  %v354 = vsub.f32 %v346, %v350
  %v355 = vrot.slane %v351, 4
  %v356 = vadd.f32 %v351, %v355
  %v357 = vrot.slane %v356, 2
  %v358 = vadd.f32 %v356, %v357
  %v359 = vrot.slane %v358, 1
  %v360 = vadd.f32 %v358, %v359
  %v361 = vrot.slane %v352, 4
  %v362 = vadd.f32 %v352, %v361
  %v363 = vrot.slane %v362, 2
  %v364 = vadd.f32 %v362, %v363
  %v365 = vrot.slane %v364, 1
  %v366 = vadd.f32 %v364, %v365
  %v367 = vrot.slane %v353, 4
  %v368 = vadd.f32 %v353, %v367
  %v369 = vrot.slane %v368, 2
  %v370 = vadd.f32 %v368, %v369
  %v371 = vrot.slane %v370, 1
  %v372 = vadd.f32 %v370, %v371
  %v373 = vrot.slane %v354, 4
  %v374 = vadd.f32 %v354, %v373
  %v375 = vrot.slane %v374, 2
  %v376 = vadd.f32 %v374, %v375
  %v377 = vrot.slane %v376, 1
  %v378 = vadd.f32 %v376, %v377
  %v379 = vmul.f32 %v19, %v341
  %v380 = vmul.f32 %v20, %v342
  %v381 = vmul.f32 %v21, %v341
  %v382 = vmul.f32 %v22, %v342
  %v383 = vmul.f32 %v23, %v338
  %v384 = vmul.f32 %v24, %v339
  %v385 = vmul.f32 %v25, %v338
  %v386 = vmul.f32 %v26, %v339
  %v387 = vadd.f32 %v379, %v383
  %v388 = vadd.f32 %v380, %v384
  %v389 = vadd.f32 %v381, %v385
  %v390 = vadd.f32 %v382, %v386
  %v391 = vrot.slane %v387, 4
  %v392 = vadd.f32 %v387, %v391
  %v393 = vrot.slane %v392, 2
  %v394 = vadd.f32 %v392, %v393
  %v395 = vrot.slane %v394, 1
  %v396 = vadd.f32 %v394, %v395
  %v397 = vrot.slane %v388, 4
  %v398 = vadd.f32 %v388, %v397
  %v399 = vrot.slane %v398, 2
  %v400 = vadd.f32 %v398, %v399
  %v401 = vrot.slane %v400, 1
  %v402 = vadd.f32 %v400, %v401
  %v403 = vrot.slane %v389, 4
  %v404 = vadd.f32 %v389, %v403
  %v405 = vrot.slane %v404, 2
  %v406 = vadd.f32 %v404, %v405
  %v407 = vrot.slane %v406, 1
  %v408 = vadd.f32 %v406, %v407
  %v409 = vrot.slane %v390, 4
  %v410 = vadd.f32 %v390, %v409
  %v411 = vrot.slane %v410, 2
  %v412 = vadd.f32 %v410, %v411
  %v413 = vrot.slane %v412, 1
  %v414 = vadd.f32 %v412, %v413
  %s415 = scalar_lea.vmem %s2, 80
  %v416 = vld [vmem:[%s415] sm:$0xff]
  %v417 = vld [vmem:[%s415 + $0x8] sm:$0xff]
  %s418 = scalar_lea.vmem %s3, 80
  %v419 = vld [vmem:[%s418] sm:$0xff]
  %v420 = vld [vmem:[%s418 + $0x8] sm:$0xff]
  %v421 = vmul.f32 %v19, %v416
  %v422 = vmul.f32 %v20, %v417
  %v423 = vmul.f32 %v21, %v416
  %v424 = vmul.f32 %v22, %v417
  %v425 = vmul.f32 %v23, %v419
  %v426 = vmul.f32 %v24, %v420
  %v427 = vmul.f32 %v25, %v419
  %v428 = vmul.f32 %v26, %v420
  %v429 = vsub.f32 %v421, %v425
  %v430 = vsub.f32 %v422, %v426
  %v431 = vsub.f32 %v423, %v427
  %v432 = vsub.f32 %v424, %v428
  %v433 = vrot.slane %v429, 4
  %v434 = vadd.f32 %v429, %v433
  %v435 = vrot.slane %v434, 2
  %v436 = vadd.f32 %v434, %v435
  %v437 = vrot.slane %v436, 1
  %v438 = vadd.f32 %v436, %v437
  %v439 = vrot.slane %v430, 4
  %v440 = vadd.f32 %v430, %v439
  %v441 = vrot.slane %v440, 2
  %v442 = vadd.f32 %v440, %v441
  %v443 = vrot.slane %v442, 1
  %v444 = vadd.f32 %v442, %v443
  %v445 = vrot.slane %v431, 4
  %v446 = vadd.f32 %v431, %v445
  %v447 = vrot.slane %v446, 2
  %v448 = vadd.f32 %v446, %v447
  %v449 = vrot.slane %v448, 1
  %v450 = vadd.f32 %v448, %v449
  %v451 = vrot.slane %v432, 4
  %v452 = vadd.f32 %v432, %v451
  %v453 = vrot.slane %v452, 2
  %v454 = vadd.f32 %v452, %v453
  %v455 = vrot.slane %v454, 1
  %v456 = vadd.f32 %v454, %v455
  %v457 = vmul.f32 %v19, %v419
  %v458 = vmul.f32 %v20, %v420
  %v459 = vmul.f32 %v21, %v419
  %v460 = vmul.f32 %v22, %v420
  %v461 = vmul.f32 %v23, %v416
  %v462 = vmul.f32 %v24, %v417
  %v463 = vmul.f32 %v25, %v416
  %v464 = vmul.f32 %v26, %v417
  %v465 = vadd.f32 %v457, %v461
  %v466 = vadd.f32 %v458, %v462
  %v467 = vadd.f32 %v459, %v463
  %v468 = vadd.f32 %v460, %v464
  %v469 = vrot.slane %v465, 4
  %v470 = vadd.f32 %v465, %v469
  %v471 = vrot.slane %v470, 2
  %v472 = vadd.f32 %v470, %v471
  %v473 = vrot.slane %v472, 1
  %v474 = vadd.f32 %v472, %v473
  %v475 = vrot.slane %v466, 4
  %v476 = vadd.f32 %v466, %v475
  %v477 = vrot.slane %v476, 2
  %v478 = vadd.f32 %v476, %v477
  %v479 = vrot.slane %v478, 1
  %v480 = vadd.f32 %v478, %v479
  %v481 = vrot.slane %v467, 4
  %v482 = vadd.f32 %v467, %v481
  %v483 = vrot.slane %v482, 2
  %v484 = vadd.f32 %v482, %v483
  %v485 = vrot.slane %v484, 1
  %v486 = vadd.f32 %v484, %v485
  %v487 = vrot.slane %v468, 4
  %v488 = vadd.f32 %v468, %v487
  %v489 = vrot.slane %v488, 2
  %v490 = vadd.f32 %v488, %v489
  %v491 = vrot.slane %v490, 1
  %v492 = vadd.f32 %v490, %v491
  %s493 = scalar_lea.vmem %s2, 96
  %v494 = vld [vmem:[%s493] sm:$0xff]
  %v495 = vld [vmem:[%s493 + $0x8] sm:$0xff]
  %s496 = scalar_lea.vmem %s3, 96
  %v497 = vld [vmem:[%s496] sm:$0xff]
  %v498 = vld [vmem:[%s496 + $0x8] sm:$0xff]
  %v499 = vmul.f32 %v19, %v494
  %v500 = vmul.f32 %v20, %v495
  %v501 = vmul.f32 %v21, %v494
  %v502 = vmul.f32 %v22, %v495
  %v503 = vmul.f32 %v23, %v497
  %v504 = vmul.f32 %v24, %v498
  %v505 = vmul.f32 %v25, %v497
  %v506 = vmul.f32 %v26, %v498
  %v507 = vsub.f32 %v499, %v503
  %v508 = vsub.f32 %v500, %v504
  %v509 = vsub.f32 %v501, %v505
  %v510 = vsub.f32 %v502, %v506
  %v511 = vrot.slane %v507, 4
  %v512 = vadd.f32 %v507, %v511
  %v513 = vrot.slane %v512, 2
  %v514 = vadd.f32 %v512, %v513
  %v515 = vrot.slane %v514, 1
  %v516 = vadd.f32 %v514, %v515
  %v517 = vrot.slane %v508, 4
  %v518 = vadd.f32 %v508, %v517
  %v519 = vrot.slane %v518, 2
  %v520 = vadd.f32 %v518, %v519
  %v521 = vrot.slane %v520, 1
  %v522 = vadd.f32 %v520, %v521
  %v523 = vrot.slane %v509, 4
  %v524 = vadd.f32 %v509, %v523
  %v525 = vrot.slane %v524, 2
  %v526 = vadd.f32 %v524, %v525
  %v527 = vrot.slane %v526, 1
  %v528 = vadd.f32 %v526, %v527
  %v529 = vrot.slane %v510, 4
  %v530 = vadd.f32 %v510, %v529
  %v531 = vrot.slane %v530, 2
  %v532 = vadd.f32 %v530, %v531
  %v533 = vrot.slane %v532, 1
  %v534 = vadd.f32 %v532, %v533
  %v535 = vmul.f32 %v19, %v497
  %v536 = vmul.f32 %v20, %v498
  %v537 = vmul.f32 %v21, %v497
  %v538 = vmul.f32 %v22, %v498
  %v539 = vmul.f32 %v23, %v494
  %v540 = vmul.f32 %v24, %v495
  %v541 = vmul.f32 %v25, %v494
  %v542 = vmul.f32 %v26, %v495
  %v543 = vadd.f32 %v535, %v539
  %v544 = vadd.f32 %v536, %v540
  %v545 = vadd.f32 %v537, %v541
  %v546 = vadd.f32 %v538, %v542
  %v547 = vrot.slane %v543, 4
  %v548 = vadd.f32 %v543, %v547
  %v549 = vrot.slane %v548, 2
  %v550 = vadd.f32 %v548, %v549
  %v551 = vrot.slane %v550, 1
  %v552 = vadd.f32 %v550, %v551
  %v553 = vrot.slane %v544, 4
  %v554 = vadd.f32 %v544, %v553
  %v555 = vrot.slane %v554, 2
  %v556 = vadd.f32 %v554, %v555
  %v557 = vrot.slane %v556, 1
  %v558 = vadd.f32 %v556, %v557
  %v559 = vrot.slane %v545, 4
  %v560 = vadd.f32 %v545, %v559
  %v561 = vrot.slane %v560, 2
  %v562 = vadd.f32 %v560, %v561
  %v563 = vrot.slane %v562, 1
  %v564 = vadd.f32 %v562, %v563
  %v565 = vrot.slane %v546, 4
  %v566 = vadd.f32 %v546, %v565
  %v567 = vrot.slane %v566, 2
  %v568 = vadd.f32 %v566, %v567
  %v569 = vrot.slane %v568, 1
  %v570 = vadd.f32 %v568, %v569
  %s571 = scalar_lea.vmem %s2, 112
  %v572 = vld [vmem:[%s571] sm:$0xff]
  %v573 = vld [vmem:[%s571 + $0x8] sm:$0xff]
  %s574 = scalar_lea.vmem %s3, 112
  %v575 = vld [vmem:[%s574] sm:$0xff]
  %v576 = vld [vmem:[%s574 + $0x8] sm:$0xff]
  %v577 = vmul.f32 %v19, %v572
  %v578 = vmul.f32 %v20, %v573
  %v579 = vmul.f32 %v21, %v572
  %v580 = vmul.f32 %v22, %v573
  %v581 = vmul.f32 %v23, %v575
  %v582 = vmul.f32 %v24, %v576
  %v583 = vmul.f32 %v25, %v575
  %v584 = vmul.f32 %v26, %v576
  %v585 = vsub.f32 %v577, %v581
  %v586 = vsub.f32 %v578, %v582
  %v587 = vsub.f32 %v579, %v583
  %v588 = vsub.f32 %v580, %v584
  %v589 = vrot.slane %v585, 4
  %v590 = vadd.f32 %v585, %v589
  %v591 = vrot.slane %v590, 2
  %v592 = vadd.f32 %v590, %v591
  %v593 = vrot.slane %v592, 1
  %v594 = vadd.f32 %v592, %v593
  %v595 = vrot.slane %v586, 4
  %v596 = vadd.f32 %v586, %v595
  %v597 = vrot.slane %v596, 2
  %v598 = vadd.f32 %v596, %v597
  %v599 = vrot.slane %v598, 1
  %v600 = vadd.f32 %v598, %v599
  %v601 = vrot.slane %v587, 4
  %v602 = vadd.f32 %v587, %v601
  %v603 = vrot.slane %v602, 2
  %v604 = vadd.f32 %v602, %v603
  %v605 = vrot.slane %v604, 1
  %v606 = vadd.f32 %v604, %v605
  %v607 = vrot.slane %v588, 4
  %v608 = vadd.f32 %v588, %v607
  %v609 = vrot.slane %v608, 2
  %v610 = vadd.f32 %v608, %v609
  %v611 = vrot.slane %v610, 1
  %v612 = vadd.f32 %v610, %v611
  %v613 = vmul.f32 %v19, %v575
  %v614 = vmul.f32 %v20, %v576
  %v615 = vmul.f32 %v21, %v575
  %v616 = vmul.f32 %v22, %v576
  %v617 = vmul.f32 %v23, %v572
  %v618 = vmul.f32 %v24, %v573
  %v619 = vmul.f32 %v25, %v572
  %v620 = vmul.f32 %v26, %v573
  %v621 = vadd.f32 %v613, %v617
  %v622 = vadd.f32 %v614, %v618
  %v623 = vadd.f32 %v615, %v619
  %v624 = vadd.f32 %v616, %v620
  %v625 = vrot.slane %v621, 4
  %v626 = vadd.f32 %v621, %v625
  %v627 = vrot.slane %v626, 2
  %v628 = vadd.f32 %v626, %v627
  %v629 = vrot.slane %v628, 1
  %v630 = vadd.f32 %v628, %v629
  %v631 = vrot.slane %v622, 4
  %v632 = vadd.f32 %v622, %v631
  %v633 = vrot.slane %v632, 2
  %v634 = vadd.f32 %v632, %v633
  %v635 = vrot.slane %v634, 1
  %v636 = vadd.f32 %v634, %v635
  %v637 = vrot.slane %v623, 4
  %v638 = vadd.f32 %v623, %v637
  %v639 = vrot.slane %v638, 2
  %v640 = vadd.f32 %v638, %v639
  %v641 = vrot.slane %v640, 1
  %v642 = vadd.f32 %v640, %v641
  %v643 = vrot.slane %v624, 4
  %v644 = vadd.f32 %v624, %v643
  %v645 = vrot.slane %v644, 2
  %v646 = vadd.f32 %v644, %v645
  %v647 = vrot.slane %v646, 1
  %v648 = vadd.f32 %v646, %v647
  %vm649 = vcmask 1040384
  %v650 = vsel %vm649, %v48, %v126
  %v651 = vsel %vm649, %v54, %v132
  %v652 = vsel %vm649, %v60, %v138
  %v653 = vsel %vm649, %v66, %v144
  %vm654 = vcmask 1041408
  %v655 = vsel %vm654, %v650, %v204
  %v656 = vsel %vm654, %v651, %v210
  %v657 = vsel %vm654, %v652, %v216
  %v658 = vsel %vm654, %v653, %v222
  %vm659 = vcmask 1042432
  %v660 = vsel %vm659, %v655, %v282
  %v661 = vsel %vm659, %v656, %v288
  %v662 = vsel %vm659, %v657, %v294
  %v663 = vsel %vm659, %v658, %v300
  %vm664 = vcmask 1043456
  %v665 = vsel %vm664, %v660, %v360
  %v666 = vsel %vm664, %v661, %v366
  %v667 = vsel %vm664, %v662, %v372
  %v668 = vsel %vm664, %v663, %v378
  %vm669 = vcmask 1044480
  %v670 = vsel %vm669, %v665, %v438
  %v671 = vsel %vm669, %v666, %v444
  %v672 = vsel %vm669, %v667, %v450
  %v673 = vsel %vm669, %v668, %v456
  %vm674 = vcmask 1045504
  %v675 = vsel %vm674, %v670, %v516
  %v676 = vsel %vm674, %v671, %v522
  %v677 = vsel %vm674, %v672, %v528
  %v678 = vsel %vm674, %v673, %v534
  %vm679 = vcmask 1046528
  %v680 = vsel %vm679, %v675, %v594
  %v681 = vsel %vm679, %v676, %v600
  %v682 = vsel %vm679, %v677, %v606
  %v683 = vsel %vm679, %v678, %v612
  %684 = vst [vmem:[%s4] sm:$0xff] %v680
  %685 = vst [vmem:[%s4 + $0x8] sm:$0xff] %v681
  %686 = vst [vmem:[%s4 + $0x10] sm:$0xff] %v682
  %687 = vst [vmem:[%s4 + $0x18] sm:$0xff] %v683
  %v688 = vsel %vm649, %v84, %v162
  %v689 = vsel %vm649, %v90, %v168
  %v690 = vsel %vm649, %v96, %v174
  %v691 = vsel %vm649, %v102, %v180
  %v692 = vsel %vm654, %v688, %v240
  %v693 = vsel %vm654, %v689, %v246
  %v694 = vsel %vm654, %v690, %v252
  %v695 = vsel %vm654, %v691, %v258
  %v696 = vsel %vm659, %v692, %v318
  %v697 = vsel %vm659, %v693, %v324
  %v698 = vsel %vm659, %v694, %v330
  %v699 = vsel %vm659, %v695, %v336
  %v700 = vsel %vm664, %v696, %v396
  %v701 = vsel %vm664, %v697, %v402
  %v702 = vsel %vm664, %v698, %v408
  %v703 = vsel %vm664, %v699, %v414
  %v704 = vsel %vm669, %v700, %v474
  %v705 = vsel %vm669, %v701, %v480
  %v706 = vsel %vm669, %v702, %v486
  %v707 = vsel %vm669, %v703, %v492
  %v708 = vsel %vm674, %v704, %v552
  %v709 = vsel %vm674, %v705, %v558
  %v710 = vsel %vm674, %v706, %v564
  %v711 = vsel %vm674, %v707, %v570
  %v712 = vsel %vm679, %v708, %v630
  %v713 = vsel %vm679, %v709, %v636
  %v714 = vsel %vm679, %v710, %v642
  %v715 = vsel %vm679, %v711, %v648
  %716 = vst [vmem:[%s5] sm:$0xff] %v712
  %717 = vst [vmem:[%s5 + $0x8] sm:$0xff] %v713
  %718 = vst [vmem:[%s5 + $0x10] sm:$0xff] %v714
  %719 = vst [vmem:[%s5 + $0x18] sm:$0xff] %v715
  // Predicated region
  $region18: #{tfno_forward.9} parent=0 // pred_check
    _
  $region19: #{tfno_forward.9} parent=0 // pred_check_branch
    %721 = sbr.rel (0) target = $region21
  $region20: #{tfno_forward.9} parent=0 // pred_region
    _
  $region21: #{tfno_forward.9} parent=0 // pred_fallthru
    _
  // Predicated region
  $region22: #{tfno_forward.9} parent=0 // pred_check
    _
  $region23: #{tfno_forward.9} parent=0 // pred_check_branch
    %723 = sbr.rel (0) target = $region25
  $region24: #{tfno_forward.9} parent=0 // pred_region
    _
  $region25: #{tfno_forward.9} parent=0 // pred_fallthru
    _
  // Predicated region
  $region26: #{tfno_forward.9} parent=0 // pred_check
    _
  $region27: #{tfno_forward.9} parent=0 // pred_check_branch
    %725 = sbr.rel (0) target = $region29
  $region28: #{tfno_forward.9} parent=0 // pred_region
    _
  $region29: #{tfno_forward.9} parent=0 // pred_fallthru
    _
  // Predicated region
  $region30: #{tfno_forward.9} parent=0 // pred_check
    _
  $region31: #{tfno_forward.9} parent=0 // pred_check_branch
    %727 = sbr.rel (0) target = $region33
  $region32: #{tfno_forward.9} parent=0 // pred_region
    _
  $region33: #{tfno_forward.9} parent=0 // pred_fallthru
    _

// kernel: reverse.4
$region0: #{reverse.4}
  #allocation0 [shape = 's32[1]{0}', space=sflag, size = 0x4, scoped, tag = 'scoped memory for reverse.4']
  %s0 = inlined_call_operand.vmem [shape: f32[2,12,12,8,5], index: 0, kind: input, shape index: {}]
  %s1 = inlined_call_operand.vmem [shape: f32[2,12,12,8,5], index: 1, kind: output, shape index: {}]
  %s2 = scalar_lea.vmem %s0, 512
  %v3 = vld [vmem:[%s2] sm:$0xff]
  %4 = vst [vmem:[%s1] sm:$0xff] %v3
  %s5 = scalar_lea.vmem %s0, 1152
  %v6 = vld [vmem:[%s5] sm:$0xff]
  %s7 = scalar_lea.vmem %s1, 640
  %8 = vst [vmem:[%s7] sm:$0xff] %v6
  %s9 = scalar_lea.vmem %s0, 384
  %v10 = vld [vmem:[%s9] sm:$0xff]
  %s11 = scalar_lea.vmem %s1, 128
  %12 = vst [vmem:[%s11] sm:$0xff] %v10
  %s13 = scalar_lea.vmem %s0, 1024
  %v14 = vld [vmem:[%s13] sm:$0xff]
  %s15 = scalar_lea.vmem %s1, 768
  %16 = vst [vmem:[%s15] sm:$0xff] %v14
  %s17 = scalar_lea.vmem %s0, 256
  %v18 = vld [vmem:[%s17] sm:$0xff]
  %s19 = scalar_lea.vmem %s1, 256
  %20 = vst [vmem:[%s19] sm:$0xff] %v18
  %s21 = scalar_lea.vmem %s0, 896
  %v22 = vld [vmem:[%s21] sm:$0xff]
  %s23 = scalar_lea.vmem %s1, 896
  %24 = vst [vmem:[%s23] sm:$0xff] %v22
  %s25 = scalar_lea.vmem %s0, 128
  %v26 = vld [vmem:[%s25] sm:$0xff]
  %s27 = scalar_lea.vmem %s1, 384
  %28 = vst [vmem:[%s27] sm:$0xff] %v26
  %s29 = scalar_lea.vmem %s0, 768
  %v30 = vld [vmem:[%s29] sm:$0xff]
  %s31 = scalar_lea.vmem %s1, 1024
  %32 = vst [vmem:[%s31] sm:$0xff] %v30
  %v33 = vld [vmem:[%s0] sm:$0xff]
  %s34 = scalar_lea.vmem %s1, 512
  %35 = vst [vmem:[%s34] sm:$0xff] %v33
  %s36 = scalar_lea.vmem %s0, 640
  %v37 = vld [vmem:[%s36] sm:$0xff]
  %s38 = scalar_lea.vmem %s1, 1152
  %39 = vst [vmem:[%s38] sm:$0xff] %v37
  %s40 = scalar_lea.vmem %s0, 528
  %v41 = vld [vmem:[%s40] sm:$0xff]
  %s42 = scalar_lea.vmem %s1, 16
  %43 = vst [vmem:[%s42] sm:$0xff] %v41
  %s44 = scalar_lea.vmem %s0, 1168
  %v45 = vld [vmem:[%s44] sm:$0xff]
  %s46 = scalar_lea.vmem %s1, 656
  %47 = vst [vmem:[%s46] sm:$0xff] %v45
  %s48 = scalar_lea.vmem %s0, 400
  %v49 = vld [vmem:[%s48] sm:$0xff]
  %s50 = scalar_lea.vmem %s1, 144
  %51 = vst [vmem:[%s50] sm:$0xff] %v49
  %s52 = scalar_lea.vmem %s0, 1040
  %v53 = vld [vmem:[%s52] sm:$0xff]
  %s54 = scalar_lea.vmem %s1, 784
  %55 = vst [vmem:[%s54] sm:$0xff] %v53
  %s56 = scalar_lea.vmem %s0, 272
  %v57 = vld [vmem:[%s56] sm:$0xff]
  %s58 = scalar_lea.vmem %s1, 272
  %59 = vst [vmem:[%s58] sm:$0xff] %v57
  %s60 = scalar_lea.vmem %s0, 912
  %v61 = vld [vmem:[%s60] sm:$0xff]
  %s62 = scalar_lea.vmem %s1, 912
  %63 = vst [vmem:[%s62] sm:$0xff] %v61
  %s64 = scalar_lea.vmem %s0, 144
  %v65 = vld [vmem:[%s64] sm:$0xff]
  %s66 = scalar_lea.vmem %s1, 400
  %67 = vst [vmem:[%s66] sm:$0xff] %v65
  %s68 = scalar_lea.vmem %s0, 784
  %v69 = vld [vmem:[%s68] sm:$0xff]
  %s70 = scalar_lea.vmem %s1, 1040
  %71 = vst [vmem:[%s70] sm:$0xff] %v69
  %s72 = scalar_lea.vmem %s0, 16
  %v73 = vld [vmem:[%s72] sm:$0xff]
  %s74 = scalar_lea.vmem %s1, 528
  %75 = vst [vmem:[%s74] sm:$0xff] %v73
  %s76 = scalar_lea.vmem %s0, 656
  %v77 = vld [vmem:[%s76] sm:$0xff]
  %s78 = scalar_lea.vmem %s1, 1168
  %79 = vst [vmem:[%s78] sm:$0xff] %v77
  %s80 = scalar_lea.vmem %s0, 544
  %v81 = vld [vmem:[%s80] sm:$0xff]
  %s82 = scalar_lea.vmem %s1, 32
  %83 = vst [vmem:[%s82] sm:$0xff] %v81
  %s84 = scalar_lea.vmem %s0, 1184
  %v85 = vld [vmem:[%s84] sm:$0xff]
  %s86 = scalar_lea.vmem %s1, 672
  %87 = vst [vmem:[%s86] sm:$0xff] %v85
  %s88 = scalar_lea.vmem %s0, 416
  %v89 = vld [vmem:[%s88] sm:$0xff]
  %s90 = scalar_lea.vmem %s1, 160
  %91 = vst [vmem:[%s90] sm:$0xff] %v89
  %s92 = scalar_lea.vmem %s0, 1056
  %v93 = vld [vmem:[%s92] sm:$0xff]
  %s94 = scalar_lea.vmem %s1, 800
  %95 = vst [vmem:[%s94] sm:$0xff] %v93
  %s96 = scalar_lea.vmem %s0, 288
  %v97 = vld [vmem:[%s96] sm:$0xff]
  %s98 = scalar_lea.vmem %s1, 288
  %99 = vst [vmem:[%s98] sm:$0xff] %v97
  %s100 = scalar_lea.vmem %s0, 928
  %v101 = vld [vmem:[%s100] sm:$0xff]
  %s102 = scalar_lea.vmem %s1, 928
  %103 = vst [vmem:[%s102] sm:$0xff] %v101
  %s104 = scalar_lea.vmem %s0, 160
  %v105 = vld [vmem:[%s104] sm:$0xff]
  %s106 = scalar_lea.vmem %s1, 416
  %107 = vst [vmem:[%s106] sm:$0xff] %v105
  %s108 = scalar_lea.vmem %s0, 800
  %v109 = vld [vmem:[%s108] sm:$0xff]
  %s110 = scalar_lea.vmem %s1, 1056
  %111 = vst [vmem:[%s110] sm:$0xff] %v109
  %s112 = scalar_lea.vmem %s0, 32
  %v113 = vld [vmem:[%s112] sm:$0xff]
  %s114 = scalar_lea.vmem %s1, 544
  %115 = vst [vmem:[%s114] sm:$0xff] %v113
  %s116 = scalar_lea.vmem %s0, 672
  %v117 = vld [vmem:[%s116] sm:$0xff]
  %s118 = scalar_lea.vmem %s1, 1184
  %119 = vst [vmem:[%s118] sm:$0xff] %v117
  %s120 = scalar_lea.vmem %s0, 560
  %v121 = vld [vmem:[%s120] sm:$0xff]
  %s122 = scalar_lea.vmem %s1, 48
  %123 = vst [vmem:[%s122] sm:$0xff] %v121
  %s124 = scalar_lea.vmem %s0, 1200
  %v125 = vld [vmem:[%s124] sm:$0xff]
  %s126 = scalar_lea.vmem %s1, 688
  %127 = vst [vmem:[%s126] sm:$0xff] %v125
  %s128 = scalar_lea.vmem %s0, 432
  %v129 = vld [vmem:[%s128] sm:$0xff]
  %s130 = scalar_lea.vmem %s1, 176
  %131 = vst [vmem:[%s130] sm:$0xff] %v129
  %s132 = scalar_lea.vmem %s0, 1072
  %v133 = vld [vmem:[%s132] sm:$0xff]
  %s134 = scalar_lea.vmem %s1, 816
  %135 = vst [vmem:[%s134] sm:$0xff] %v133
  %s136 = scalar_lea.vmem %s0, 304
  %v137 = vld [vmem:[%s136] sm:$0xff]
  %s138 = scalar_lea.vmem %s1, 304
  %139 = vst [vmem:[%s138] sm:$0xff] %v137
  %s140 = scalar_lea.vmem %s0, 944
  %v141 = vld [vmem:[%s140] sm:$0xff]
  %s142 = scalar_lea.vmem %s1, 944
  %143 = vst [vmem:[%s142] sm:$0xff] %v141
  %s144 = scalar_lea.vmem %s0, 176
  %v145 = vld [vmem:[%s144] sm:$0xff]
  %s146 = scalar_lea.vmem %s1, 432
  %147 = vst [vmem:[%s146] sm:$0xff] %v145
  %s148 = scalar_lea.vmem %s0, 816
  %v149 = vld [vmem:[%s148] sm:$0xff]
  %s150 = scalar_lea.vmem %s1, 1072
  %151 = vst [vmem:[%s150] sm:$0xff] %v149
  %s152 = scalar_lea.vmem %s0, 48
  %v153 = vld [vmem:[%s152] sm:$0xff]
  %s154 = scalar_lea.vmem %s1, 560
  %155 = vst [vmem:[%s154] sm:$0xff] %v153
  %s156 = scalar_lea.vmem %s0, 688
  %v157 = vld [vmem:[%s156] sm:$0xff]
  %s158 = scalar_lea.vmem %s1, 1200
  %159 = vst [vmem:[%s158] sm:$0xff] %v157
  %s160 = scalar_lea.vmem %s0, 576
  %v161 = vld [vmem:[%s160] sm:$0xff]
  %s162 = scalar_lea.vmem %s1, 64
  %163 = vst [vmem:[%s162] sm:$0xff] %v161
  %s164 = scalar_lea.vmem %s0, 1216
  %v165 = vld [vmem:[%s164] sm:$0xff]
  %s166 = scalar_lea.vmem %s1, 704
  %167 = vst [vmem:[%s166] sm:$0xff] %v165
  %s168 = scalar_lea.vmem %s0, 448
  %v169 = vld [vmem:[%s168] sm:$0xff]
  %s170 = scalar_lea.vmem %s1, 192
  %171 = vst [vmem:[%s170] sm:$0xff] %v169
  %s172 = scalar_lea.vmem %s0, 1088
  %v173 = vld [vmem:[%s172] sm:$0xff]
  %s174 = scalar_lea.vmem %s1, 832
  %175 = vst [vmem:[%s174] sm:$0xff] %v173
  %s176 = scalar_lea.vmem %s0, 320
  %v177 = vld [vmem:[%s176] sm:$0xff]
  %s178 = scalar_lea.vmem %s1, 320
  %179 = vst [vmem:[%s178] sm:$0xff] %v177
  %s180 = scalar_lea.vmem %s0, 960
  %v181 = vld [vmem:[%s180] sm:$0xff]
  %s182 = scalar_lea.vmem %s1, 960
  %183 = vst [vmem:[%s182] sm:$0xff] %v181
  %s184 = scalar_lea.vmem %s0, 192
  %v185 = vld [vmem:[%s184] sm:$0xff]
  %s186 = scalar_lea.vmem %s1, 448
  %187 = vst [vmem:[%s186] sm:$0xff] %v185
  %s188 = scalar_lea.vmem %s0, 832
  %v189 = vld [vmem:[%s188] sm:$0xff]
  %s190 = scalar_lea.vmem %s1, 1088
  %191 = vst [vmem:[%s190] sm:$0xff] %v189
  %s192 = scalar_lea.vmem %s0, 64
  %v193 = vld [vmem:[%s192] sm:$0xff]
  %s194 = scalar_lea.vmem %s1, 576
  %195 = vst [vmem:[%s194] sm:$0xff] %v193
  %s196 = scalar_lea.vmem %s0, 704
  %v197 = vld [vmem:[%s196] sm:$0xff]
  %s198 = scalar_lea.vmem %s1, 1216
  %199 = vst [vmem:[%s198] sm:$0xff] %v197
  %s200 = scalar_lea.vmem %s0, 592
  %v201 = vld [vmem:[%s200] sm:$0xff]
  %s202 = scalar_lea.vmem %s1, 80
  %203 = vst [vmem:[%s202] sm:$0xff] %v201
  %s204 = scalar_lea.vmem %s0, 1232
  %v205 = vld [vmem:[%s204] sm:$0xff]
  %s206 = scalar_lea.vmem %s1, 720
  %207 = vst [vmem:[%s206] sm:$0xff] %v205
  %s208 = scalar_lea.vmem %s0, 464
  %v209 = vld [vmem:[%s208] sm:$0xff]
  %s210 = scalar_lea.vmem %s1, 208
  %211 = vst [vmem:[%s210] sm:$0xff] %v209
  %s212 = scalar_lea.vmem %s0, 1104
  %v213 = vld [vmem:[%s212] sm:$0xff]
  %s214 = scalar_lea.vmem %s1, 848
  %215 = vst [vmem:[%s214] sm:$0xff] %v213
  %s216 = scalar_lea.vmem %s0, 336
  %v217 = vld [vmem:[%s216] sm:$0xff]
  %s218 = scalar_lea.vmem %s1, 336
  %219 = vst [vmem:[%s218] sm:$0xff] %v217
  %s220 = scalar_lea.vmem %s0, 976
  %v221 = vld [vmem:[%s220] sm:$0xff]
  %s222 = scalar_lea.vmem %s1, 976
  %223 = vst [vmem:[%s222] sm:$0xff] %v221
  %s224 = scalar_lea.vmem %s0, 208
  %v225 = vld [vmem:[%s224] sm:$0xff]
  %s226 = scalar_lea.vmem %s1, 464
  %227 = vst [vmem:[%s226] sm:$0xff] %v225
  %s228 = scalar_lea.vmem %s0, 848
  %v229 = vld [vmem:[%s228] sm:$0xff]
  %s230 = scalar_lea.vmem %s1, 1104
  %231 = vst [vmem:[%s230] sm:$0xff] %v229
  %s232 = scalar_lea.vmem %s0, 80
  %v233 = vld [vmem:[%s232] sm:$0xff]
  %s234 = scalar_lea.vmem %s1, 592
  %235 = vst [vmem:[%s234] sm:$0xff] %v233
  %s236 = scalar_lea.vmem %s0, 720
  %v237 = vld [vmem:[%s236] sm:$0xff]
  %s238 = scalar_lea.vmem %s1, 1232
  %239 = vst [vmem:[%s238] sm:$0xff] %v237
  %s240 = scalar_lea.vmem %s0, 608
  %v241 = vld [vmem:[%s240] sm:$0xff]
  %s242 = scalar_lea.vmem %s1, 96
  %243 = vst [vmem:[%s242] sm:$0xff] %v241
  %s244 = scalar_lea.vmem %s0, 1248
  %v245 = vld [vmem:[%s244] sm:$0xff]
  %s246 = scalar_lea.vmem %s1, 736
  %247 = vst [vmem:[%s246] sm:$0xff] %v245
  %s248 = scalar_lea.vmem %s0, 480
  %v249 = vld [vmem:[%s248] sm:$0xff]
  %s250 = scalar_lea.vmem %s1, 224
  %251 = vst [vmem:[%s250] sm:$0xff] %v249
  %s252 = scalar_lea.vmem %s0, 1120
  %v253 = vld [vmem:[%s252] sm:$0xff]
  %s254 = scalar_lea.vmem %s1, 864
  %255 = vst [vmem:[%s254] sm:$0xff] %v253
  %s256 = scalar_lea.vmem %s0, 352
  %v257 = vld [vmem:[%s256] sm:$0xff]
  %s258 = scalar_lea.vmem %s1, 352
  %259 = vst [vmem:[%s258] sm:$0xff] %v257
  %s260 = scalar_lea.vmem %s0, 992
  %v261 = vld [vmem:[%s260] sm:$0xff]
  %s262 = scalar_lea.vmem %s1, 992
  %263 = vst [vmem:[%s262] sm:$0xff] %v261
  %s264 = scalar_lea.vmem %s0, 224
  %v265 = vld [vmem:[%s264] sm:$0xff]
  %s266 = scalar_lea.vmem %s1, 480
  %267 = vst [vmem:[%s266] sm:$0xff] %v265
  %s268 = scalar_lea.vmem %s0, 864
  %v269 = vld [vmem:[%s268] sm:$0xff]
  %s270 = scalar_lea.vmem %s1, 1120
  %271 = vst [vmem:[%s270] sm:$0xff] %v269
  %s272 = scalar_lea.vmem %s0, 96
  %v273 = vld [vmem:[%s272] sm:$0xff]
  %s274 = scalar_lea.vmem %s1, 608
  %275 = vst [vmem:[%s274] sm:$0xff] %v273
  %s276 = scalar_lea.vmem %s0, 736
  %v277 = vld [vmem:[%s276] sm:$0xff]
  %s278 = scalar_lea.vmem %s1, 1248
  %279 = vst [vmem:[%s278] sm:$0xff] %v277
  %s280 = scalar_lea.vmem %s0, 624
  %v281 = vld [vmem:[%s280] sm:$0xff]
  %s282 = scalar_lea.vmem %s1, 112
  %283 = vst [vmem:[%s282] sm:$0xff] %v281
  %s284 = scalar_lea.vmem %s0, 1264
  %v285 = vld [vmem:[%s284] sm:$0xff]
  %s286 = scalar_lea.vmem %s1, 752
  %287 = vst [vmem:[%s286] sm:$0xff] %v285
  %s288 = scalar_lea.vmem %s0, 496
  %v289 = vld [vmem:[%s288] sm:$0xff]
  %s290 = scalar_lea.vmem %s1, 240
  %291 = vst [vmem:[%s290] sm:$0xff] %v289
  %s292 = scalar_lea.vmem %s0, 1136
  %v293 = vld [vmem:[%s292] sm:$0xff]
  %s294 = scalar_lea.vmem %s1, 880
  %295 = vst [vmem:[%s294] sm:$0xff] %v293
  %s296 = scalar_lea.vmem %s0, 368
  %v297 = vld [vmem:[%s296] sm:$0xff]
  %s298 = scalar_lea.vmem %s1, 368
  %299 = vst [vmem:[%s298] sm:$0xff] %v297
  %s300 = scalar_lea.vmem %s0, 1008
  %v301 = vld [vmem:[%s300] sm:$0xff]
  %s302 = scalar_lea.vmem %s1, 1008
  %303 = vst [vmem:[%s302] sm:$0xff] %v301
  %s304 = scalar_lea.vmem %s0, 240
  %v305 = vld [vmem:[%s304] sm:$0xff]
  %s306 = scalar_lea.vmem %s1, 496
  %307 = vst [vmem:[%s306] sm:$0xff] %v305
  %s308 = scalar_lea.vmem %s0, 880
  %v309 = vld [vmem:[%s308] sm:$0xff]
  %s310 = scalar_lea.vmem %s1, 1136
  %311 = vst [vmem:[%s310] sm:$0xff] %v309
  %s312 = scalar_lea.vmem %s0, 112
  %v313 = vld [vmem:[%s312] sm:$0xff]
  %s314 = scalar_lea.vmem %s1, 624
  %315 = vst [vmem:[%s314] sm:$0xff] %v313
  %s316 = scalar_lea.vmem %s0, 752
  %v317 = vld [vmem:[%s316] sm:$0xff]
  %s318 = scalar_lea.vmem %s1, 1264
  %319 = vst [vmem:[%s318] sm:$0xff] %v317
  %s320 = scalar_lea.vmem %s0, 520
  %v321 = vld [vmem:[%s320] sm:$0xff]
  %s322 = scalar_lea.vmem %s1, 8
  %323 = vst [vmem:[%s322] sm:$0xff] %v321
  %s324 = scalar_lea.vmem %s0, 1160
  %v325 = vld [vmem:[%s324] sm:$0xff]
  %s326 = scalar_lea.vmem %s1, 648
  %327 = vst [vmem:[%s326] sm:$0xff] %v325
  %s328 = scalar_lea.vmem %s0, 392
  %v329 = vld [vmem:[%s328] sm:$0xff]
  %s330 = scalar_lea.vmem %s1, 136
  %331 = vst [vmem:[%s330] sm:$0xff] %v329
  %s332 = scalar_lea.vmem %s0, 1032
  %v333 = vld [vmem:[%s332] sm:$0xff]
  %s334 = scalar_lea.vmem %s1, 776
  %335 = vst [vmem:[%s334] sm:$0xff] %v333
  %s336 = scalar_lea.vmem %s0, 264
  %v337 = vld [vmem:[%s336] sm:$0xff]
  %s338 = scalar_lea.vmem %s1, 264
  %339 = vst [vmem:[%s338] sm:$0xff] %v337
  %s340 = scalar_lea.vmem %s0, 904
  %v341 = vld [vmem:[%s340] sm:$0xff]
  %s342 = scalar_lea.vmem %s1, 904
  %343 = vst [vmem:[%s342] sm:$0xff] %v341
  %s344 = scalar_lea.vmem %s0, 136
  %v345 = vld [vmem:[%s344] sm:$0xff]
  %s346 = scalar_lea.vmem %s1, 392
  %347 = vst [vmem:[%s346] sm:$0xff] %v345
  %s348 = scalar_lea.vmem %s0, 776
  %v349 = vld [vmem:[%s348] sm:$0xff]
  %s350 = scalar_lea.vmem %s1, 1032
  %351 = vst [vmem:[%s350] sm:$0xff] %v349
  %s352 = scalar_lea.vmem %s0, 8
  %v353 = vld [vmem:[%s352] sm:$0xff]
  %s354 = scalar_lea.vmem %s1, 520
  %355 = vst [vmem:[%s354] sm:$0xff] %v353
  %s356 = scalar_lea.vmem %s0, 648
  %v357 = vld [vmem:[%s356] sm:$0xff]
  %s358 = scalar_lea.vmem %s1, 1160
  %359 = vst [vmem:[%s358] sm:$0xff] %v357
  %s360 = scalar_lea.vmem %s0, 536
  %v361 = vld [vmem:[%s360] sm:$0xff]
  %s362 = scalar_lea.vmem %s1, 24
  %363 = vst [vmem:[%s362] sm:$0xff] %v361
  %s364 = scalar_lea.vmem %s0, 1176
  %v365 = vld [vmem:[%s364] sm:$0xff]
  %s366 = scalar_lea.vmem %s1, 664
  %367 = vst [vmem:[%s366] sm:$0xff] %v365
  %s368 = scalar_lea.vmem %s0, 408
  %v369 = vld [vmem:[%s368] sm:$0xff]
  %s370 = scalar_lea.vmem %s1, 152
  %371 = vst [vmem:[%s370] sm:$0xff] %v369
  %s372 = scalar_lea.vmem %s0, 1048
  %v373 = vld [vmem:[%s372] sm:$0xff]
  %s374 = scalar_lea.vmem %s1, 792
  %375 = vst [vmem:[%s374] sm:$0xff] %v373
  %s376 = scalar_lea.vmem %s0, 280
  %v377 = vld [vmem:[%s376] sm:$0xff]
  %s378 = scalar_lea.vmem %s1, 280
  %379 = vst [vmem:[%s378] sm:$0xff] %v377
  %s380 = scalar_lea.vmem %s0, 920
  %v381 = vld [vmem:[%s380] sm:$0xff]
  %s382 = scalar_lea.vmem %s1, 920
  %383 = vst [vmem:[%s382] sm:$0xff] %v381
  %s384 = scalar_lea.vmem %s0, 152
  %v385 = vld [vmem:[%s384] sm:$0xff]
  %s386 = scalar_lea.vmem %s1, 408
  %387 = vst [vmem:[%s386] sm:$0xff] %v385
  %s388 = scalar_lea.vmem %s0, 792
  %v389 = vld [vmem:[%s388] sm:$0xff]
  %s390 = scalar_lea.vmem %s1, 1048
  %391 = vst [vmem:[%s390] sm:$0xff] %v389
  %s392 = scalar_lea.vmem %s0, 24
  %v393 = vld [vmem:[%s392] sm:$0xff]
  %s394 = scalar_lea.vmem %s1, 536
  %395 = vst [vmem:[%s394] sm:$0xff] %v393
  %s396 = scalar_lea.vmem %s0, 664
  %v397 = vld [vmem:[%s396] sm:$0xff]
  %s398 = scalar_lea.vmem %s1, 1176
  %399 = vst [vmem:[%s398] sm:$0xff] %v397
  %s400 = scalar_lea.vmem %s0, 552
  %v401 = vld [vmem:[%s400] sm:$0xff]
  %s402 = scalar_lea.vmem %s1, 40
  %403 = vst [vmem:[%s402] sm:$0xff] %v401
  %s404 = scalar_lea.vmem %s0, 1192
  %v405 = vld [vmem:[%s404] sm:$0xff]
  %s406 = scalar_lea.vmem %s1, 680
  %407 = vst [vmem:[%s406] sm:$0xff] %v405
  %s408 = scalar_lea.vmem %s0, 424
  %v409 = vld [vmem:[%s408] sm:$0xff]
  %s410 = scalar_lea.vmem %s1, 168
  %411 = vst [vmem:[%s410] sm:$0xff] %v409
  %s412 = scalar_lea.vmem %s0, 1064
  %v413 = vld [vmem:[%s412] sm:$0xff]
  %s414 = scalar_lea.vmem %s1, 808
  %415 = vst [vmem:[%s414] sm:$0xff] %v413
  %s416 = scalar_lea.vmem %s0, 296
  %v417 = vld [vmem:[%s416] sm:$0xff]
  %s418 = scalar_lea.vmem %s1, 296
  %419 = vst [vmem:[%s418] sm:$0xff] %v417
  %s420 = scalar_lea.vmem %s0, 936
  %v421 = vld [vmem:[%s420] sm:$0xff]
  %s422 = scalar_lea.vmem %s1, 936
  %423 = vst [vmem:[%s422] sm:$0xff] %v421
  %s424 = scalar_lea.vmem %s0, 168
  %v425 = vld [vmem:[%s424] sm:$0xff]
  %s426 = scalar_lea.vmem %s1, 424
  %427 = vst [vmem:[%s426] sm:$0xff] %v425
  %s428 = scalar_lea.vmem %s0, 808
  %v429 = vld [vmem:[%s428] sm:$0xff]
  %s430 = scalar_lea.vmem %s1, 1064
  %431 = vst [vmem:[%s430] sm:$0xff] %v429
  %s432 = scalar_lea.vmem %s0, 40
  %v433 = vld [vmem:[%s432] sm:$0xff]
  %s434 = scalar_lea.vmem %s1, 552
  %435 = vst [vmem:[%s434] sm:$0xff] %v433
  %s436 = scalar_lea.vmem %s0, 680
  %v437 = vld [vmem:[%s436] sm:$0xff]
  %s438 = scalar_lea.vmem %s1, 1192
  %439 = vst [vmem:[%s438] sm:$0xff] %v437
  %s440 = scalar_lea.vmem %s0, 568
  %v441 = vld [vmem:[%s440] sm:$0xff]
  %s442 = scalar_lea.vmem %s1, 56
  %443 = vst [vmem:[%s442] sm:$0xff] %v441
  %s444 = scalar_lea.vmem %s0, 1208
  %v445 = vld [vmem:[%s444] sm:$0xff]
  %s446 = scalar_lea.vmem %s1, 696
  %447 = vst [vmem:[%s446] sm:$0xff] %v445
  %s448 = scalar_lea.vmem %s0, 440
  %v449 = vld [vmem:[%s448] sm:$0xff]
  %s450 = scalar_lea.vmem %s1, 184
  %451 = vst [vmem:[%s450] sm:$0xff] %v449
  %s452 = scalar_lea.vmem %s0, 1080
  %v453 = vld [vmem:[%s452] sm:$0xff]
  %s454 = scalar_lea.vmem %s1, 824
  %455 = vst [vmem:[%s454] sm:$0xff] %v453
  %s456 = scalar_lea.vmem %s0, 312
  %v457 = vld [vmem:[%s456] sm:$0xff]
  %s458 = scalar_lea.vmem %s1, 312
  %459 = vst [vmem:[%s458] sm:$0xff] %v457
  %s460 = scalar_lea.vmem %s0, 952
  %v461 = vld [vmem:[%s460] sm:$0xff]
  %s462 = scalar_lea.vmem %s1, 952
  %463 = vst [vmem:[%s462] sm:$0xff] %v461
  %s464 = scalar_lea.vmem %s0, 184
  %v465 = vld [vmem:[%s464] sm:$0xff]
  %s466 = scalar_lea.vmem %s1, 440
  %467 = vst [vmem:[%s466] sm:$0xff] %v465
  %s468 = scalar_lea.vmem %s0, 824
  %v469 = vld [vmem:[%s468] sm:$0xff]
  %s470 = scalar_lea.vmem %s1, 1080
  %471 = vst [vmem:[%s470] sm:$0xff] %v469
  %s472 = scalar_lea.vmem %s0, 56
  %v473 = vld [vmem:[%s472] sm:$0xff]
  %s474 = scalar_lea.vmem %s1, 568
  %475 = vst [vmem:[%s474] sm:$0xff] %v473
  %s476 = scalar_lea.vmem %s0, 696
  %v477 = vld [vmem:[%s476] sm:$0xff]
  %s478 = scalar_lea.vmem %s1, 1208
  %479 = vst [vmem:[%s478] sm:$0xff] %v477
  %s480 = scalar_lea.vmem %s0, 584
  %v481 = vld [vmem:[%s480] sm:$0xff]
  %s482 = scalar_lea.vmem %s1, 72
  %483 = vst [vmem:[%s482] sm:$0xff] %v481
  %s484 = scalar_lea.vmem %s0, 1224
  %v485 = vld [vmem:[%s484] sm:$0xff]
  %s486 = scalar_lea.vmem %s1, 712
  %487 = vst [vmem:[%s486] sm:$0xff] %v485
  %s488 = scalar_lea.vmem %s0, 456
  %v489 = vld [vmem:[%s488] sm:$0xff]
  %s490 = scalar_lea.vmem %s1, 200
  %491 = vst [vmem:[%s490] sm:$0xff] %v489
  %s492 = scalar_lea.vmem %s0, 1096
  %v493 = vld [vmem:[%s492] sm:$0xff]
  %s494 = scalar_lea.vmem %s1, 840
  %495 = vst [vmem:[%s494] sm:$0xff] %v493
  %s496 = scalar_lea.vmem %s0, 328
  %v497 = vld [vmem:[%s496] sm:$0xff]
  %s498 = scalar_lea.vmem %s1, 328
  %499 = vst [vmem:[%s498] sm:$0xff] %v497
  %s500 = scalar_lea.vmem %s0, 968
  %v501 = vld [vmem:[%s500] sm:$0xff]
  %s502 = scalar_lea.vmem %s1, 968
  %503 = vst [vmem:[%s502] sm:$0xff] %v501
  %s504 = scalar_lea.vmem %s0, 200
  %v505 = vld [vmem:[%s504] sm:$0xff]
  %s506 = scalar_lea.vmem %s1, 456
  %507 = vst [vmem:[%s506] sm:$0xff] %v505
  %s508 = scalar_lea.vmem %s0, 840
  %v509 = vld [vmem:[%s508] sm:$0xff]
  %s510 = scalar_lea.vmem %s1, 1096
  %511 = vst [vmem:[%s510] sm:$0xff] %v509
  %s512 = scalar_lea.vmem %s0, 72
  %v513 = vld [vmem:[%s512] sm:$0xff]
  %s514 = scalar_lea.vmem %s1, 584
  %515 = vst [vmem:[%s514] sm:$0xff] %v513
  %s516 = scalar_lea.vmem %s0, 712
  %v517 = vld [vmem:[%s516] sm:$0xff]
  %s518 = scalar_lea.vmem %s1, 1224
  %519 = vst [vmem:[%s518] sm:$0xff] %v517
  %s520 = scalar_lea.vmem %s0, 600
  %v521 = vld [vmem:[%s520] sm:$0xff]
  %s522 = scalar_lea.vmem %s1, 88
  %523 = vst [vmem:[%s522] sm:$0xff] %v521
  %s524 = scalar_lea.vmem %s0, 1240
  %v525 = vld [vmem:[%s524] sm:$0xff]
  %s526 = scalar_lea.vmem %s1, 728
  %527 = vst [vmem:[%s526] sm:$0xff] %v525
  %s528 = scalar_lea.vmem %s0, 472
  %v529 = vld [vmem:[%s528] sm:$0xff]
  %s530 = scalar_lea.vmem %s1, 216
  %531 = vst [vmem:[%s530] sm:$0xff] %v529
  %s532 = scalar_lea.vmem %s0, 1112
  %v533 = vld [vmem:[%s532] sm:$0xff]
  %s534 = scalar_lea.vmem %s1, 856
  %535 = vst [vmem:[%s534] sm:$0xff] %v533
  %s536 = scalar_lea.vmem %s0, 344
  %v537 = vld [vmem:[%s536] sm:$0xff]
  %s538 = scalar_lea.vmem %s1, 344
  %539 = vst [vmem:[%s538] sm:$0xff] %v537
  %s540 = scalar_lea.vmem %s0, 984
  %v541 = vld [vmem:[%s540] sm:$0xff]
  %s542 = scalar_lea.vmem %s1, 984
  %543 = vst [vmem:[%s542] sm:$0xff] %v541
  %s544 = scalar_lea.vmem %s0, 216
  %v545 = vld [vmem:[%s544] sm:$0xff]
  %s546 = scalar_lea.vmem %s1, 472
  %547 = vst [vmem:[%s546] sm:$0xff] %v545
  %s548 = scalar_lea.vmem %s0, 856
  %v549 = vld [vmem:[%s548] sm:$0xff]
  %s550 = scalar_lea.vmem %s1, 1112
  %551 = vst [vmem:[%s550] sm:$0xff] %v549
  %s552 = scalar_lea.vmem %s0, 88
  %v553 = vld [vmem:[%s552] sm:$0xff]
  %s554 = scalar_lea.vmem %s1, 600
  %555 = vst [vmem:[%s554] sm:$0xff] %v553
  %s556 = scalar_lea.vmem %s0, 728
  %v557 = vld [vmem:[%s556] sm:$0xff]
  %s558 = scalar_lea.vmem %s1, 1240
  %559 = vst [vmem:[%s558] sm:$0xff] %v557
  %s560 = scalar_lea.vmem %s0, 616
  %v561 = vld [vmem:[%s560] sm:$0xff]
  %s562 = scalar_lea.vmem %s1, 104
  %563 = vst [vmem:[%s562] sm:$0xff] %v561
  %s564 = scalar_lea.vmem %s0, 1256
  %v565 = vld [vmem:[%s564] sm:$0xff]
  %s566 = scalar_lea.vmem %s1, 744
  %567 = vst [vmem:[%s566] sm:$0xff] %v565
  %s568 = scalar_lea.vmem %s0, 488
  %v569 = vld [vmem:[%s568] sm:$0xff]
  %s570 = scalar_lea.vmem %s1, 232
  %571 = vst [vmem:[%s570] sm:$0xff] %v569
  %s572 = scalar_lea.vmem %s0, 1128
  %v573 = vld [vmem:[%s572] sm:$0xff]
  %s574 = scalar_lea.vmem %s1, 872
  %575 = vst [vmem:[%s574] sm:$0xff] %v573
  %s576 = scalar_lea.vmem %s0, 360
  %v577 = vld [vmem:[%s576] sm:$0xff]
  %s578 = scalar_lea.vmem %s1, 360
  %579 = vst [vmem:[%s578] sm:$0xff] %v577
  %s580 = scalar_lea.vmem %s0, 1000
  %v581 = vld [vmem:[%s580] sm:$0xff]
  %s582 = scalar_lea.vmem %s1, 1000
  %583 = vst [vmem:[%s582] sm:$0xff] %v581
  %s584 = scalar_lea.vmem %s0, 232
  %v585 = vld [vmem:[%s584] sm:$0xff]
  %s586 = scalar_lea.vmem %s1, 488
  %587 = vst [vmem:[%s586] sm:$0xff] %v585
  %s588 = scalar_lea.vmem %s0, 872
  %v589 = vld [vmem:[%s588] sm:$0xff]
  %s590 = scalar_lea.vmem %s1, 1128
  %591 = vst [vmem:[%s590] sm:$0xff] %v589
  %s592 = scalar_lea.vmem %s0, 104
  %v593 = vld [vmem:[%s592] sm:$0xff]
  %s594 = scalar_lea.vmem %s1, 616
  %595 = vst [vmem:[%s594] sm:$0xff] %v593
  %s596 = scalar_lea.vmem %s0, 744
  %v597 = vld [vmem:[%s596] sm:$0xff]
  %s598 = scalar_lea.vmem %s1, 1256
  %599 = vst [vmem:[%s598] sm:$0xff] %v597
  %s600 = scalar_lea.vmem %s0, 632
  %v601 = vld [vmem:[%s600] sm:$0xff]
  %s602 = scalar_lea.vmem %s1, 120
  %603 = vst [vmem:[%s602] sm:$0xff] %v601
  %s604 = scalar_lea.vmem %s0, 1272
  %v605 = vld [vmem:[%s604] sm:$0xff]
  %s606 = scalar_lea.vmem %s1, 760
  %607 = vst [vmem:[%s606] sm:$0xff] %v605
  %s608 = scalar_lea.vmem %s0, 504
  %v609 = vld [vmem:[%s608] sm:$0xff]
  %s610 = scalar_lea.vmem %s1, 248
  %611 = vst [vmem:[%s610] sm:$0xff] %v609
  %s612 = scalar_lea.vmem %s0, 1144
  %v613 = vld [vmem:[%s612] sm:$0xff]
  %s614 = scalar_lea.vmem %s1, 888
  %615 = vst [vmem:[%s614] sm:$0xff] %v613
  %s616 = scalar_lea.vmem %s0, 376
  %v617 = vld [vmem:[%s616] sm:$0xff]
  %s618 = scalar_lea.vmem %s1, 376
  %619 = vst [vmem:[%s618] sm:$0xff] %v617
  %s620 = scalar_lea.vmem %s0, 1016
  %v621 = vld [vmem:[%s620] sm:$0xff]
  %s622 = scalar_lea.vmem %s1, 1016
  %623 = vst [vmem:[%s622] sm:$0xff] %v621
  %s624 = scalar_lea.vmem %s0, 248
  %v625 = vld [vmem:[%s624] sm:$0xff]
  %s626 = scalar_lea.vmem %s1, 504
  %627 = vst [vmem:[%s626] sm:$0xff] %v625
  %s628 = scalar_lea.vmem %s0, 888
  %v629 = vld [vmem:[%s628] sm:$0xff]
  %s630 = scalar_lea.vmem %s1, 1144
  %631 = vst [vmem:[%s630] sm:$0xff] %v629
  %s632 = scalar_lea.vmem %s0, 120
  %v633 = vld [vmem:[%s632] sm:$0xff]
  %s634 = scalar_lea.vmem %s1, 632
  %635 = vst [vmem:[%s634] sm:$0xff] %v633
  %s636 = scalar_lea.vmem %s0, 760
  %v637 = vld [vmem:[%s636] sm:$0xff]
  %s638 = scalar_lea.vmem %s1, 1272
  %639 = vst [vmem:[%s638] sm:$0xff] %v637

// kernel: tfno_forward.10
$region0: #{tfno_forward.10}
  #allocation0 [shape = 'u32[]', space=smem, size = 0x4, offset = 0x4, fixed_abs, tag = 'smem constant byte address 0x4 - core index']
  #allocation1 [shape = 'u32[144,128]{1,0:T(1,128)}', space=vmem, size = 0x12000, scoped, tag = 'internal scratch']
  %s0 = inlined_call_operand.vmem [shape: f32[216,128], index: 0, kind: input, shape index: {}]
  %s1 = inlined_call_operand.vmem [shape: f32[128,128], index: 1, kind: input, shape index: {}]
  %s2 = inlined_call_operand.vmem [shape: f32[216,128], index: 2, kind: input, shape index: {}]
  %s3 = inlined_call_operand.vmem [shape: f32[216,128], index: 3, kind: output, shape index: {0}]
  %s4 = inlined_call_operand.vmem [shape: f32[8,128], index: 4, kind: output, shape index: {1}]
  %s5 = inlined_call_operand.vmem [shape: f32[8,128], index: 5, kind: output, shape index: {2}]
  %6 = xla_tuple %s3, %s4, %s5
  %s7 = sld [smem:[#allocation0]]
  $region38: #{tfno_forward.10} parent=0
    _
  %s9 = ssub.s32 1, %s7
  %s10 = scalar_select 0, %s9, %s7
  // Predicated region
  $region2: #{tfno_forward.10} parent=0 // pred_check
    _
  $region3: #{tfno_forward.10} parent=0 // pred_check_branch
    %12 = sbr.rel (0) target = $region5
  $region4: #{tfno_forward.10} parent=0 // pred_region
    _
  $region5: #{tfno_forward.10} parent=0 // pred_fallthru
    _
  // Predicated region
  $region6: #{tfno_forward.10} parent=0 // pred_check
    _
  $region7: #{tfno_forward.10} parent=0 // pred_check_branch
    %14 = sbr.rel (0) target = $region9
  $region8: #{tfno_forward.10} parent=0 // pred_region
    _
  $region9: #{tfno_forward.10} parent=0 // pred_fallthru
    _
  // Predicated region
  $region10: #{tfno_forward.10} parent=0 // pred_check
    _
  $region11: #{tfno_forward.10} parent=0 // pred_check_branch
    %16 = sbr.rel (0) target = $region13
  $region12: #{tfno_forward.10} parent=0 // pred_region
    _
  $region13: #{tfno_forward.10} parent=0 // pred_fallthru
    _
  %v17 = vld [vmem:[%s0] sm:$0xff]
  %v18 = vld [vmem:[%s0 + $0x8] sm:$0xff]
  %v19 = vld [vmem:[%s0 + $0x10] sm:$0xff]
  %v20 = vld [vmem:[%s0 + $0x18] sm:$0xff]
  %v21 = vld [vmem:[%s0 + $0x20] sm:$0xff]
  %v22 = vld [vmem:[%s0 + $0x28] sm:$0xff]
  %v23 = vld [vmem:[%s0 + $0x30] sm:$0xff]
  %v24 = vld [vmem:[%s0 + $0x38] sm:$0xff]
  %v25 = vld [vmem:[%s0 + $0x40] sm:$0xff]
  %v26 = vld [vmem:[%s0 + $0x48] sm:$0xff]
  %v27 = vld [vmem:[%s0 + $0x50] sm:$0xff]
  %v28 = vld [vmem:[%s0 + $0x58] sm:$0xff]
  %v29 = vld [vmem:[%s0 + $0x60] sm:$0xff]
  %v30 = vld [vmem:[%s0 + $0x68] sm:$0xff]
  %v31 = vld [vmem:[%s0 + $0x70] sm:$0xff]
  %v32 = vld [vmem:[%s0 + $0x78] sm:$0xff]
  %v33 = vld [vmem:[%s0 + $0x80] sm:$0xff]
  %v34 = vld [vmem:[%s0 + $0x88] sm:$0xff]
  %v35 = vld [vmem:[%s0 + $0x90] sm:$0xff]
  %v36 = vld [vmem:[%s0 + $0x98] sm:$0xff]
  %v37 = vld [vmem:[%s0 + $0xa0] sm:$0xff]
  %v38 = vld [vmem:[%s0 + $0xa8] sm:$0xff]
  %v39 = vld [vmem:[%s0 + $0xb0] sm:$0xff]
  %v40 = vld [vmem:[%s0 + $0xb8] sm:$0xff]
  %v41 = vld [vmem:[%s0 + $0xc0] sm:$0xff]
  %v42 = vld [vmem:[%s0 + $0xc8] sm:$0xff]
  %v43 = vld [vmem:[%s0 + $0xd0] sm:$0xff]
  %v44 = vld [vmem:[%s1] sm:$0xff]
  %v45 = vld [vmem:[%s1 + $0x8] sm:$0xff]
  %v46 = vld [vmem:[%s1 + $0x10] sm:$0xff]
  %v47 = vld [vmem:[%s1 + $0x18] sm:$0xff]
  %v48 = vld [vmem:[%s1 + $0x20] sm:$0xff]
  %v49 = vld [vmem:[%s1 + $0x28] sm:$0xff]
  %v50 = vld [vmem:[%s1 + $0x30] sm:$0xff]
  %v51 = vld [vmem:[%s1 + $0x38] sm:$0xff]
  %v52 = vld [vmem:[%s1 + $0x40] sm:$0xff]
  %v53 = vld [vmem:[%s1 + $0x48] sm:$0xff]
  %v54 = vld [vmem:[%s1 + $0x50] sm:$0xff]
  %v55 = vld [vmem:[%s1 + $0x58] sm:$0xff]
  %v56 = vld [vmem:[%s1 + $0x60] sm:$0xff]
  %v57 = vld [vmem:[%s1 + $0x68] sm:$0xff]
  %v58 = vld [vmem:[%s1 + $0x70] sm:$0xff]
  %v59 = vld [vmem:[%s1 + $0x78] sm:$0xff]
  %v60 = vld [vmem:[%s2] sm:$0xff]
  %v61 = vld [vmem:[%s2 + $0x8] sm:$0xff]
  %v62 = vld [vmem:[%s2 + $0x10] sm:$0xff]
  %v63 = vld [vmem:[%s2 + $0x18] sm:$0xff]
  %v64 = vld [vmem:[%s2 + $0x20] sm:$0xff]
  %v65 = vld [vmem:[%s2 + $0x28] sm:$0xff]
  %v66 = vld [vmem:[%s2 + $0x30] sm:$0xff]
  %v67 = vld [vmem:[%s2 + $0x38] sm:$0xff]
  %v68 = vld [vmem:[%s2 + $0x40] sm:$0xff]
  %v69 = vld [vmem:[%s2 + $0x48] sm:$0xff]
  %v70 = vld [vmem:[%s2 + $0x50] sm:$0xff]
  %v71 = vld [vmem:[%s2 + $0x58] sm:$0xff]
  %v72 = vld [vmem:[%s2 + $0x60] sm:$0xff]
  %v73 = vld [vmem:[%s2 + $0x68] sm:$0xff]
  %v74 = vld [vmem:[%s2 + $0x70] sm:$0xff]
  %v75 = vld [vmem:[%s2 + $0x78] sm:$0xff]
  %v76 = vld [vmem:[%s2 + $0x80] sm:$0xff]
  %v77 = vld [vmem:[%s2 + $0x88] sm:$0xff]
  %v78 = vld [vmem:[%s2 + $0x90] sm:$0xff]
  %v79 = vld [vmem:[%s2 + $0x98] sm:$0xff]
  %v80 = vld [vmem:[%s2 + $0xa0] sm:$0xff]
  %v81 = vld [vmem:[%s2 + $0xa8] sm:$0xff]
  %v82 = vld [vmem:[%s2 + $0xb0] sm:$0xff]
  %v83 = vld [vmem:[%s2 + $0xb8] sm:$0xff]
  %v84 = vld [vmem:[%s2 + $0xc0] sm:$0xff]
  %v85 = vld [vmem:[%s2 + $0xc8] sm:$0xff]
  %v86 = vld [vmem:[%s2 + $0xd0] sm:$0xff]
  %87 = vmatprep.subr.mxu0 0.0
  %88 = vmatpush1.msra.mxu0 %v59
  %89 = vmatprep.subr.mxu0 0.0
  %90 = vmatpush1.msra.mxu0 %v58
  %91 = vmatprep.subr.mxu0 0.0
  %92 = vmatpush1.msra.mxu0 %v57
  %93 = vmatprep.subr.mxu0 0.0
  %94 = vmatpush1.msra.mxu0 %v56
  %95 = vmatprep.subr.mxu0 0.0
  %96 = vmatpush1.msra.mxu0 %v55
  %97 = vmatprep.subr.mxu0 0.0
  %98 = vmatpush1.msra.mxu0 %v54
  %99 = vmatprep.subr.mxu0 0.0
  %100 = vmatpush1.msra.mxu0 %v53
  %101 = vmatprep.subr.mxu0 0.0
  %102 = vmatpush1.msra.mxu0 %v52
  %103 = vmatprep.subr.mxu0 0.0
  %104 = vmatpush1.msra.mxu0 %v51
  %105 = vmatprep.subr.mxu0 0.0
  %106 = vmatpush1.msra.mxu0 %v50
  %107 = vmatprep.subr.mxu0 0.0
  %108 = vmatpush1.msra.mxu0 %v49
  %109 = vmatprep.subr.mxu0 0.0
  %110 = vmatpush1.msra.mxu0 %v48
  %111 = vmatprep.subr.mxu0 0.0
  %112 = vmatpush1.msra.mxu0 %v47
  %113 = vmatprep.subr.mxu0 0.0
  %114 = vmatpush1.msra.mxu0 %v46
  %115 = vmatprep.subr.mxu0 0.0
  %116 = vmatpush1.msra.mxu0 %v45
  %117 = vmatprep.subr.mxu0 0.0
  %118 = vmatpush1.msra.mxu0 %v44
  %119 = vmatprep.subr.mxu0 0.0
  %120 = vmatpush2.msra.mxu0 0.0
  %121 = vmatprep.subr.mxu0 0.0
  %122 = vmatpush2.msra.mxu0 0.0
  %123 = vmatprep.subr.mxu0 0.0
  %124 = vmatpush2.msra.mxu0 0.0
  %125 = vmatprep.subr.mxu0 0.0
  %126 = vmatpush2.msra.mxu0 0.0
  %127 = vmatprep.subr.mxu0 0.0
  %128 = vmatpush2.msra.mxu0 0.0
  %129 = vmatprep.subr.mxu0 0.0
  %130 = vmatpush2.msra.mxu0 0.0
  %131 = vmatprep.subr.mxu0 0.0
  %132 = vmatpush2.msra.mxu0 0.0
  %133 = vmatprep.subr.mxu0 0.0
  %134 = vmatpush2.msra.mxu0 0.0
  %135 = vmatprep.subr.mxu0 0.0
  %136 = vmatpush2.msra.mxu0 0.0
  %137 = vmatprep.subr.mxu0 0.0
  %138 = vmatpush2.msra.mxu0 0.0
  %139 = vmatprep.subr.mxu0 0.0
  %140 = vmatpush2.msra.mxu0 0.0
  %141 = vmatprep.subr.mxu0 0.0
  %142 = vmatpush2.msra.mxu0 0.0
  %143 = vmatprep.subr.mxu0 0.0
  %144 = vmatpush2.msra.mxu0 0.0
  %145 = vmatprep.subr.mxu0 0.0
  %146 = vmatpush2.msra.mxu0 0.0
  %147 = vmatprep.subr.mxu0 0.0
  %148 = vmatpush2.msra.mxu0 0.0
  %149 = vmatprep.subr.mxu0 0.0
  %150 = vmatpush2.msra.mxu0 0.0
  %151 = vmatprep.mubr.f32.mxu0 0.0
  %152 = vmatmul.mubr.f32.gmra.mxu0 %v17
  %v153 = vpop.f32.mrf.mxu0
  %v154 = vadd.f32 %v60, %v153
  %v155 = vpop.f32.mrf.mxu0
  %156 = vmatprep.mubr.f32.mxu0 0.0
  %157 = vmatmul.mubr.f32.gmra.mxu0 %v18
  %v158 = vpop.f32.mrf.mxu0
  %v159 = vadd.f32 %v61, %v158
  %v160 = vpop.f32.mrf.mxu0
  %161 = vmatprep.mubr.f32.mxu0 0.0
  %162 = vmatmul.mubr.f32.gmra.mxu0 %v19
  %v163 = vpop.f32.mrf.mxu0
  %v164 = vadd.f32 %v62, %v163
  %v165 = vpop.f32.mrf.mxu0
  %166 = vmatprep.mubr.f32.mxu0 0.0
  %167 = vmatmul.mubr.f32.gmra.mxu0 %v20
  %v168 = vpop.f32.mrf.mxu0
  %v169 = vadd.f32 %v63, %v168
  %v170 = vpop.f32.mrf.mxu0
  %171 = vmatprep.mubr.f32.mxu0 0.0
  %172 = vmatmul.mubr.f32.gmra.mxu0 %v21
  %v173 = vpop.f32.mrf.mxu0
  %v174 = vadd.f32 %v64, %v173
  %v175 = vpop.f32.mrf.mxu0
  %176 = vmatprep.mubr.f32.mxu0 0.0
  %177 = vmatmul.mubr.f32.gmra.mxu0 %v22
  %v178 = vpop.f32.mrf.mxu0
  %v179 = vadd.f32 %v65, %v178
  %v180 = vpop.f32.mrf.mxu0
  %181 = vmatprep.mubr.f32.mxu0 0.0
  %182 = vmatmul.mubr.f32.gmra.mxu0 %v23
  %v183 = vpop.f32.mrf.mxu0
  %v184 = vadd.f32 %v66, %v183
  %v185 = vpop.f32.mrf.mxu0
  %186 = vmatprep.mubr.f32.mxu0 0.0
  %187 = vmatmul.mubr.f32.gmra.mxu0 %v24
  %v188 = vpop.f32.mrf.mxu0
  %v189 = vadd.f32 %v67, %v188
  %v190 = vpop.f32.mrf.mxu0
  %191 = vmatprep.mubr.f32.mxu0 0.0
  %192 = vmatmul.mubr.f32.gmra.mxu0 %v25
  %v193 = vpop.f32.mrf.mxu0
  %v194 = vadd.f32 %v68, %v193
  %v195 = vpop.f32.mrf.mxu0
  %196 = vmatprep.mubr.f32.mxu0 0.0
  %197 = vmatmul.mubr.f32.gmra.mxu0 %v26
  %v198 = vpop.f32.mrf.mxu0
  %v199 = vadd.f32 %v69, %v198
  %v200 = vpop.f32.mrf.mxu0
  %201 = vmatprep.mubr.f32.mxu0 0.0
  %202 = vmatmul.mubr.f32.gmra.mxu0 %v27
  %v203 = vpop.f32.mrf.mxu0
  %v204 = vadd.f32 %v70, %v203
  %v205 = vpop.f32.mrf.mxu0
  %206 = vmatprep.mubr.f32.mxu0 0.0
  %207 = vmatmul.mubr.f32.gmra.mxu0 %v28
  %v208 = vpop.f32.mrf.mxu0
  %v209 = vadd.f32 %v71, %v208
  %v210 = vpop.f32.mrf.mxu0
  %211 = vmatprep.mubr.f32.mxu0 0.0
  %212 = vmatmul.mubr.f32.gmra.mxu0 %v29
  %v213 = vpop.f32.mrf.mxu0
  %v214 = vadd.f32 %v72, %v213
  %v215 = vpop.f32.mrf.mxu0
  %216 = vmatprep.mubr.f32.mxu0 0.0
  %217 = vmatmul.mubr.f32.gmra.mxu0 %v30
  %v218 = vpop.f32.mrf.mxu0
  %v219 = vadd.f32 %v73, %v218
  %v220 = vpop.f32.mrf.mxu0
  %221 = vmatprep.mubr.f32.mxu0 0.0
  %222 = vmatmul.mubr.f32.gmra.mxu0 %v31
  %v223 = vpop.f32.mrf.mxu0
  %v224 = vadd.f32 %v74, %v223
  %v225 = vpop.f32.mrf.mxu0
  %226 = vmatprep.mubr.f32.mxu0 0.0
  %227 = vmatmul.mubr.f32.gmra.mxu0 %v32
  %v228 = vpop.f32.mrf.mxu0
  %v229 = vadd.f32 %v75, %v228
  %v230 = vpop.f32.mrf.mxu0
  %231 = vmatprep.mubr.f32.mxu0 0.0
  %232 = vmatmul.mubr.f32.gmra.mxu0 %v33
  %v233 = vpop.f32.mrf.mxu0
  %v234 = vadd.f32 %v76, %v233
  %v235 = vpop.f32.mrf.mxu0
  %236 = vmatprep.mubr.f32.mxu0 0.0
  %237 = vmatmul.mubr.f32.gmra.mxu0 %v34
  %v238 = vpop.f32.mrf.mxu0
  %v239 = vadd.f32 %v77, %v238
  %v240 = vpop.f32.mrf.mxu0
  %241 = vmatprep.mubr.f32.mxu0 0.0
  %242 = vmatmul.mubr.f32.gmra.mxu0 %v35
  %v243 = vpop.f32.mrf.mxu0
  %v244 = vadd.f32 %v78, %v243
  %v245 = vpop.f32.mrf.mxu0
  %246 = vmatprep.mubr.f32.mxu0 0.0
  %247 = vmatmul.mubr.f32.gmra.mxu0 %v36
  %v248 = vpop.f32.mrf.mxu0
  %v249 = vadd.f32 %v79, %v248
  %v250 = vpop.f32.mrf.mxu0
  %251 = vmatprep.mubr.f32.mxu0 0.0
  %252 = vmatmul.mubr.f32.gmra.mxu0 %v37
  %v253 = vpop.f32.mrf.mxu0
  %v254 = vadd.f32 %v80, %v253
  %v255 = vpop.f32.mrf.mxu0
  %256 = vmatprep.mubr.f32.mxu0 0.0
  %257 = vmatmul.mubr.f32.gmra.mxu0 %v38
  %v258 = vpop.f32.mrf.mxu0
  %v259 = vadd.f32 %v81, %v258
  %v260 = vpop.f32.mrf.mxu0
  %261 = vmatprep.mubr.f32.mxu0 0.0
  %262 = vmatmul.mubr.f32.gmra.mxu0 %v39
  %v263 = vpop.f32.mrf.mxu0
  %v264 = vadd.f32 %v82, %v263
  %v265 = vpop.f32.mrf.mxu0
  %266 = vmatprep.mubr.f32.mxu0 0.0
  %267 = vmatmul.mubr.f32.gmra.mxu0 %v40
  %v268 = vpop.f32.mrf.mxu0
  %v269 = vadd.f32 %v83, %v268
  %v270 = vpop.f32.mrf.mxu0
  %271 = vmatprep.mubr.f32.mxu0 0.0
  %272 = vmatmul.mubr.f32.gmra.mxu0 %v41
  %v273 = vpop.f32.mrf.mxu0
  %v274 = vadd.f32 %v84, %v273
  %v275 = vpop.f32.mrf.mxu0
  %276 = vmatprep.mubr.f32.mxu0 0.0
  %277 = vmatmul.mubr.f32.gmra.mxu0 %v42
  %v278 = vpop.f32.mrf.mxu0
  %v279 = vadd.f32 %v85, %v278
  %v280 = vpop.f32.mrf.mxu0
  %281 = vmatprep.mubr.f32.mxu0 0.0
  %282 = vmatmul.mubr.f32.gmra.mxu0 %v43
  %v283 = vpop.f32.mrf.mxu0
  %v284 = vadd.f32 %v86, %v283
  %v285 = vpop.f32.mrf.mxu0
  %286 = vdwg.mxu0
  %287 = vst [vmem:[%s3] sm:$0xff] %v154
  %288 = vst [vmem:[%s3 + $0x8] sm:$0xff] %v159
  %289 = vst [vmem:[%s3 + $0x10] sm:$0xff] %v164
  %290 = vst [vmem:[%s3 + $0x18] sm:$0xff] %v169
  %291 = vst [vmem:[%s3 + $0x20] sm:$0xff] %v174
  %292 = vst [vmem:[%s3 + $0x28] sm:$0xff] %v179
  %293 = vst [vmem:[%s3 + $0x30] sm:$0xff] %v184
  %294 = vst [vmem:[%s3 + $0x38] sm:$0xff] %v189
  %295 = vst [vmem:[%s3 + $0x40] sm:$0xff] %v194
  %296 = vst [vmem:[%s3 + $0x48] sm:$0xff] %v199
  %297 = vst [vmem:[%s3 + $0x50] sm:$0xff] %v204
  %298 = vst [vmem:[%s3 + $0x58] sm:$0xff] %v209
  %299 = vst [vmem:[%s3 + $0x60] sm:$0xff] %v214
  %300 = vst [vmem:[%s3 + $0x68] sm:$0xff] %v219
  %301 = vst [vmem:[%s3 + $0x70] sm:$0xff] %v224
  %302 = vst [vmem:[%s3 + $0x78] sm:$0xff] %v229
  %303 = vst [vmem:[%s3 + $0x80] sm:$0xff] %v234
  %304 = vst [vmem:[%s3 + $0x88] sm:$0xff] %v239
  %305 = vst [vmem:[%s3 + $0x90] sm:$0xff] %v244
  %306 = vst [vmem:[%s3 + $0x98] sm:$0xff] %v249
  %307 = vst [vmem:[%s3 + $0xa0] sm:$0xff] %v254
  %308 = vst [vmem:[%s3 + $0xa8] sm:$0xff] %v259
  %309 = vst [vmem:[%s3 + $0xb0] sm:$0xff] %v264
  %310 = vst [vmem:[%s3 + $0xb8] sm:$0xff] %v269
  %311 = vst [vmem:[%s3 + $0xc0] sm:$0xff] %v274
  %312 = vst [vmem:[%s3 + $0xc8] sm:$0xff] %v279
  %313 = vst [vmem:[%s3 + $0xd0] sm:$0xff] %v284
  %v314 = vadd.f32 %v154, %v159
  %v315 = vadd.f32 %v314, %v164
  %v316 = vadd.f32 %v315, %v169
  %v317 = vadd.f32 %v316, %v174
  %v318 = vadd.f32 %v317, %v179
  %v319 = vadd.f32 %v318, %v184
  %v320 = vadd.f32 %v319, %v189
  %v321 = vadd.f32 %v320, %v194
  %v322 = vadd.f32 %v321, %v199
  %v323 = vadd.f32 %v322, %v204
  %v324 = vadd.f32 %v323, %v209
  %v325 = vadd.f32 %v324, %v214
  %v326 = vadd.f32 %v325, %v219
  %v327 = vadd.f32 %v326, %v224
  %v328 = vadd.f32 %v327, %v229
  %v329 = vadd.f32 %v328, %v234
  %v330 = vadd.f32 %v329, %v239
  %v331 = vadd.f32 %v330, %v244
  %v332 = vadd.f32 %v331, %v249
  %v333 = vadd.f32 %v332, %v254
  %v334 = vadd.f32 %v333, %v259
  %v335 = vadd.f32 %v334, %v264
  %v336 = vadd.f32 %v335, %v269
  %v337 = vadd.f32 %v336, %v274
  %v338 = vadd.f32 %v337, %v279
  %v339 = vadd.f32 %v338, %v284
  %v340 = vrot.slane %v339, 4
  %v341 = vadd.f32 %v339, %v340
  %v342 = vrot.slane %v341, 2
  %v343 = vadd.f32 %v341, %v342
  %v344 = vrot.slane %v343, 1
  %v345 = vadd.f32 %v343, %v344
  %v346 = vmul.f32 %v154, %v154
  %v347 = vmul.f32 %v159, %v159
  %v348 = vmul.f32 %v164, %v164
  %v349 = vmul.f32 %v169, %v169
  %v350 = vmul.f32 %v174, %v174
  %v351 = vmul.f32 %v179, %v179
  %v352 = vmul.f32 %v184, %v184
  %v353 = vmul.f32 %v189, %v189
  %v354 = vmul.f32 %v194, %v194
  %v355 = vmul.f32 %v199, %v199
  %v356 = vmul.f32 %v204, %v204
  %v357 = vmul.f32 %v209, %v209
  %v358 = vmul.f32 %v214, %v214
  %v359 = vmul.f32 %v219, %v219
  %v360 = vmul.f32 %v224, %v224
  %v361 = vmul.f32 %v229, %v229
  %v362 = vmul.f32 %v234, %v234
  %v363 = vmul.f32 %v239, %v239
  %v364 = vmul.f32 %v244, %v244
  %v365 = vmul.f32 %v249, %v249
  %v366 = vmul.f32 %v254, %v254
  %v367 = vmul.f32 %v259, %v259
  %v368 = vmul.f32 %v264, %v264
  %v369 = vmul.f32 %v269, %v269
  %v370 = vmul.f32 %v274, %v274
  %v371 = vmul.f32 %v279, %v279
  %v372 = vmul.f32 %v284, %v284
  %v373 = vadd.f32 %v346, %v347
  %v374 = vadd.f32 %v373, %v348
  %v375 = vadd.f32 %v374, %v349
  %v376 = vadd.f32 %v375, %v350
  %v377 = vadd.f32 %v376, %v351
  %v378 = vadd.f32 %v377, %v352
  %v379 = vadd.f32 %v378, %v353
  %v380 = vadd.f32 %v379, %v354
  %v381 = vadd.f32 %v380, %v355
  %v382 = vadd.f32 %v381, %v356
  %v383 = vadd.f32 %v382, %v357
  %v384 = vadd.f32 %v383, %v358
  %v385 = vadd.f32 %v384, %v359
  %v386 = vadd.f32 %v385, %v360
  %v387 = vadd.f32 %v386, %v361
  %v388 = vadd.f32 %v387, %v362
  %v389 = vadd.f32 %v388, %v363
  %v390 = vadd.f32 %v389, %v364
  %v391 = vadd.f32 %v390, %v365
  %v392 = vadd.f32 %v391, %v366
  %v393 = vadd.f32 %v392, %v367
  %v394 = vadd.f32 %v393, %v368
  %v395 = vadd.f32 %v394, %v369
  %v396 = vadd.f32 %v395, %v370
  %v397 = vadd.f32 %v396, %v371
  %v398 = vadd.f32 %v397, %v372
  %v399 = vrot.slane %v398, 4
  %v400 = vadd.f32 %v398, %v399
  %v401 = vrot.slane %v400, 2
  %v402 = vadd.f32 %v400, %v401
  %v403 = vrot.slane %v402, 1
  %v404 = vadd.f32 %v402, %v403
  %405 = vst [vmem:[%s4] sm:$0xff] %v345
  %406 = vst [vmem:[%s5] sm:$0xff] %v404
  // Predicated region
  $region14: #{tfno_forward.10} parent=0 // pred_check
    _
  $region15: #{tfno_forward.10} parent=0 // pred_check_branch
    %408 = sbr.rel (0) target = $region17
  $region16: #{tfno_forward.10} parent=0 // pred_region
    _
  $region17: #{tfno_forward.10} parent=0 // pred_fallthru
    _
  // Predicated region
  $region18: #{tfno_forward.10} parent=0 // pred_check
    _
  $region19: #{tfno_forward.10} parent=0 // pred_check_branch
    %410 = sbr.rel (0) target = $region21
  $region20: #{tfno_forward.10} parent=0 // pred_region
    _
  $region21: #{tfno_forward.10} parent=0 // pred_fallthru
    _
  // Predicated region
  $region22: #{tfno_forward.10} parent=0 // pred_check
    _
  $region23: #{tfno_forward.10} parent=0 // pred_check_branch
    %412 = sbr.rel (0) target = $region25
  $region24: #{tfno_forward.10} parent=0 // pred_region
    _
  $region25: #{tfno_forward.10} parent=0 // pred_fallthru
    _
  // Predicated region
  $region26: #{tfno_forward.10} parent=0 // pred_check
    _
  $region27: #{tfno_forward.10} parent=0 // pred_check_branch
    %414 = sbr.rel (0) target = $region29
  $region28: #{tfno_forward.10} parent=0 // pred_region
    _
  $region29: #{tfno_forward.10} parent=0 // pred_fallthru
    _
  // Predicated region
  $region30: #{tfno_forward.10} parent=0 // pred_check
    _
  $region31: #{tfno_forward.10} parent=0 // pred_check_branch
    %416 = sbr.rel (0) target = $region33
  $region32: #{tfno_forward.10} parent=0 // pred_region
    _
  $region33: #{tfno_forward.10} parent=0 // pred_fallthru
    _
  // Predicated region
  $region34: #{tfno_forward.10} parent=0 // pred_check
    _
  $region35: #{tfno_forward.10} parent=0 // pred_check_branch
    %418 = sbr.rel (0) target = $region37
  $region36: #{tfno_forward.10} parent=0 // pred_region
    _
  $region37: #{tfno_forward.10} parent=0 // pred_fallthru
    _

// kernel: tile.38
$region0: #{tile.38}
  #allocation0 [shape = 's32[1]{0}', space=sflag, size = 0x4, scoped, tag = 'scoped memory for tile.38']
  %s0 = inlined_call_operand.vmem [shape: f32[8], index: 0, kind: input, shape index: {}]
  %s1 = inlined_call_operand.vmem [shape: f32[16,8], index: 1, kind: output, shape index: {}]
  // Predicated region
  $region2: #{tile.38} parent=0 // pred_check
    _
  $region3: #{tile.38} parent=0 // pred_check_branch
    %3 = sbr.rel (0) target = $region5
  $region4: #{tile.38} parent=0 // pred_region
    _
  $region5: #{tile.38} parent=0 // pred_fallthru
    _
  %v4 = vld [vmem:[%s0] ss:$0 sm:$0xff]
  %5 = vst [vmem:[%s1] sm:$0xff] %v4
  %s6 = scalar_lea.vmem %s1, 8
  %7 = vst [vmem:[%s6] sm:$0xff] %v4

// kernel: tfno_forward.11
$region0: #{tfno_forward.11}
  #allocation0 [shape = 'u32[]', space=smem, size = 0x4, offset = 0x4, fixed_abs, tag = 'smem constant byte address 0x4 - core index']
  #allocation1 [shape = 'u32[144,128]{1,0:T(1,128)}', space=vmem, size = 0x12000, scoped, tag = 'internal scratch']
  %s0 = inlined_call_operand.vmem [shape: f32[216,128], index: 0, kind: input, shape index: {}, may-alias: {0,3}]
  %s1 = inlined_call_operand.vmem [shape: f32[1,128], index: 1, kind: input, shape index: {}]
  %s2 = inlined_call_operand.vmem [shape: f32[1,128], index: 2, kind: input, shape index: {}]
  %s3 = inlined_call_operand.vmem [shape: f32[216,128], index: 3, kind: output, shape index: {}, may-alias: {0,3}]
  %s4 = sld [smem:[#allocation0]]
  $region22: #{tfno_forward.11} parent=0
    _
  %s6 = ssub.s32 1, %s4
  %s7 = scalar_select 0, %s6, %s4
  // Predicated region
  $region2: #{tfno_forward.11} parent=0 // pred_check
    _
  $region3: #{tfno_forward.11} parent=0 // pred_check_branch
    %9 = sbr.rel (0) target = $region5
  $region4: #{tfno_forward.11} parent=0 // pred_region
    _
  $region5: #{tfno_forward.11} parent=0 // pred_fallthru
    _
  // Predicated region
  $region6: #{tfno_forward.11} parent=0 // pred_check
    _
  $region7: #{tfno_forward.11} parent=0 // pred_check_branch
    %11 = sbr.rel (0) target = $region9
  $region8: #{tfno_forward.11} parent=0 // pred_region
    _
  $region9: #{tfno_forward.11} parent=0 // pred_fallthru
    _
  // Predicated region
  $region10: #{tfno_forward.11} parent=0 // pred_check
    _
  $region11: #{tfno_forward.11} parent=0 // pred_check_branch
    %13 = sbr.rel (0) target = $region13
  $region12: #{tfno_forward.11} parent=0 // pred_region
    _
  $region13: #{tfno_forward.11} parent=0 // pred_fallthru
    _
  %v14 = vld [vmem:[%s0] sm:$0xff]
  %v15 = vld [vmem:[%s0 + $0x8] sm:$0xff]
  %v16 = vld [vmem:[%s0 + $0x10] sm:$0xff]
  %v17 = vld [vmem:[%s0 + $0x18] sm:$0xff]
  %v18 = vld [vmem:[%s0 + $0x20] sm:$0xff]
  %v19 = vld [vmem:[%s0 + $0x28] sm:$0xff]
  %v20 = vld [vmem:[%s0 + $0x30] sm:$0xff]
  %v21 = vld [vmem:[%s0 + $0x38] sm:$0xff]
  %v22 = vld [vmem:[%s0 + $0x40] sm:$0xff]
  %v23 = vld [vmem:[%s0 + $0x48] sm:$0xff]
  %v24 = vld [vmem:[%s0 + $0x50] sm:$0xff]
  %v25 = vld [vmem:[%s0 + $0x58] sm:$0xff]
  %v26 = vld [vmem:[%s0 + $0x60] sm:$0xff]
  %v27 = vld [vmem:[%s0 + $0x68] sm:$0xff]
  %v28 = vld [vmem:[%s0 + $0x70] sm:$0xff]
  %v29 = vld [vmem:[%s0 + $0x78] sm:$0xff]
  %v30 = vld [vmem:[%s0 + $0x80] sm:$0xff]
  %v31 = vld [vmem:[%s0 + $0x88] sm:$0xff]
  %v32 = vld [vmem:[%s0 + $0x90] sm:$0xff]
  %v33 = vld [vmem:[%s0 + $0x98] sm:$0xff]
  %v34 = vld [vmem:[%s0 + $0xa0] sm:$0xff]
  %v35 = vld [vmem:[%s0 + $0xa8] sm:$0xff]
  %v36 = vld [vmem:[%s0 + $0xb0] sm:$0xff]
  %v37 = vld [vmem:[%s0 + $0xb8] sm:$0xff]
  %v38 = vld [vmem:[%s0 + $0xc0] sm:$0xff]
  %v39 = vld [vmem:[%s0 + $0xc8] sm:$0xff]
  %v40 = vld [vmem:[%s0 + $0xd0] sm:$0xff]
  %v41 = vld [vmem:[%s1] sm:$0x1]
  %v43 = vlaneseq
  %v44 = vshrl.u32 %v43, 7
  %v45 = vsub.s32 0, %v44
  %v46 = vrot.slane %v41, %v45
  %v48 = vmul.f32 %v14, %v46
  %v49 = vmul.f32 %v15, %v46
  %v50 = vmul.f32 %v16, %v46
  %v51 = vmul.f32 %v17, %v46
  %v52 = vmul.f32 %v18, %v46
  %v53 = vmul.f32 %v19, %v46
  %v54 = vmul.f32 %v20, %v46
  %v55 = vmul.f32 %v21, %v46
  %v56 = vmul.f32 %v22, %v46
  %v57 = vmul.f32 %v23, %v46
  %v58 = vmul.f32 %v24, %v46
  %v59 = vmul.f32 %v25, %v46
  %v60 = vmul.f32 %v26, %v46
  %v61 = vmul.f32 %v27, %v46
  %v62 = vmul.f32 %v28, %v46
  %v63 = vmul.f32 %v29, %v46
  %v64 = vmul.f32 %v30, %v46
  %v65 = vmul.f32 %v31, %v46
  %v66 = vmul.f32 %v32, %v46
  %v67 = vmul.f32 %v33, %v46
  %v68 = vmul.f32 %v34, %v46
  %v69 = vmul.f32 %v35, %v46
  %v70 = vmul.f32 %v36, %v46
  %v71 = vmul.f32 %v37, %v46
  %v72 = vmul.f32 %v38, %v46
  %v73 = vmul.f32 %v39, %v46
  %v74 = vmul.f32 %v40, %v46
  %v75 = vld [vmem:[%s2] sm:$0x1]
  %v77 = vlaneseq
  %v78 = vshrl.u32 %v77, 7
  %v79 = vsub.s32 0, %v78
  %v80 = vrot.slane %v75, %v79
  %v82 = vadd.f32 %v48, %v80
  %v83 = vadd.f32 %v49, %v80
  %v84 = vadd.f32 %v50, %v80
  %v85 = vadd.f32 %v51, %v80
  %v86 = vadd.f32 %v52, %v80
  %v87 = vadd.f32 %v53, %v80
  %v88 = vadd.f32 %v54, %v80
  %v89 = vadd.f32 %v55, %v80
  %v90 = vadd.f32 %v56, %v80
  %v91 = vadd.f32 %v57, %v80
  %v92 = vadd.f32 %v58, %v80
  %v93 = vadd.f32 %v59, %v80
  %v94 = vadd.f32 %v60, %v80
  %v95 = vadd.f32 %v61, %v80
  %v96 = vadd.f32 %v62, %v80
  %v97 = vadd.f32 %v63, %v80
  %v98 = vadd.f32 %v64, %v80
  %v99 = vadd.f32 %v65, %v80
  %v100 = vadd.f32 %v66, %v80
  %v101 = vadd.f32 %v67, %v80
  %v102 = vadd.f32 %v68, %v80
  %v103 = vadd.f32 %v69, %v80
  %v104 = vadd.f32 %v70, %v80
  %v105 = vadd.f32 %v71, %v80
  %v106 = vadd.f32 %v72, %v80
  %v107 = vadd.f32 %v73, %v80
  %v108 = vadd.f32 %v74, %v80
  %v109 = vmul.f32 %v82, 0.5
  %v110 = vmul.f32 %v83, 0.5
  %v111 = vmul.f32 %v84, 0.5
  %v112 = vmul.f32 %v85, 0.5
  %v113 = vmul.f32 %v86, 0.5
  %v114 = vmul.f32 %v87, 0.5
  %v115 = vmul.f32 %v88, 0.5
  %v116 = vmul.f32 %v89, 0.5
  %v117 = vmul.f32 %v90, 0.5
  %v118 = vmul.f32 %v91, 0.5
  %v119 = vmul.f32 %v92, 0.5
  %v120 = vmul.f32 %v93, 0.5
  %v121 = vmul.f32 %v94, 0.5
  %v122 = vmul.f32 %v95, 0.5
  %v123 = vmul.f32 %v96, 0.5
  %v124 = vmul.f32 %v97, 0.5
  %v125 = vmul.f32 %v98, 0.5
  %v126 = vmul.f32 %v99, 0.5
  %v127 = vmul.f32 %v100, 0.5
  %v128 = vmul.f32 %v101, 0.5
  %v129 = vmul.f32 %v102, 0.5
  %v130 = vmul.f32 %v103, 0.5
  %v131 = vmul.f32 %v104, 0.5
  %v132 = vmul.f32 %v105, 0.5
  %v133 = vmul.f32 %v106, 0.5
  %v134 = vmul.f32 %v107, 0.5
  %v135 = vmul.f32 %v108, 0.5
  %v136 = vmul.f32 %v82, 0.70710677
  %v137 = vmul.f32 %v83, 0.70710677
  %v138 = vmul.f32 %v84, 0.70710677
  %v139 = vmul.f32 %v85, 0.70710677
  %v140 = vmul.f32 %v86, 0.70710677
  %v141 = vmul.f32 %v87, 0.70710677
  %v142 = vmul.f32 %v88, 0.70710677
  %v143 = vmul.f32 %v89, 0.70710677
  %v144 = vmul.f32 %v90, 0.70710677
  %v145 = vmul.f32 %v91, 0.70710677
  %v146 = vmul.f32 %v92, 0.70710677
  %v147 = vmul.f32 %v93, 0.70710677
  %v148 = vmul.f32 %v94, 0.70710677
  %v149 = vmul.f32 %v95, 0.70710677
  %v150 = vmul.f32 %v96, 0.70710677
  %v151 = vmul.f32 %v97, 0.70710677
  %v152 = vmul.f32 %v98, 0.70710677
  %v153 = vmul.f32 %v99, 0.70710677
  %v154 = vmul.f32 %v100, 0.70710677
  %v155 = vmul.f32 %v101, 0.70710677
  %v156 = vmul.f32 %v102, 0.70710677
  %v157 = vmul.f32 %v103, 0.70710677
  %v158 = vmul.f32 %v104, 0.70710677
  %v159 = vmul.f32 %v105, 0.70710677
  %v160 = vmul.f32 %v106, 0.70710677
  %v161 = vmul.f32 %v107, 0.70710677
  %v162 = vmul.f32 %v108, 0.70710677
  %vm163 = vcmp.ge.f32.partialorder %v136, 0.0
  %vm164 = vcmp.ge.f32.partialorder %v137, 0.0
  %vm165 = vcmp.ge.f32.partialorder %v138, 0.0
  %vm166 = vcmp.ge.f32.partialorder %v139, 0.0
  %vm167 = vcmp.ge.f32.partialorder %v140, 0.0
  %vm168 = vcmp.ge.f32.partialorder %v141, 0.0
  %vm169 = vcmp.ge.f32.partialorder %v142, 0.0
  %vm170 = vcmp.ge.f32.partialorder %v143, 0.0
  %vm171 = vcmp.ge.f32.partialorder %v144, 0.0
  %vm172 = vcmp.ge.f32.partialorder %v145, 0.0
  %vm173 = vcmp.ge.f32.partialorder %v146, 0.0
  %vm174 = vcmp.ge.f32.partialorder %v147, 0.0
  %vm175 = vcmp.ge.f32.partialorder %v148, 0.0
  %vm176 = vcmp.ge.f32.partialorder %v149, 0.0
  %vm177 = vcmp.ge.f32.partialorder %v150, 0.0
  %vm178 = vcmp.ge.f32.partialorder %v151, 0.0
  %vm179 = vcmp.ge.f32.partialorder %v152, 0.0
  %vm180 = vcmp.ge.f32.partialorder %v153, 0.0
  %vm181 = vcmp.ge.f32.partialorder %v154, 0.0
  %vm182 = vcmp.ge.f32.partialorder %v155, 0.0
  %vm183 = vcmp.ge.f32.partialorder %v156, 0.0
  %vm184 = vcmp.ge.f32.partialorder %v157, 0.0
  %vm185 = vcmp.ge.f32.partialorder %v158, 0.0
  %vm186 = vcmp.ge.f32.partialorder %v159, 0.0
  %vm187 = vcmp.ge.f32.partialorder %v160, 0.0
  %vm188 = vcmp.ge.f32.partialorder %v161, 0.0
  %vm189 = vcmp.ge.f32.partialorder %v162, 0.0
  %v190 = vsel %vm163, 1.0, -1.0
  %v191 = vsel %vm164, 1.0, -1.0
  %v192 = vsel %vm165, 1.0, -1.0
  %v193 = vsel %vm166, 1.0, -1.0
  %v194 = vsel %vm167, 1.0, -1.0
  %v195 = vsel %vm168, 1.0, -1.0
  %v196 = vsel %vm169, 1.0, -1.0
  %v197 = vsel %vm170, 1.0, -1.0
  %v198 = vsel %vm171, 1.0, -1.0
  %v199 = vsel %vm172, 1.0, -1.0
  %v200 = vsel %vm173, 1.0, -1.0
  %v201 = vsel %vm174, 1.0, -1.0
  %v202 = vsel %vm175, 1.0, -1.0
  %v203 = vsel %vm176, 1.0, -1.0
  %v204 = vsel %vm177, 1.0, -1.0
  %v205 = vsel %vm178, 1.0, -1.0
  %v206 = vsel %vm179, 1.0, -1.0
  %v207 = vsel %vm180, 1.0, -1.0
  %v208 = vsel %vm181, 1.0, -1.0
  %v209 = vsel %vm182, 1.0, -1.0
  %v210 = vsel %vm183, 1.0, -1.0
  %v211 = vsel %vm184, 1.0, -1.0
  %v212 = vsel %vm185, 1.0, -1.0
  %v213 = vsel %vm186, 1.0, -1.0
  %v214 = vsel %vm187, 1.0, -1.0
  %v215 = vsel %vm188, 1.0, -1.0
  %v216 = vsel %vm189, 1.0, -1.0
  %v217 = vand.u32 2147483647, %v136
  %v218 = vand.u32 2147483647, %v137
  %v219 = vand.u32 2147483647, %v138
  %v220 = vand.u32 2147483647, %v139
  %v221 = vand.u32 2147483647, %v140
  %v222 = vand.u32 2147483647, %v141
  %v223 = vand.u32 2147483647, %v142
  %v224 = vand.u32 2147483647, %v143
  %v225 = vand.u32 2147483647, %v144
  %v226 = vand.u32 2147483647, %v145
  %v227 = vand.u32 2147483647, %v146
  %v228 = vand.u32 2147483647, %v147
  %v229 = vand.u32 2147483647, %v148
  %v230 = vand.u32 2147483647, %v149
  %v231 = vand.u32 2147483647, %v150
  %v232 = vand.u32 2147483647, %v151
  %v233 = vand.u32 2147483647, %v152
  %v234 = vand.u32 2147483647, %v153
  %v235 = vand.u32 2147483647, %v154
  %v236 = vand.u32 2147483647, %v155
  %v237 = vand.u32 2147483647, %v156
  %v238 = vand.u32 2147483647, %v157
  %v239 = vand.u32 2147483647, %v158
  %v240 = vand.u32 2147483647, %v159
  %v241 = vand.u32 2147483647, %v160
  %v242 = vand.u32 2147483647, %v161
  %v243 = vand.u32 2147483647, %v162
  %v244 = vmul.f32 %v217, 0.3275911
  %v245 = vmul.f32 %v218, 0.3275911
  %v246 = vmul.f32 %v219, 0.3275911
  %v247 = vmul.f32 %v220, 0.3275911
  %v248 = vmul.f32 %v221, 0.3275911
  %v249 = vmul.f32 %v222, 0.3275911
  %v250 = vmul.f32 %v223, 0.3275911
  %v251 = vmul.f32 %v224, 0.3275911
  %v252 = vmul.f32 %v225, 0.3275911
  %v253 = vmul.f32 %v226, 0.3275911
  %v254 = vmul.f32 %v227, 0.3275911
  %v255 = vmul.f32 %v228, 0.3275911
  %v256 = vmul.f32 %v229, 0.3275911
  %v257 = vmul.f32 %v230, 0.3275911
  %v258 = vmul.f32 %v231, 0.3275911
  %v259 = vmul.f32 %v232, 0.3275911
  %v260 = vmul.f32 %v233, 0.3275911
  %v261 = vmul.f32 %v234, 0.3275911
  %v262 = vmul.f32 %v235, 0.3275911
  %v263 = vmul.f32 %v236, 0.3275911
  %v264 = vmul.f32 %v237, 0.3275911
  %v265 = vmul.f32 %v238, 0.3275911
  %v266 = vmul.f32 %v239, 0.3275911
  %v267 = vmul.f32 %v240, 0.3275911
  %v268 = vmul.f32 %v241, 0.3275911
  %v269 = vmul.f32 %v242, 0.3275911
  %v270 = vmul.f32 %v243, 0.3275911
  %v271 = vadd.f32 %v244, 1.0
  %v272 = vadd.f32 %v245, 1.0
  %v273 = vadd.f32 %v246, 1.0
  %v274 = vadd.f32 %v247, 1.0
  %v275 = vadd.f32 %v248, 1.0
  %v276 = vadd.f32 %v249, 1.0
  %v277 = vadd.f32 %v250, 1.0
  %v278 = vadd.f32 %v251, 1.0
  %v279 = vadd.f32 %v252, 1.0
  %v280 = vadd.f32 %v253, 1.0
  %v281 = vadd.f32 %v254, 1.0
  %v282 = vadd.f32 %v255, 1.0
  %v283 = vadd.f32 %v256, 1.0
  %v284 = vadd.f32 %v257, 1.0
  %v285 = vadd.f32 %v258, 1.0
  %v286 = vadd.f32 %v259, 1.0
  %v287 = vadd.f32 %v260, 1.0
  %v288 = vadd.f32 %v261, 1.0
  %v289 = vadd.f32 %v262, 1.0
  %v290 = vadd.f32 %v263, 1.0
  %v291 = vadd.f32 %v264, 1.0
  %v292 = vadd.f32 %v265, 1.0
  %v293 = vadd.f32 %v266, 1.0
  %v294 = vadd.f32 %v267, 1.0
  %v295 = vadd.f32 %v268, 1.0
  %v296 = vadd.f32 %v269, 1.0
  %v297 = vadd.f32 %v270, 1.0
  %v298 = vrcp.pop %v271
  %v299 = vrcp.pop %v272
  %v300 = vrcp.pop %v273
  %v301 = vrcp.pop %v274
  %v302 = vrcp.pop %v275
  %v303 = vrcp.pop %v276
  %v304 = vrcp.pop %v277
  %v305 = vrcp.pop %v278
  %v306 = vrcp.pop %v279
  %v307 = vrcp.pop %v280
  %v308 = vrcp.pop %v281
  %v309 = vrcp.pop %v282
  %v310 = vrcp.pop %v283
  %v311 = vrcp.pop %v284
  %v312 = vrcp.pop %v285
  %v313 = vrcp.pop %v286
  %v314 = vrcp.pop %v287
  %v315 = vrcp.pop %v288
  %v316 = vrcp.pop %v289
  %v317 = vrcp.pop %v290
  %v318 = vrcp.pop %v291
  %v319 = vrcp.pop %v292
  %v320 = vrcp.pop %v293
  %v321 = vrcp.pop %v294
  %v322 = vrcp.pop %v295
  %v323 = vrcp.pop %v296
  %v324 = vrcp.pop %v297
  %v325 = vmul.f32 %v298, 1.0614054
  %v326 = vmul.f32 %v299, 1.0614054
  %v327 = vmul.f32 %v300, 1.0614054
  %v328 = vmul.f32 %v301, 1.0614054
  %v329 = vmul.f32 %v302, 1.0614054
  %v330 = vmul.f32 %v303, 1.0614054
  %v331 = vmul.f32 %v304, 1.0614054
  %v332 = vmul.f32 %v305, 1.0614054
  %v333 = vmul.f32 %v306, 1.0614054
  %v334 = vmul.f32 %v307, 1.0614054
  %v335 = vmul.f32 %v308, 1.0614054
  %v336 = vmul.f32 %v309, 1.0614054
  %v337 = vmul.f32 %v310, 1.0614054
  %v338 = vmul.f32 %v311, 1.0614054
  %v339 = vmul.f32 %v312, 1.0614054
  %v340 = vmul.f32 %v313, 1.0614054
  %v341 = vmul.f32 %v314, 1.0614054
  %v342 = vmul.f32 %v315, 1.0614054
  %v343 = vmul.f32 %v316, 1.0614054
  %v344 = vmul.f32 %v317, 1.0614054
  %v345 = vmul.f32 %v318, 1.0614054
  %v346 = vmul.f32 %v319, 1.0614054
  %v347 = vmul.f32 %v320, 1.0614054
  %v348 = vmul.f32 %v321, 1.0614054
  %v349 = vmul.f32 %v322, 1.0614054
  %v350 = vmul.f32 %v323, 1.0614054
  %v351 = vmul.f32 %v324, 1.0614054
  %v352 = vadd.f32 %v325, -1.4531521
  %v353 = vadd.f32 %v326, -1.4531521
  %v354 = vadd.f32 %v327, -1.4531521
  %v355 = vadd.f32 %v328, -1.4531521
  %v356 = vadd.f32 %v329, -1.4531521
  %v357 = vadd.f32 %v330, -1.4531521
  %v358 = vadd.f32 %v331, -1.4531521
  %v359 = vadd.f32 %v332, -1.4531521
  %v360 = vadd.f32 %v333, -1.4531521
  %v361 = vadd.f32 %v334, -1.4531521
  %v362 = vadd.f32 %v335, -1.4531521
  %v363 = vadd.f32 %v336, -1.4531521
  %v364 = vadd.f32 %v337, -1.4531521
  %v365 = vadd.f32 %v338, -1.4531521
  %v366 = vadd.f32 %v339, -1.4531521
  %v367 = vadd.f32 %v340, -1.4531521
  %v368 = vadd.f32 %v341, -1.4531521
  %v369 = vadd.f32 %v342, -1.4531521
  %v370 = vadd.f32 %v343, -1.4531521
  %v371 = vadd.f32 %v344, -1.4531521
  %v372 = vadd.f32 %v345, -1.4531521
  %v373 = vadd.f32 %v346, -1.4531521
  %v374 = vadd.f32 %v347, -1.4531521
  %v375 = vadd.f32 %v348, -1.4531521
  %v376 = vadd.f32 %v349, -1.4531521
  %v377 = vadd.f32 %v350, -1.4531521
  %v378 = vadd.f32 %v351, -1.4531521
  %v379 = vmul.f32 %v298, %v352
  %v380 = vmul.f32 %v299, %v353
  %v381 = vmul.f32 %v300, %v354
  %v382 = vmul.f32 %v301, %v355
  %v383 = vmul.f32 %v302, %v356
  %v384 = vmul.f32 %v303, %v357
  %v385 = vmul.f32 %v304, %v358
  %v386 = vmul.f32 %v305, %v359
  %v387 = vmul.f32 %v306, %v360
  %v388 = vmul.f32 %v307, %v361
  %v389 = vmul.f32 %v308, %v362
  %v390 = vmul.f32 %v309, %v363
  %v391 = vmul.f32 %v310, %v364
  %v392 = vmul.f32 %v311, %v365
  %v393 = vmul.f32 %v312, %v366
  %v394 = vmul.f32 %v313, %v367
  %v395 = vmul.f32 %v314, %v368
  %v396 = vmul.f32 %v315, %v369
  %v397 = vmul.f32 %v316, %v370
  %v398 = vmul.f32 %v317, %v371
  %v399 = vmul.f32 %v318, %v372
  %v400 = vmul.f32 %v319, %v373
  %v401 = vmul.f32 %v320, %v374
  %v402 = vmul.f32 %v321, %v375
  %v403 = vmul.f32 %v322, %v376
  %v404 = vmul.f32 %v323, %v377
  %v405 = vmul.f32 %v324, %v378
  %v406 = vadd.f32 %v379, 1.4214138
  %v407 = vadd.f32 %v380, 1.4214138
  %v408 = vadd.f32 %v381, 1.4214138
  %v409 = vadd.f32 %v382, 1.4214138
  %v410 = vadd.f32 %v383, 1.4214138
  %v411 = vadd.f32 %v384, 1.4214138
  %v412 = vadd.f32 %v385, 1.4214138
  %v413 = vadd.f32 %v386, 1.4214138
  %v414 = vadd.f32 %v387, 1.4214138
  %v415 = vadd.f32 %v388, 1.4214138
  %v416 = vadd.f32 %v389, 1.4214138
  %v417 = vadd.f32 %v390, 1.4214138
  %v418 = vadd.f32 %v391, 1.4214138
  %v419 = vadd.f32 %v392, 1.4214138
  %v420 = vadd.f32 %v393, 1.4214138
  %v421 = vadd.f32 %v394, 1.4214138
  %v422 = vadd.f32 %v395, 1.4214138
  %v423 = vadd.f32 %v396, 1.4214138
  %v424 = vadd.f32 %v397, 1.4214138
  %v425 = vadd.f32 %v398, 1.4214138
  %v426 = vadd.f32 %v399, 1.4214138
  %v427 = vadd.f32 %v400, 1.4214138
  %v428 = vadd.f32 %v401, 1.4214138
  %v429 = vadd.f32 %v402, 1.4214138
  %v430 = vadd.f32 %v403, 1.4214138
  %v431 = vadd.f32 %v404, 1.4214138
  %v432 = vadd.f32 %v405, 1.4214138
  %v433 = vmul.f32 %v298, %v406
  %v434 = vmul.f32 %v299, %v407
  %v435 = vmul.f32 %v300, %v408
  %v436 = vmul.f32 %v301, %v409
  %v437 = vmul.f32 %v302, %v410
  %v438 = vmul.f32 %v303, %v411
  %v439 = vmul.f32 %v304, %v412
  %v440 = vmul.f32 %v305, %v413
  %v441 = vmul.f32 %v306, %v414
  %v442 = vmul.f32 %v307, %v415
  %v443 = vmul.f32 %v308, %v416
  %v444 = vmul.f32 %v309, %v417
  %v445 = vmul.f32 %v310, %v418
  %v446 = vmul.f32 %v311, %v419
  %v447 = vmul.f32 %v312, %v420
  %v448 = vmul.f32 %v313, %v421
  %v449 = vmul.f32 %v314, %v422
  %v450 = vmul.f32 %v315, %v423
  %v451 = vmul.f32 %v316, %v424
  %v452 = vmul.f32 %v317, %v425
  %v453 = vmul.f32 %v318, %v426
  %v454 = vmul.f32 %v319, %v427
  %v455 = vmul.f32 %v320, %v428
  %v456 = vmul.f32 %v321, %v429
  %v457 = vmul.f32 %v322, %v430
  %v458 = vmul.f32 %v323, %v431
  %v459 = vmul.f32 %v324, %v432
  %v460 = vadd.f32 %v433, -0.28449672
  %v461 = vadd.f32 %v434, -0.28449672
  %v462 = vadd.f32 %v435, -0.28449672
  %v463 = vadd.f32 %v436, -0.28449672
  %v464 = vadd.f32 %v437, -0.28449672
  %v465 = vadd.f32 %v438, -0.28449672
  %v466 = vadd.f32 %v439, -0.28449672
  %v467 = vadd.f32 %v440, -0.28449672
  %v468 = vadd.f32 %v441, -0.28449672
  %v469 = vadd.f32 %v442, -0.28449672
  %v470 = vadd.f32 %v443, -0.28449672
  %v471 = vadd.f32 %v444, -0.28449672
  %v472 = vadd.f32 %v445, -0.28449672
  %v473 = vadd.f32 %v446, -0.28449672
  %v474 = vadd.f32 %v447, -0.28449672
  %v475 = vadd.f32 %v448, -0.28449672
  %v476 = vadd.f32 %v449, -0.28449672
  %v477 = vadd.f32 %v450, -0.28449672
  %v478 = vadd.f32 %v451, -0.28449672
  %v479 = vadd.f32 %v452, -0.28449672
  %v480 = vadd.f32 %v453, -0.28449672
  %v481 = vadd.f32 %v454, -0.28449672
  %v482 = vadd.f32 %v455, -0.28449672
  %v483 = vadd.f32 %v456, -0.28449672
  %v484 = vadd.f32 %v457, -0.28449672
  %v485 = vadd.f32 %v458, -0.28449672
  %v486 = vadd.f32 %v459, -0.28449672
  %v487 = vmul.f32 %v298, %v460
  %v488 = vmul.f32 %v299, %v461
  %v489 = vmul.f32 %v300, %v462
  %v490 = vmul.f32 %v301, %v463
  %v491 = vmul.f32 %v302, %v464
  %v492 = vmul.f32 %v303, %v465
  %v493 = vmul.f32 %v304, %v466
  %v494 = vmul.f32 %v305, %v467
  %v495 = vmul.f32 %v306, %v468
  %v496 = vmul.f32 %v307, %v469
  %v497 = vmul.f32 %v308, %v470
  %v498 = vmul.f32 %v309, %v471
  %v499 = vmul.f32 %v310, %v472
  %v500 = vmul.f32 %v311, %v473
  %v501 = vmul.f32 %v312, %v474
  %v502 = vmul.f32 %v313, %v475
  %v503 = vmul.f32 %v314, %v476
  %v504 = vmul.f32 %v315, %v477
  %v505 = vmul.f32 %v316, %v478
  %v506 = vmul.f32 %v317, %v479
  %v507 = vmul.f32 %v318, %v480
  %v508 = vmul.f32 %v319, %v481
  %v509 = vmul.f32 %v320, %v482
  %v510 = vmul.f32 %v321, %v483
  %v511 = vmul.f32 %v322, %v484
  %v512 = vmul.f32 %v323, %v485
  %v513 = vmul.f32 %v324, %v486
  %v514 = vadd.f32 %v487, 0.2548296
  %v515 = vadd.f32 %v488, 0.2548296
  %v516 = vadd.f32 %v489, 0.2548296
  %v517 = vadd.f32 %v490, 0.2548296
  %v518 = vadd.f32 %v491, 0.2548296
  %v519 = vadd.f32 %v492, 0.2548296
  %v520 = vadd.f32 %v493, 0.2548296
  %v521 = vadd.f32 %v494, 0.2548296
  %v522 = vadd.f32 %v495, 0.2548296
  %v523 = vadd.f32 %v496, 0.2548296
  %v524 = vadd.f32 %v497, 0.2548296
  %v525 = vadd.f32 %v498, 0.2548296
  %v526 = vadd.f32 %v499, 0.2548296
  %v527 = vadd.f32 %v500, 0.2548296
  %v528 = vadd.f32 %v501, 0.2548296
  %v529 = vadd.f32 %v502, 0.2548296
  %v530 = vadd.f32 %v503, 0.2548296
  %v531 = vadd.f32 %v504, 0.2548296
  %v532 = vadd.f32 %v505, 0.2548296
  %v533 = vadd.f32 %v506, 0.2548296
  %v534 = vadd.f32 %v507, 0.2548296
  %v535 = vadd.f32 %v508, 0.2548296
  %v536 = vadd.f32 %v509, 0.2548296
  %v537 = vadd.f32 %v510, 0.2548296
  %v538 = vadd.f32 %v511, 0.2548296
  %v539 = vadd.f32 %v512, 0.2548296
  %v540 = vadd.f32 %v513, 0.2548296
  %v541 = vmul.f32 %v298, %v514
  %v542 = vmul.f32 %v299, %v515
  %v543 = vmul.f32 %v300, %v516
  %v544 = vmul.f32 %v301, %v517
  %v545 = vmul.f32 %v302, %v518
  %v546 = vmul.f32 %v303, %v519
  %v547 = vmul.f32 %v304, %v520
  %v548 = vmul.f32 %v305, %v521
  %v549 = vmul.f32 %v306, %v522
  %v550 = vmul.f32 %v307, %v523
  %v551 = vmul.f32 %v308, %v524
  %v552 = vmul.f32 %v309, %v525
  %v553 = vmul.f32 %v310, %v526
  %v554 = vmul.f32 %v311, %v527
  %v555 = vmul.f32 %v312, %v528
  %v556 = vmul.f32 %v313, %v529
  %v557 = vmul.f32 %v314, %v530
  %v558 = vmul.f32 %v315, %v531
  %v559 = vmul.f32 %v316, %v532
  %v560 = vmul.f32 %v317, %v533
  %v561 = vmul.f32 %v318, %v534
  %v562 = vmul.f32 %v319, %v535
  %v563 = vmul.f32 %v320, %v536
  %v564 = vmul.f32 %v321, %v537
  %v565 = vmul.f32 %v322, %v538
  %v566 = vmul.f32 %v323, %v539
  %v567 = vmul.f32 %v324, %v540
  %v568 = vsub.f32 0.0, %v217
  %v569 = vsub.f32 0.0, %v218
  %v570 = vsub.f32 0.0, %v219
  %v571 = vsub.f32 0.0, %v220
  %v572 = vsub.f32 0.0, %v221
  %v573 = vsub.f32 0.0, %v222
  %v574 = vsub.f32 0.0, %v223
  %v575 = vsub.f32 0.0, %v224
  %v576 = vsub.f32 0.0, %v225
  %v577 = vsub.f32 0.0, %v226
  %v578 = vsub.f32 0.0, %v227
  %v579 = vsub.f32 0.0, %v228
  %v580 = vsub.f32 0.0, %v229
  %v581 = vsub.f32 0.0, %v230
  %v582 = vsub.f32 0.0, %v231
  %v583 = vsub.f32 0.0, %v232
  %v584 = vsub.f32 0.0, %v233
  %v585 = vsub.f32 0.0, %v234
  %v586 = vsub.f32 0.0, %v235
  %v587 = vsub.f32 0.0, %v236
  %v588 = vsub.f32 0.0, %v237
  %v589 = vsub.f32 0.0, %v238
  %v590 = vsub.f32 0.0, %v239
  %v591 = vsub.f32 0.0, %v240
  %v592 = vsub.f32 0.0, %v241
  %v593 = vsub.f32 0.0, %v242
  %v594 = vsub.f32 0.0, %v243
  %v595 = vmul.f32 %v568, %v217
  %v596 = vmul.f32 %v569, %v218
  %v597 = vmul.f32 %v570, %v219
  %v598 = vmul.f32 %v571, %v220
  %v599 = vmul.f32 %v572, %v221
  %v600 = vmul.f32 %v573, %v222
  %v601 = vmul.f32 %v574, %v223
  %v602 = vmul.f32 %v575, %v224
  %v603 = vmul.f32 %v576, %v225
  %v604 = vmul.f32 %v577, %v226
  %v605 = vmul.f32 %v578, %v227
  %v606 = vmul.f32 %v579, %v228
  %v607 = vmul.f32 %v580, %v229
  %v608 = vmul.f32 %v581, %v230
  %v609 = vmul.f32 %v582, %v231
  %v610 = vmul.f32 %v583, %v232
  %v611 = vmul.f32 %v584, %v233
  %v612 = vmul.f32 %v585, %v234
  %v613 = vmul.f32 %v586, %v235
  %v614 = vmul.f32 %v587, %v236
  %v615 = vmul.f32 %v588, %v237
  %v616 = vmul.f32 %v589, %v238
  %v617 = vmul.f32 %v590, %v239
  %v618 = vmul.f32 %v591, %v240
  %v619 = vmul.f32 %v592, %v241
  %v620 = vmul.f32 %v593, %v242
  %v621 = vmul.f32 %v594, %v243
  %v622 = vmul.f32 %v595, 1.442695
  %v623 = vpow.pop %v622
  %v624 = vmul.f32 %v596, 1.442695
  %v625 = vpow.pop %v624
  %v626 = vmul.f32 %v597, 1.442695
  %v627 = vpow.pop %v626
  %v628 = vmul.f32 %v598, 1.442695
  %v629 = vpow.pop %v628
  %v630 = vmul.f32 %v599, 1.442695
  %v631 = vpow.pop %v630
  %v632 = vmul.f32 %v600, 1.442695
  %v633 = vpow.pop %v632
  %v634 = vmul.f32 %v601, 1.442695
  %v635 = vpow.pop %v634
  %v636 = vmul.f32 %v602, 1.442695
  %v637 = vpow.pop %v636
  %v638 = vmul.f32 %v603, 1.442695
  %v639 = vpow.pop %v638
  %v640 = vmul.f32 %v604, 1.442695
  %v641 = vpow.pop %v640
  %v642 = vmul.f32 %v605, 1.442695
  %v643 = vpow.pop %v642
  %v644 = vmul.f32 %v606, 1.442695
  %v645 = vpow.pop %v644
  %v646 = vmul.f32 %v607, 1.442695
  %v647 = vpow.pop %v646
  %v648 = vmul.f32 %v608, 1.442695
  %v649 = vpow.pop %v648
  %v650 = vmul.f32 %v609, 1.442695
  %v651 = vpow.pop %v650
  %v652 = vmul.f32 %v610, 1.442695
  %v653 = vpow.pop %v652
  %v654 = vmul.f32 %v611, 1.442695
  %v655 = vpow.pop %v654
  %v656 = vmul.f32 %v612, 1.442695
  %v657 = vpow.pop %v656
  %v658 = vmul.f32 %v613, 1.442695
  %v659 = vpow.pop %v658
  %v660 = vmul.f32 %v614, 1.442695
  %v661 = vpow.pop %v660
  %v662 = vmul.f32 %v615, 1.442695
  %v663 = vpow.pop %v662
  %v664 = vmul.f32 %v616, 1.442695
  %v665 = vpow.pop %v664
  %v666 = vmul.f32 %v617, 1.442695
  %v667 = vpow.pop %v666
  %v668 = vmul.f32 %v618, 1.442695
  %v669 = vpow.pop %v668
  %v670 = vmul.f32 %v619, 1.442695
  %v671 = vpow.pop %v670
  %v672 = vmul.f32 %v620, 1.442695
  %v673 = vpow.pop %v672
  %v674 = vmul.f32 %v621, 1.442695
  %v675 = vpow.pop %v674
  %v676 = vmul.f32 %v541, %v623
  %v677 = vmul.f32 %v542, %v625
  %v678 = vmul.f32 %v543, %v627
  %v679 = vmul.f32 %v544, %v629
  %v680 = vmul.f32 %v545, %v631
  %v681 = vmul.f32 %v546, %v633
  %v682 = vmul.f32 %v547, %v635
  %v683 = vmul.f32 %v548, %v637
  %v684 = vmul.f32 %v549, %v639
  %v685 = vmul.f32 %v550, %v641
  %v686 = vmul.f32 %v551, %v643
  %v687 = vmul.f32 %v552, %v645
  %v688 = vmul.f32 %v553, %v647
  %v689 = vmul.f32 %v554, %v649
  %v690 = vmul.f32 %v555, %v651
  %v691 = vmul.f32 %v556, %v653
  %v692 = vmul.f32 %v557, %v655
  %v693 = vmul.f32 %v558, %v657
  %v694 = vmul.f32 %v559, %v659
  %v695 = vmul.f32 %v560, %v661
  %v696 = vmul.f32 %v561, %v663
  %v697 = vmul.f32 %v562, %v665
  %v698 = vmul.f32 %v563, %v667
  %v699 = vmul.f32 %v564, %v669
  %v700 = vmul.f32 %v565, %v671
  %v701 = vmul.f32 %v566, %v673
  %v702 = vmul.f32 %v567, %v675
  %v703 = vsub.f32 1.0, %v676
  %v704 = vsub.f32 1.0, %v677
  %v705 = vsub.f32 1.0, %v678
  %v706 = vsub.f32 1.0, %v679
  %v707 = vsub.f32 1.0, %v680
  %v708 = vsub.f32 1.0, %v681
  %v709 = vsub.f32 1.0, %v682
  %v710 = vsub.f32 1.0, %v683
  %v711 = vsub.f32 1.0, %v684
  %v712 = vsub.f32 1.0, %v685
  %v713 = vsub.f32 1.0, %v686
  %v714 = vsub.f32 1.0, %v687
  %v715 = vsub.f32 1.0, %v688
  %v716 = vsub.f32 1.0, %v689
  %v717 = vsub.f32 1.0, %v690
  %v718 = vsub.f32 1.0, %v691
  %v719 = vsub.f32 1.0, %v692
  %v720 = vsub.f32 1.0, %v693
  %v721 = vsub.f32 1.0, %v694
  %v722 = vsub.f32 1.0, %v695
  %v723 = vsub.f32 1.0, %v696
  %v724 = vsub.f32 1.0, %v697
  %v725 = vsub.f32 1.0, %v698
  %v726 = vsub.f32 1.0, %v699
  %v727 = vsub.f32 1.0, %v700
  %v728 = vsub.f32 1.0, %v701
  %v729 = vsub.f32 1.0, %v702
  %v730 = vmul.f32 %v190, %v703
  %v731 = vmul.f32 %v191, %v704
  %v732 = vmul.f32 %v192, %v705
  %v733 = vmul.f32 %v193, %v706
  %v734 = vmul.f32 %v194, %v707
  %v735 = vmul.f32 %v195, %v708
  %v736 = vmul.f32 %v196, %v709
  %v737 = vmul.f32 %v197, %v710
  %v738 = vmul.f32 %v198, %v711
  %v739 = vmul.f32 %v199, %v712
  %v740 = vmul.f32 %v200, %v713
  %v741 = vmul.f32 %v201, %v714
  %v742 = vmul.f32 %v202, %v715
  %v743 = vmul.f32 %v203, %v716
  %v744 = vmul.f32 %v204, %v717
  %v745 = vmul.f32 %v205, %v718
  %v746 = vmul.f32 %v206, %v719
  %v747 = vmul.f32 %v207, %v720
  %v748 = vmul.f32 %v208, %v721
  %v749 = vmul.f32 %v209, %v722
  %v750 = vmul.f32 %v210, %v723
  %v751 = vmul.f32 %v211, %v724
  %v752 = vmul.f32 %v212, %v725
  %v753 = vmul.f32 %v213, %v726
  %v754 = vmul.f32 %v214, %v727
  %v755 = vmul.f32 %v215, %v728
  %v756 = vmul.f32 %v216, %v729
  %v757 = vadd.f32 %v730, 1.0
  %v758 = vadd.f32 %v731, 1.0
  %v759 = vadd.f32 %v732, 1.0
  %v760 = vadd.f32 %v733, 1.0
  %v761 = vadd.f32 %v734, 1.0
  %v762 = vadd.f32 %v735, 1.0
  %v763 = vadd.f32 %v736, 1.0
  %v764 = vadd.f32 %v737, 1.0
  %v765 = vadd.f32 %v738, 1.0
  %v766 = vadd.f32 %v739, 1.0
  %v767 = vadd.f32 %v740, 1.0
  %v768 = vadd.f32 %v741, 1.0
  %v769 = vadd.f32 %v742, 1.0
  %v770 = vadd.f32 %v743, 1.0
  %v771 = vadd.f32 %v744, 1.0
  %v772 = vadd.f32 %v745, 1.0
  %v773 = vadd.f32 %v746, 1.0
  %v774 = vadd.f32 %v747, 1.0
  %v775 = vadd.f32 %v748, 1.0
  %v776 = vadd.f32 %v749, 1.0
  %v777 = vadd.f32 %v750, 1.0
  %v778 = vadd.f32 %v751, 1.0
  %v779 = vadd.f32 %v752, 1.0
  %v780 = vadd.f32 %v753, 1.0
  %v781 = vadd.f32 %v754, 1.0
  %v782 = vadd.f32 %v755, 1.0
  %v783 = vadd.f32 %v756, 1.0
  %v784 = vmul.f32 %v109, %v757
  %v785 = vmul.f32 %v110, %v758
  %v786 = vmul.f32 %v111, %v759
  %v787 = vmul.f32 %v112, %v760
  %v788 = vmul.f32 %v113, %v761
  %v789 = vmul.f32 %v114, %v762
  %v790 = vmul.f32 %v115, %v763
  %v791 = vmul.f32 %v116, %v764
  %v792 = vmul.f32 %v117, %v765
  %v793 = vmul.f32 %v118, %v766
  %v794 = vmul.f32 %v119, %v767
  %v795 = vmul.f32 %v120, %v768
  %v796 = vmul.f32 %v121, %v769
  %v797 = vmul.f32 %v122, %v770
  %v798 = vmul.f32 %v123, %v771
  %v799 = vmul.f32 %v124, %v772
  %v800 = vmul.f32 %v125, %v773
  %v801 = vmul.f32 %v126, %v774
  %v802 = vmul.f32 %v127, %v775
  %v803 = vmul.f32 %v128, %v776
  %v804 = vmul.f32 %v129, %v777
  %v805 = vmul.f32 %v130, %v778
  %v806 = vmul.f32 %v131, %v779
  %v807 = vmul.f32 %v132, %v780
  %v808 = vmul.f32 %v133, %v781
  %v809 = vmul.f32 %v134, %v782
  %v810 = vmul.f32 %v135, %v783
  %811 = vst [vmem:[%s3] sm:$0xff] %v784
  %812 = vst [vmem:[%s3 + $0x8] sm:$0xff] %v785
  %813 = vst [vmem:[%s3 + $0x10] sm:$0xff] %v786
  %814 = vst [vmem:[%s3 + $0x18] sm:$0xff] %v787
  %815 = vst [vmem:[%s3 + $0x20] sm:$0xff] %v788
  %816 = vst [vmem:[%s3 + $0x28] sm:$0xff] %v789
  %817 = vst [vmem:[%s3 + $0x30] sm:$0xff] %v790
  %818 = vst [vmem:[%s3 + $0x38] sm:$0xff] %v791
  %819 = vst [vmem:[%s3 + $0x40] sm:$0xff] %v792
  %820 = vst [vmem:[%s3 + $0x48] sm:$0xff] %v793
  %821 = vst [vmem:[%s3 + $0x50] sm:$0xff] %v794
  %822 = vst [vmem:[%s3 + $0x58] sm:$0xff] %v795
  %823 = vst [vmem:[%s3 + $0x60] sm:$0xff] %v796
  %824 = vst [vmem:[%s3 + $0x68] sm:$0xff] %v797
  %825 = vst [vmem:[%s3 + $0x70] sm:$0xff] %v798
  %826 = vst [vmem:[%s3 + $0x78] sm:$0xff] %v799
  %827 = vst [vmem:[%s3 + $0x80] sm:$0xff] %v800
  %828 = vst [vmem:[%s3 + $0x88] sm:$0xff] %v801
  %829 = vst [vmem:[%s3 + $0x90] sm:$0xff] %v802
  %830 = vst [vmem:[%s3 + $0x98] sm:$0xff] %v803
  %831 = vst [vmem:[%s3 + $0xa0] sm:$0xff] %v804
  %832 = vst [vmem:[%s3 + $0xa8] sm:$0xff] %v805
  %833 = vst [vmem:[%s3 + $0xb0] sm:$0xff] %v806
  %834 = vst [vmem:[%s3 + $0xb8] sm:$0xff] %v807
  %835 = vst [vmem:[%s3 + $0xc0] sm:$0xff] %v808
  %836 = vst [vmem:[%s3 + $0xc8] sm:$0xff] %v809
  %837 = vst [vmem:[%s3 + $0xd0] sm:$0xff] %v810
  // Predicated region
  $region14: #{tfno_forward.11} parent=0 // pred_check
    _
  $region15: #{tfno_forward.11} parent=0 // pred_check_branch
    %839 = sbr.rel (0) target = $region17
  $region16: #{tfno_forward.11} parent=0 // pred_region
    _
  $region17: #{tfno_forward.11} parent=0 // pred_fallthru
    _
  // Predicated region
  $region18: #{tfno_forward.11} parent=0 // pred_check
    _
  $region19: #{tfno_forward.11} parent=0 // pred_check_branch
    %841 = sbr.rel (0) target = $region21
  $region20: #{tfno_forward.11} parent=0 // pred_region
    _
  $region21: #{tfno_forward.11} parent=0 // pred_fallthru
    _

// kernel: tfno_forward.15
$region0: #{tfno_forward.15}
  #allocation0 [shape = 'u32[]', space=smem, size = 0x4, offset = 0x4, fixed_abs, tag = 'smem constant byte address 0x4 - core index']
  #allocation1 [shape = 'u32[144,128]{1,0:T(1,128)}', space=vmem, size = 0x12000, scoped, tag = 'internal scratch']
  %s0 = inlined_call_operand.vmem [shape: f32[16,512], index: 0, kind: input, shape index: {}]
  %s1 = inlined_call_operand.vmem [shape: f32[512,64], index: 1, kind: input, shape index: {}]
  %s2 = inlined_call_operand.vmem [shape: f32[1,64], index: 2, kind: input, shape index: {}]
  %s3 = inlined_call_operand.vmem [shape: f32[16,64], index: 3, kind: output, shape index: {}]
  %s4 = sld [smem:[#allocation0]]
  $region22: #{tfno_forward.15} parent=0
    _
  %s6 = ssub.s32 1, %s4
  %s7 = scalar_select 0, %s6, %s4
  // Predicated region
  $region2: #{tfno_forward.15} parent=0 // pred_check
    _
  $region3: #{tfno_forward.15} parent=0 // pred_check_branch
    %9 = sbr.rel (0) target = $region5
  $region4: #{tfno_forward.15} parent=0 // pred_region
    _
  $region5: #{tfno_forward.15} parent=0 // pred_fallthru
    _
  // Predicated region
  $region6: #{tfno_forward.15} parent=0 // pred_check
    _
  $region7: #{tfno_forward.15} parent=0 // pred_check_branch
    %11 = sbr.rel (0) target = $region9
  $region8: #{tfno_forward.15} parent=0 // pred_region
    _
  $region9: #{tfno_forward.15} parent=0 // pred_fallthru
    _
  // Predicated region
  $region10: #{tfno_forward.15} parent=0 // pred_check
    _
  $region11: #{tfno_forward.15} parent=0 // pred_check_branch
    %13 = sbr.rel (0) target = $region13
  $region12: #{tfno_forward.15} parent=0 // pred_region
    _
  $region13: #{tfno_forward.15} parent=0 // pred_fallthru
    _
  %v14 = vld [vmem:[%s0] sm:$0xff]
  %v15 = vld [vmem:[%s0 + $0x8] sm:$0xff]
  %v16 = vld [vmem:[%s0 + $0x10] sm:$0xff]
  %v17 = vld [vmem:[%s0 + $0x18] sm:$0xff]
  %v18 = vld [vmem:[%s0 + $0x20] sm:$0xff]
  %v19 = vld [vmem:[%s0 + $0x28] sm:$0xff]
  %v20 = vld [vmem:[%s0 + $0x30] sm:$0xff]
  %v21 = vld [vmem:[%s0 + $0x38] sm:$0xff]
  %v22 = vld [vmem:[%s1] sm:$0xff]
  %v23 = vld [vmem:[%s1 + $0x8] sm:$0xff]
  %v24 = vld [vmem:[%s1 + $0x10] sm:$0xff]
  %v25 = vld [vmem:[%s1 + $0x18] sm:$0xff]
  %v26 = vld [vmem:[%s1 + $0x20] sm:$0xff]
  %v27 = vld [vmem:[%s1 + $0x28] sm:$0xff]
  %v28 = vld [vmem:[%s1 + $0x30] sm:$0xff]
  %v29 = vld [vmem:[%s1 + $0x38] sm:$0xff]
  %v30 = vld [vmem:[%s1 + $0x40] sm:$0xff]
  %v31 = vld [vmem:[%s1 + $0x48] sm:$0xff]
  %v32 = vld [vmem:[%s1 + $0x50] sm:$0xff]
  %v33 = vld [vmem:[%s1 + $0x58] sm:$0xff]
  %v34 = vld [vmem:[%s1 + $0x60] sm:$0xff]
  %v35 = vld [vmem:[%s1 + $0x68] sm:$0xff]
  %v36 = vld [vmem:[%s1 + $0x70] sm:$0xff]
  %v37 = vld [vmem:[%s1 + $0x78] sm:$0xff]
  %v38 = vld [vmem:[%s1 + $0x80] sm:$0xff]
  %v39 = vld [vmem:[%s1 + $0x88] sm:$0xff]
  %v40 = vld [vmem:[%s1 + $0x90] sm:$0xff]
  %v41 = vld [vmem:[%s1 + $0x98] sm:$0xff]
  %v42 = vld [vmem:[%s1 + $0xa0] sm:$0xff]
  %v43 = vld [vmem:[%s1 + $0xa8] sm:$0xff]
  %v44 = vld [vmem:[%s1 + $0xb0] sm:$0xff]
  %v45 = vld [vmem:[%s1 + $0xb8] sm:$0xff]
  %v46 = vld [vmem:[%s1 + $0xc0] sm:$0xff]
  %v47 = vld [vmem:[%s1 + $0xc8] sm:$0xff]
  %v48 = vld [vmem:[%s1 + $0xd0] sm:$0xff]
  %v49 = vld [vmem:[%s1 + $0xd8] sm:$0xff]
  %v50 = vld [vmem:[%s1 + $0xe0] sm:$0xff]
  %v51 = vld [vmem:[%s1 + $0xe8] sm:$0xff]
  %v52 = vld [vmem:[%s1 + $0xf0] sm:$0xff]
  %v53 = vld [vmem:[%s1 + $0xf8] sm:$0xff]
  %v54 = vld [vmem:[%s1 + $0x100] sm:$0xff]
  %v55 = vld [vmem:[%s1 + $0x108] sm:$0xff]
  %v56 = vld [vmem:[%s1 + $0x110] sm:$0xff]
  %v57 = vld [vmem:[%s1 + $0x118] sm:$0xff]
  %v58 = vld [vmem:[%s1 + $0x120] sm:$0xff]
  %v59 = vld [vmem:[%s1 + $0x128] sm:$0xff]
  %v60 = vld [vmem:[%s1 + $0x130] sm:$0xff]
  %v61 = vld [vmem:[%s1 + $0x138] sm:$0xff]
  %v62 = vld [vmem:[%s1 + $0x140] sm:$0xff]
  %v63 = vld [vmem:[%s1 + $0x148] sm:$0xff]
  %v64 = vld [vmem:[%s1 + $0x150] sm:$0xff]
  %v65 = vld [vmem:[%s1 + $0x158] sm:$0xff]
  %v66 = vld [vmem:[%s1 + $0x160] sm:$0xff]
  %v67 = vld [vmem:[%s1 + $0x168] sm:$0xff]
  %v68 = vld [vmem:[%s1 + $0x170] sm:$0xff]
  %v69 = vld [vmem:[%s1 + $0x178] sm:$0xff]
  %v70 = vld [vmem:[%s1 + $0x180] sm:$0xff]
  %v71 = vld [vmem:[%s1 + $0x188] sm:$0xff]
  %v72 = vld [vmem:[%s1 + $0x190] sm:$0xff]
  %v73 = vld [vmem:[%s1 + $0x198] sm:$0xff]
  %v74 = vld [vmem:[%s1 + $0x1a0] sm:$0xff]
  %v75 = vld [vmem:[%s1 + $0x1a8] sm:$0xff]
  %v76 = vld [vmem:[%s1 + $0x1b0] sm:$0xff]
  %v77 = vld [vmem:[%s1 + $0x1b8] sm:$0xff]
  %v78 = vld [vmem:[%s1 + $0x1c0] sm:$0xff]
  %v79 = vld [vmem:[%s1 + $0x1c8] sm:$0xff]
  %v80 = vld [vmem:[%s1 + $0x1d0] sm:$0xff]
  %v81 = vld [vmem:[%s1 + $0x1d8] sm:$0xff]
  %v82 = vld [vmem:[%s1 + $0x1e0] sm:$0xff]
  %v83 = vld [vmem:[%s1 + $0x1e8] sm:$0xff]
  %v84 = vld [vmem:[%s1 + $0x1f0] sm:$0xff]
  %v85 = vld [vmem:[%s1 + $0x1f8] sm:$0xff]
  %v86 = vld [vmem:[%s2] sm:$0x1]
  %v88 = vlaneseq
  %v89 = vshrl.u32 %v88, 7
  %v90 = vsub.s32 0, %v89
  %v91 = vrot.slane %v86, %v90
  %93 = vmatprep.subr.mxu0 0.0
  %94 = vmatpush1.msra.mxu0 %v37
  %95 = vmatprep.subr.mxu0 0.0
  %96 = vmatpush1.msra.mxu0 %v36
  %97 = vmatprep.subr.mxu0 0.0
  %98 = vmatpush1.msra.mxu0 %v35
  %99 = vmatprep.subr.mxu0 0.0
  %100 = vmatpush1.msra.mxu0 %v34
  %101 = vmatprep.subr.mxu0 0.0
  %102 = vmatpush1.msra.mxu0 %v33
  %103 = vmatprep.subr.mxu0 0.0
  %104 = vmatpush1.msra.mxu0 %v32
  %105 = vmatprep.subr.mxu0 0.0
  %106 = vmatpush1.msra.mxu0 %v31
  %107 = vmatprep.subr.mxu0 0.0
  %108 = vmatpush1.msra.mxu0 %v30
  %109 = vmatprep.subr.mxu0 0.0
  %110 = vmatpush1.msra.mxu0 %v29
  %111 = vmatprep.subr.mxu0 0.0
  %112 = vmatpush1.msra.mxu0 %v28
  %113 = vmatprep.subr.mxu0 0.0
  %114 = vmatpush1.msra.mxu0 %v27
  %115 = vmatprep.subr.mxu0 0.0
  %116 = vmatpush1.msra.mxu0 %v26
  %117 = vmatprep.subr.mxu0 0.0
  %118 = vmatpush1.msra.mxu0 %v25
  %119 = vmatprep.subr.mxu0 0.0
  %120 = vmatpush1.msra.mxu0 %v24
  %121 = vmatprep.subr.mxu0 0.0
  %122 = vmatpush1.msra.mxu0 %v23
  %123 = vmatprep.subr.mxu0 0.0
  %124 = vmatpush1.msra.mxu0 %v22
  %125 = vmatprep.subr.mxu0 0.0
  %126 = vmatpush2.msra.mxu0 %v53
  %127 = vmatprep.subr.mxu0 0.0
  %128 = vmatpush2.msra.mxu0 %v52
  %129 = vmatprep.subr.mxu0 0.0
  %130 = vmatpush2.msra.mxu0 %v51
  %131 = vmatprep.subr.mxu0 0.0
  %132 = vmatpush2.msra.mxu0 %v50
  %133 = vmatprep.subr.mxu0 0.0
  %134 = vmatpush2.msra.mxu0 %v49
  %135 = vmatprep.subr.mxu0 0.0
  %136 = vmatpush2.msra.mxu0 %v48
  %137 = vmatprep.subr.mxu0 0.0
  %138 = vmatpush2.msra.mxu0 %v47
  %139 = vmatprep.subr.mxu0 0.0
  %140 = vmatpush2.msra.mxu0 %v46
  %141 = vmatprep.subr.mxu0 0.0
  %142 = vmatpush2.msra.mxu0 %v45
  %143 = vmatprep.subr.mxu0 0.0
  %144 = vmatpush2.msra.mxu0 %v44
  %145 = vmatprep.subr.mxu0 0.0
  %146 = vmatpush2.msra.mxu0 %v43
  %147 = vmatprep.subr.mxu0 0.0
  %148 = vmatpush2.msra.mxu0 %v42
  %149 = vmatprep.subr.mxu0 0.0
  %150 = vmatpush2.msra.mxu0 %v41
  %151 = vmatprep.subr.mxu0 0.0
  %152 = vmatpush2.msra.mxu0 %v40
  %153 = vmatprep.subr.mxu0 0.0
  %154 = vmatpush2.msra.mxu0 %v39
  %155 = vmatprep.subr.mxu0 0.0
  %156 = vmatpush2.msra.mxu0 %v38
  %157 = vmatprep.mubr.f32.mxu0 %v15
  %158 = vmatmul.mubr.f32.gmra.mxu0 %v14
  %v159 = vpop.f32.mrf.mxu0
  %v160 = vadd.f32 %v91, %v159
  %v161 = vpop.f32.mrf.mxu0
  %162 = vmatprep.mubr.f32.mxu0 %v19
  %163 = vmatmul.mubr.f32.gmra.mxu0 %v18
  %v164 = vpop.f32.mrf.mxu0
  %v165 = vadd.f32 %v91, %v164
  %v166 = vpop.f32.mrf.mxu0
  %167 = vdwg.mxu0
  %168 = vmatprep.subr.mxu0 0.0
  %169 = vmatpush1.msra.mxu0 %v69
  %170 = vmatprep.subr.mxu0 0.0
  %171 = vmatpush1.msra.mxu0 %v68
  %172 = vmatprep.subr.mxu0 0.0
  %173 = vmatpush1.msra.mxu0 %v67
  %174 = vmatprep.subr.mxu0 0.0
  %175 = vmatpush1.msra.mxu0 %v66
  %176 = vmatprep.subr.mxu0 0.0
  %177 = vmatpush1.msra.mxu0 %v65
  %178 = vmatprep.subr.mxu0 0.0
  %179 = vmatpush1.msra.mxu0 %v64
  %180 = vmatprep.subr.mxu0 0.0
  %181 = vmatpush1.msra.mxu0 %v63
  %182 = vmatprep.subr.mxu0 0.0
  %183 = vmatpush1.msra.mxu0 %v62
  %184 = vmatprep.subr.mxu0 0.0
  %185 = vmatpush1.msra.mxu0 %v61
  %186 = vmatprep.subr.mxu0 0.0
  %187 = vmatpush1.msra.mxu0 %v60
  %188 = vmatprep.subr.mxu0 0.0
  %189 = vmatpush1.msra.mxu0 %v59
  %190 = vmatprep.subr.mxu0 0.0
  %191 = vmatpush1.msra.mxu0 %v58
  %192 = vmatprep.subr.mxu0 0.0
  %193 = vmatpush1.msra.mxu0 %v57
  %194 = vmatprep.subr.mxu0 0.0
  %195 = vmatpush1.msra.mxu0 %v56
  %196 = vmatprep.subr.mxu0 0.0
  %197 = vmatpush1.msra.mxu0 %v55
  %198 = vmatprep.subr.mxu0 0.0
  %199 = vmatpush1.msra.mxu0 %v54
  %200 = vmatprep.subr.mxu0 0.0
  %201 = vmatpush2.msra.mxu0 %v85
  %202 = vmatprep.subr.mxu0 0.0
  %203 = vmatpush2.msra.mxu0 %v84
  %204 = vmatprep.subr.mxu0 0.0
  %205 = vmatpush2.msra.mxu0 %v83
  %206 = vmatprep.subr.mxu0 0.0
  %207 = vmatpush2.msra.mxu0 %v82
  %208 = vmatprep.subr.mxu0 0.0
  %209 = vmatpush2.msra.mxu0 %v81
  %210 = vmatprep.subr.mxu0 0.0
  %211 = vmatpush2.msra.mxu0 %v80
  %212 = vmatprep.subr.mxu0 0.0
  %213 = vmatpush2.msra.mxu0 %v79
  %214 = vmatprep.subr.mxu0 0.0
  %215 = vmatpush2.msra.mxu0 %v78
  %216 = vmatprep.subr.mxu0 0.0
  %217 = vmatpush2.msra.mxu0 %v77
  %218 = vmatprep.subr.mxu0 0.0
  %219 = vmatpush2.msra.mxu0 %v76
  %220 = vmatprep.subr.mxu0 0.0
  %221 = vmatpush2.msra.mxu0 %v75
  %222 = vmatprep.subr.mxu0 0.0
  %223 = vmatpush2.msra.mxu0 %v74
  %224 = vmatprep.subr.mxu0 0.0
  %225 = vmatpush2.msra.mxu0 %v73
  %226 = vmatprep.subr.mxu0 0.0
  %227 = vmatpush2.msra.mxu0 %v72
  %228 = vmatprep.subr.mxu0 0.0
  %229 = vmatpush2.msra.mxu0 %v71
  %230 = vmatprep.subr.mxu0 0.0
  %231 = vmatpush2.msra.mxu0 %v70
  %232 = vmatprep.mubr.f32.mxu0 %v17
  %233 = vmatmul.mubr.f32.gmra.mxu0 %v16
  %v234 = vpop.f32.mrf.mxu0
  %v235 = vadd.f32 %v160, %v234
  %v236 = vpop.f32.mrf.mxu0
  %237 = vmatprep.mubr.f32.mxu0 %v21
  %238 = vmatmul.mubr.f32.gmra.mxu0 %v20
  %v239 = vpop.f32.mrf.mxu0
  %v240 = vadd.f32 %v165, %v239
  %v241 = vpop.f32.mrf.mxu0
  %242 = vdwg.mxu0
  %vm243 = vcmask 523264
  %244 = vst.msk [vmem:[%s3] sm:$0xff] %vm243, %v235
  %245 = vst.msk [vmem:[%s3 + $0x8] sm:$0xff] %vm243, %v240
  // Predicated region
  $region14: #{tfno_forward.15} parent=0 // pred_check
    _
  $region15: #{tfno_forward.15} parent=0 // pred_check_branch
    %247 = sbr.rel (0) target = $region17
  $region16: #{tfno_forward.15} parent=0 // pred_region
    _
  $region17: #{tfno_forward.15} parent=0 // pred_fallthru
    _
  // Predicated region
  $region18: #{tfno_forward.15} parent=0 // pred_check
    _
  $region19: #{tfno_forward.15} parent=0 // pred_check_branch
    %249 = sbr.rel (0) target = $region21
  $region20: #{tfno_forward.15} parent=0 // pred_region
    _
  $region21: #{tfno_forward.15} parent=0 // pred_fallthru
    _

</llo_original>
